<compile_context>
chip_gen: v7x
topology: tpu7x:2x2x1
jax: 0.10.0
libtpu: 0.0.40
codegen_flags: <defaults>
</compile_context>

<pallas_src>
import math

import jax
import jax.numpy as jnp
from jax.experimental import pallas as pl
from jax.experimental.pallas import tpu as pltpu


def _discriminator_kernel(x_ref, w1_ref, b1_ref, w2_ref, b2_ref,
                          w3_ref, b3_ref, o_ref):
    x = x_ref[...]                                            # (tb, D_in) bf16

    # Linear(input_size, 512) + LeakyReLU(0.2): bf16 MXU matmul, f32 accumulate.
    h1 = jnp.dot(x, w1_ref[...], preferred_element_type=jnp.float32)
    h1 = h1 + b1_ref[...]
    h1 = jnp.maximum(h1, 0.2 * h1)                            # LeakyReLU, f32 VPU

    # Linear(512, 256) + LeakyReLU(0.2)
    h2 = jnp.dot(h1.astype(jnp.bfloat16), w2_ref[...],
                 preferred_element_type=jnp.float32)
    h2 = h2 + b2_ref[...]
    h2 = jnp.maximum(h2, 0.2 * h2)

    # Linear(256, 1), computed transposed so the result is a lane-dense
    # (1, tb) row: (1, 256) @ (tb, 256)^T on the MXU, f32 accumulation.
    z = jnp.einsum("ok,nk->on", w3_ref[...], h2.astype(jnp.bfloat16),
                   preferred_element_type=jnp.float32)        # (1, tb)
    z = z + b3_ref[0, 0]                                      # SMEM scalar bias

    # Numerically stable sigmoid; exp + reciprocal land on the (idle) EUP slot.
    e = jnp.exp(-jnp.abs(z))
    s = pl.reciprocal(1.0 + e, approx=True)                   # sigmoid(|z|)
    o_ref[...] = jnp.where(z >= 0, s, 1.0 - s)


def _round_up(n, m):
    return pl.cdiv(n, m) * m


def discriminator_forward(x, params, *, batch_tile=512):
    """x: (B, input_size) float32 -> validity: (B, 1) float32."""
    w1, b1, w2, b2, w3, b3 = params
    B, d_in = x.shape
    h1d, h2d = w1.shape[1], w2.shape[1]

    # 128-aligned batch tile.  Small batches -> a single grid step (no per-step
    # overhead, full MXU M occupancy); large batches -> multiple "parallel"
    # batch_tile-row steps (shardable across v7x's two TensorCores).
    batch_tile = max(128, _round_up(batch_tile, 128))
    tb = min(batch_tile, _round_up(B, 128))
    B_pad = _round_up(B, tb)
    num_tiles = B_pad // tb

    # bf16 MXU operands (f32 accumulation inside the kernel).
    x_bf = x.astype(jnp.bfloat16)
    if B_pad != B:
        x_bf = jnp.pad(x_bf, ((0, B_pad - B), (0, 0)))
    w1_bf = w1.astype(jnp.bfloat16)
    w2_bf = w2.astype(jnp.bfloat16)
    w3_row = w3.reshape(1, h2d).astype(jnp.bfloat16)
    b1_r = b1.reshape(1, h1d).astype(jnp.float32)
    b2_r = b2.reshape(1, h2d).astype(jnp.float32)
    b3_r = b3.reshape(1, 1).astype(jnp.float32)

    const = lambda i: (0, 0)        # weights/biases: same resident block each step

    flops = 2 * B_pad * (d_in * h1d + h1d * h2d + h2d)
    bytes_accessed = (B_pad * d_in * 2              # x (bf16)
                      + d_in * h1d * 2              # W1 (bf16)
                      + h1d * h2d * 2               # W2 (bf16)
                      + h2d * 2                     # w3 (bf16)
                      + 4 * (h1d + h2d + 1)         # biases (f32)
                      + B_pad * 4)                  # output (f32)

    out = pl.pallas_call(
        _discriminator_kernel,
        out_shape=jax.ShapeDtypeStruct((1, B_pad), jnp.float32),
        grid_spec=pltpu.PrefetchScalarGridSpec(
            num_scalar_prefetch=0,
            grid=(num_tiles,),
            in_specs=[
                pl.BlockSpec((tb, d_in), lambda i: (i, 0)),            # x tile (bf16)
                pl.BlockSpec((d_in, h1d), const),                      # W1 (bf16)
                pl.BlockSpec((1, h1d), const),                         # b1 (f32)
                pl.BlockSpec((h1d, h2d), const),                       # W2 (bf16)
                pl.BlockSpec((1, h2d), const),                         # b2 (f32)
                pl.BlockSpec((1, h2d), const),                         # w3 row (bf16)
                pl.BlockSpec(memory_space=pltpu.MemorySpace.SMEM),     # b3 scalar
            ],
            out_specs=pl.BlockSpec((1, tb), lambda i: (0, i)),         # lane-dense
        ),
        compiler_params=pltpu.CompilerParams(
            dimension_semantics=("parallel",)),
        cost_estimate=pl.CostEstimate(
            flops=flops, transcendentals=B_pad, bytes_accessed=bytes_accessed),
    )(x_bf, w1_bf, b1_r, w2_bf, b2_r, w3_row, b3_r)

    return out[0, :B].reshape(B, 1)


def init_discriminator_params(key, input_size):
    """Deterministic init matching nn.Linear default (U(-1/sqrt(fan_in), ...))."""
    dims = [(input_size, 512), (512, 256), (256, 1)]
    params = []
    for (fan_in, fan_out) in dims:
        key, kw, kb = jax.random.split(key, 3)
        bound = 1.0 / math.sqrt(fan_in)
        w = jax.random.uniform(kw, (fan_in, fan_out), jnp.float32, -bound, bound)
        b = jax.random.uniform(kb, (1, fan_out), jnp.float32, -bound, bound)
        params += [w, b]
    return tuple(params)


def discriminator_reference(x, params):
    """Pure-f32 reference of the PyTorch forward pass."""
    w1, b1, w2, b2, w3, b3 = params
    h = x @ w1 + b1
    h = jnp.where(h > 0, h, 0.2 * h)
    h = h @ w2 + b2
    h = jnp.where(h > 0, h, 0.2 * h)
    h = h @ w3 + b3
    return jax.nn.sigmoid(h)


if __name__ == "__main__":
    key = jax.random.PRNGKey(0)
    # MNIST branch: input_size = 28 * 28.  Batch of 200 exercises the padding
    # path (padded to a single 256-row tile / one grid step).
    batch, input_size = 200, 784

    k_params, k_x = jax.random.split(key)
    params = init_discriminator_params(k_params, input_size)
    x = jax.random.normal(k_x, (batch, input_size), jnp.float32)

    out = jax.block_until_ready(discriminator_forward(x, params))
    ref = discriminator_reference(x, params)

    assert out.shape == (batch, 1)
    assert out.dtype == jnp.float32
    # bf16 matmul inputs (f32 accumulation) + approx reciprocal vs. pure-f32 ref.
    max_err = float(jnp.max(jnp.abs(out - ref)))
    assert jnp.allclose(out, ref, atol=3e-2, rtol=3e-2), max_err

    print("KERNEL_OK")
</pallas_src>

<mosaic_0001>
module attributes {stable_mosaic.version = 11 : i64} {
  func.func @_discriminator_kernel(%arg0: i32, %arg1: memref<256x784xbf16, #tpu.memory_space<vmem>>, %arg2: memref<784x512xbf16, #tpu.memory_space<vmem>>, %arg3: memref<1x512xf32, #tpu.memory_space<vmem>>, %arg4: memref<512x256xbf16, #tpu.memory_space<vmem>>, %arg5: memref<1x256xf32, #tpu.memory_space<vmem>>, %arg6: memref<1x256xbf16, #tpu.memory_space<vmem>>, %arg7: memref<1x1xf32, #tpu.memory_space<smem>>, %arg8: memref<1x256xf32, #tpu.memory_space<vmem>>) attributes {dimension_semantics = [#tpu.dimension_semantics<parallel>], iteration_bounds = array<i64: 1>, scalar_prefetch = 0 : i64, scratch_operands = 0 : i64, tpu.core_type = #tpu.core_type<tc>, window_params = [{transform_indices = @transform_0, window_bounds = array<i64: 256, 784>}, {pipeline_mode = #tpu.pipeline_mode<synchronous>, transform_indices = @transform_1, window_bounds = array<i64: 784, 512>}, {pipeline_mode = #tpu.pipeline_mode<synchronous>, transform_indices = @transform_2, window_bounds = array<i64: 1, 512>}, {pipeline_mode = #tpu.pipeline_mode<synchronous>, transform_indices = @transform_3, window_bounds = array<i64: 512, 256>}, {pipeline_mode = #tpu.pipeline_mode<synchronous>, transform_indices = @transform_4, window_bounds = array<i64: 1, 256>}, {pipeline_mode = #tpu.pipeline_mode<synchronous>, transform_indices = @transform_5, window_bounds = array<i64: 1, 256>}, {transform_indices = @transform_6, window_bounds = array<i64: 1, 1>}, {transform_indices = @transform_7, window_bounds = array<i64: 1, 256>}]} {
    %c0 = arith.constant 0 : index
    %c0_0 = arith.constant 0 : index
    %0 = vector.load %arg1[%c0, %c0_0] : memref<256x784xbf16, #tpu.memory_space<vmem>>, vector<256x784xbf16>
    %c0_1 = arith.constant 0 : index
    %c0_2 = arith.constant 0 : index
    %1 = vector.load %arg2[%c0_1, %c0_2] : memref<784x512xbf16, #tpu.memory_space<vmem>>, vector<784x512xbf16>
    %cst = arith.constant dense<0.000000e+00> : vector<256x512xf32>
    %2 = tpu.matmul %0, %1, %cst {dimension_numbers = #tpu.dot_dimension_numbers<[1], [0], [0], [1], [0, 0, 1, 1], [], []>} : vector<256x784xbf16>, vector<784x512xbf16>, vector<256x512xf32> -> vector<256x512xf32>
    %c0_3 = arith.constant 0 : index
    %c0_4 = arith.constant 0 : index
    %3 = vector.load %arg3[%c0_3, %c0_4] : memref<1x512xf32, #tpu.memory_space<vmem>>, vector<1x512xf32>
    %4 = vector.broadcast %3 : vector<1x512xf32> to vector<256x512xf32>
    %5 = arith.addf %2, %4 : vector<256x512xf32>
    %cst_5 = arith.constant 2.000000e-01 : f32
    %6 = vector.broadcast %cst_5 : f32 to vector<256x512xf32>
    %7 = arith.mulf %6, %5 : vector<256x512xf32>
    %8 = arith.maximumf %5, %7 : vector<256x512xf32>
    %9 = arith.truncf %8 : vector<256x512xf32> to vector<256x512xbf16>
    %c0_6 = arith.constant 0 : index
    %c0_7 = arith.constant 0 : index
    %10 = vector.load %arg4[%c0_6, %c0_7] : memref<512x256xbf16, #tpu.memory_space<vmem>>, vector<512x256xbf16>
    %cst_8 = arith.constant dense<0.000000e+00> : vector<256x256xf32>
    %11 = tpu.matmul %9, %10, %cst_8 {dimension_numbers = #tpu.dot_dimension_numbers<[1], [0], [0], [1], [0, 0, 1, 1], [], []>} : vector<256x512xbf16>, vector<512x256xbf16>, vector<256x256xf32> -> vector<256x256xf32>
    %c0_9 = arith.constant 0 : index
    %c0_10 = arith.constant 0 : index
    %12 = vector.load %arg5[%c0_9, %c0_10] : memref<1x256xf32, #tpu.memory_space<vmem>>, vector<1x256xf32>
    %13 = vector.broadcast %12 : vector<1x256xf32> to vector<256x256xf32>
    %14 = arith.addf %11, %13 : vector<256x256xf32>
    %cst_11 = arith.constant 2.000000e-01 : f32
    %15 = vector.broadcast %cst_11 : f32 to vector<256x256xf32>
    %16 = arith.mulf %15, %14 : vector<256x256xf32>
    %17 = arith.maximumf %14, %16 : vector<256x256xf32>
    %c0_12 = arith.constant 0 : index
    %c0_13 = arith.constant 0 : index
    %18 = vector.load %arg6[%c0_12, %c0_13] : memref<1x256xbf16, #tpu.memory_space<vmem>>, vector<1x256xbf16>
    %19 = arith.truncf %17 : vector<256x256xf32> to vector<256x256xbf16>
    "tpu.trace_start"() <{level = 10 : i32, message = "ok,nk->on"}> : () -> ()
    %cst_14 = arith.constant dense<0.000000e+00> : vector<1x256xf32>
    %20 = tpu.matmul %18, %19, %cst_14 {dimension_numbers = #tpu.dot_dimension_numbers<[1], [1], [0], [0], [0, 0, 1, 0], [], []>} : vector<1x256xbf16>, vector<256x256xbf16>, vector<1x256xf32> -> vector<1x256xf32>
    "tpu.trace_stop"() : () -> ()
    %c0_15 = arith.constant 0 : index
    %c0_16 = arith.constant 0 : index
    %21 = memref.load %arg7[%c0_15, %c0_16] : memref<1x1xf32, #tpu.memory_space<smem>>
    %22 = vector.broadcast %21 : f32 to vector<1x256xf32>
    %23 = arith.addf %20, %22 : vector<1x256xf32>
    %24 = math.absf %23 : vector<1x256xf32>
    %cst_17 = arith.constant 0.000000e+00 : f32
    %25 = vector.broadcast %cst_17 : f32 to vector<1x256xf32>
    %26 = arith.subf %25, %24 : vector<1x256xf32>
    %27 = math.exp %26 : vector<1x256xf32>
    %cst_18 = arith.constant 1.000000e+00 : f32
    %28 = vector.broadcast %cst_18 : f32 to vector<1x256xf32>
    %29 = arith.addf %28, %27 : vector<1x256xf32>
    %30 = tpu.reciprocal %29 {approx = true} : vector<1x256xf32> -> vector<1x256xf32>
    %cst_19 = arith.constant 0.000000e+00 : f32
    %31 = vector.broadcast %cst_19 : f32 to vector<1x256xf32>
    %32 = arith.cmpf oge, %23, %31 : vector<1x256xf32>
    %cst_20 = arith.constant 1.000000e+00 : f32
    %33 = vector.broadcast %cst_20 : f32 to vector<1x256xf32>
    %34 = arith.subf %33, %30 : vector<1x256xf32>
    %35 = arith.select %32, %30, %34 : vector<1x256xi1>, vector<1x256xf32>
    %c0_21 = arith.constant 0 : index
    %c0_22 = arith.constant 0 : index
    %36 = vector.load %arg8[%c0_21, %c0_22] : memref<1x256xf32, #tpu.memory_space<vmem>>, vector<1x256xf32>
    tpu.vector_store %arg8[%c0_21, %c0_22], %35 {strides = array<i32>} : memref<1x256xf32, #tpu.memory_space<vmem>>, vector<1x256xf32>,
    return
  }
  func.func @transform_0(%arg0: i32) -> (i32, i32) {
    %c0_i32 = arith.constant 0 : i32
    %c0_i32_0 = arith.constant 0 : i32
    return %arg0, %c0_i32 : i32, i32
  }
  func.func @transform_1(%arg0: i32) -> (i32, i32) {
    %c0_i32 = arith.constant 0 : i32
    %c0_i32_0 = arith.constant 0 : i32
    %c0_i32_1 = arith.constant 0 : i32
    return %c0_i32, %c0_i32_0 : i32, i32
  }
  func.func @transform_2(%arg0: i32) -> (i32, i32) {
    %c0_i32 = arith.constant 0 : i32
    %c0_i32_0 = arith.constant 0 : i32
    %c0_i32_1 = arith.constant 0 : i32
    return %c0_i32, %c0_i32_0 : i32, i32
  }
  func.func @transform_3(%arg0: i32) -> (i32, i32) {
    %c0_i32 = arith.constant 0 : i32
    %c0_i32_0 = arith.constant 0 : i32
    %c0_i32_1 = arith.constant 0 : i32
    return %c0_i32, %c0_i32_0 : i32, i32
  }
  func.func @transform_4(%arg0: i32) -> (i32, i32) {
    %c0_i32 = arith.constant 0 : i32
    %c0_i32_0 = arith.constant 0 : i32
    %c0_i32_1 = arith.constant 0 : i32
    return %c0_i32, %c0_i32_0 : i32, i32
  }
  func.func @transform_5(%arg0: i32) -> (i32, i32) {
    %c0_i32 = arith.constant 0 : i32
    %c0_i32_0 = arith.constant 0 : i32
    %c0_i32_1 = arith.constant 0 : i32
    return %c0_i32, %c0_i32_0 : i32, i32
  }
  func.func @transform_6(%arg0: i32) -> (i32, i32) {
    %c0_i32 = arith.constant 0 : i32
    %c0_i32_0 = arith.constant 0 : i32
    %c0_i32_1 = arith.constant 0 : i32
    return %c0_i32, %c0_i32_0 : i32, i32
  }
  func.func @transform_7(%arg0: i32) -> (i32, i32) {
    %c0_i32 = arith.constant 0 : i32
    %c0_i32_0 = arith.constant 0 : i32
    return %c0_i32, %arg0 : i32, i32
  }
}

</mosaic_0001>

<llo_original>
// kernel: tpu_custom_call.1
$region0: #{tpu_custom_call.1}
  #allocation0 [shape = 'u32[]', space=smem, size = 0x4, offset = 0x4, fixed_abs, tag = 'smem constant byte address 0x4 - core index']
  #allocation1 [shape = 'u32[144,128]{1,0:T(1,128)}', space=vmem, size = 0x12000, scoped, tag = 'internal scratch']
  #allocation2 [shape = 'f32[1,1]{1,0:T(1,128)S(6)}', space=smem, size = 0x200, scoped, tag = 'scoped memory for tpu_custom_call.1']
  %s0 = inlined_call_operand.vmem [shape: bf16[256,784], index: 0, kind: input, shape index: {}]
  %s1 = inlined_call_operand.vmem [shape: bf16[784,512], index: 1, kind: input, shape index: {}]
  %s2 = inlined_call_operand.vmem [shape: f32[1,512], index: 2, kind: input, shape index: {}]
  %s3 = inlined_call_operand.hbm [shape: bf16[512,256], index: 3, kind: input, shape index: {}]
  %s4 = inlined_call_operand.vmem [shape: f32[1,256], index: 4, kind: input, shape index: {}]
  %s5 = inlined_call_operand.vmem [shape: bf16[1,256], index: 5, kind: input, shape index: {}]
  %s6 = inlined_call_operand.<no memory space> [shape: f32[1,1], index: 6, kind: input, shape index: {}]
  %s7 = inlined_call_operand.hbm [shape: f32[1,256], index: 7, kind: output, shape index: {}]
  %s8 = sld [smem:[#allocation0]]
  $region42: #{tpu_custom_call.1} parent=0
    _
  %s10 = ssub.s32 1, %s8
  %s11 = scalar_select 0, %s10, %s8
  %12 = sst [smem:[#allocation2]] %s6
  $region1: #{tpu_custom_call.1} parent=0
    #allocation3 [shape = 'u8[262144]{0}', space=vmem, size = 0x40000, scoped, tag = 'input window, operand 3, single buffered']
    #allocation4 [shape = 's32[1]{0}', space=sflag, size = 0x4, scoped, tag = 'scoped memory for tpu_custom_call.1']
    #allocation5 [shape = 's32[1]{0}', space=sflag, size = 0x4, scoped, tag = 'scoped memory for tpu_custom_call.1']
    #allocation6 [shape = 'u8[1024]{0}', space=vmem, size = 0x400, scoped, tag = 'output window, operand 0, single buffered']
    %13 = vsyncpa [#allocation4], 0
    %14 = vsyncpa [#allocation5], 0
    // Predicated region
    $region2: #{tpu_custom_call.1} parent=1 // pred_check
      _
    $region3: #{tpu_custom_call.1} parent=1 // pred_check_branch
      %16 = sbr.rel (0) target = $region5
    $region4: #{tpu_custom_call.1} parent=1 // pred_region
      _
    $region5: #{tpu_custom_call.1} parent=1 // pred_fallthru
      _
    // Predicated region
    $region6: #{tpu_custom_call.1} parent=1 // pred_check
      _
    $region7: #{tpu_custom_call.1} parent=1 // pred_check_branch
      %18 = sbr.rel (0) target = $region9
    $region8: #{tpu_custom_call.1} parent=1 // pred_region
      _
    $region9: #{tpu_custom_call.1} parent=1 // pred_fallthru
      _
    // Predicated region
    $region10: #{tpu_custom_call.1} parent=1 // pred_check
      _
    $region11: #{tpu_custom_call.1} parent=1 // pred_check_branch
      %20 = sbr.rel (0) target = $region13
    $region12: #{tpu_custom_call.1} parent=1 // pred_region
      _
    $region13: #{tpu_custom_call.1} parent=1 // pred_fallthru
      _
    // Predicated region
    $region14: #{tpu_custom_call.1} parent=1 // pred_check
      _
    $region15: #{tpu_custom_call.1} parent=1 // pred_check_branch
      %22 = sbr.rel (0) target = $region17
    $region16: #{tpu_custom_call.1} parent=1 // pred_region
      %s24 = ssub.s32 8192, 8192
      %25 = vsyncadd [#allocation4], %s24
      %s26 = sshll.u32 [#allocation3], 4
      %s27 = int_to_ptr.vmem [resolvable:$true] %s26
      %32 = dma.hbm_to_vmem [thread:$0]  %s3, 8192, %s27, [#allocation4], 128, 128, 8
    $region17: #{tpu_custom_call.1} parent=1 // pred_fallthru
      _
    // Predicated region
    $region18: #{tpu_custom_call.1} parent=1 // pred_check
      _
    $region19: #{tpu_custom_call.1} parent=1 // pred_check_branch
      %34 = sbr.rel (0) target = $region21
    $region20: #{tpu_custom_call.1} parent=1 // pred_region
      _
    $region21: #{tpu_custom_call.1} parent=1 // pred_fallthru
      _
    // Predicated region
    $region22: #{tpu_custom_call.1} parent=1 // pred_check
      _
    $region23: #{tpu_custom_call.1} parent=1 // pred_check_branch
      %36 = sbr.rel (0) target = $region25
    $region24: #{tpu_custom_call.1} parent=1 // pred_region
      _
    $region25: #{tpu_custom_call.1} parent=1 // pred_fallthru
      _
    // Predicated region
    $region26: #{tpu_custom_call.1} parent=1 // pred_check
      _
    $region27: #{tpu_custom_call.1} parent=1 // pred_check_branch
      %38 = sbr.rel (0) target = $region29
    $region28: #{tpu_custom_call.1} parent=1 // pred_region
      _
    $region29: #{tpu_custom_call.1} parent=1 // pred_fallthru
      _
    // Predicated region
    $region30: #{tpu_custom_call.1} parent=1 // pred_check
      _
    $region31: #{tpu_custom_call.1} parent=1 // pred_check_branch
      %40 = sbr.rel (0) target = $region33
    $region32: #{tpu_custom_call.1} parent=1 // pred_region
      %41 = dma.done [#allocation4], 8192
    $region33: #{tpu_custom_call.1} parent=1 // pred_fallthru
      _
    %v43 = vld [vmem:[%s0] sm:$0xff]
    %v44 = vld [vmem:[%s0 + $0x8] sm:$0xff]
    %v45 = vld [vmem:[%s0 + $0x10] sm:$0xff]
    %v46 = vld [vmem:[%s0 + $0x18] sm:$0xf]
    %v47 = vld [vmem:[%s0 + $0x1c] sm:$0xff]
    %v48 = vld [vmem:[%s0 + $0x24] sm:$0xff]
    %v49 = vld [vmem:[%s0 + $0x2c] sm:$0xff]
    %v50 = vld [vmem:[%s0 + $0x34] sm:$0xf]
    %v51 = vld [vmem:[%s0 + $0x38] sm:$0xff]
    %v52 = vld [vmem:[%s0 + $0x40] sm:$0xff]
    %v53 = vld [vmem:[%s0 + $0x48] sm:$0xff]
    %v54 = vld [vmem:[%s0 + $0x50] sm:$0xf]
    %v55 = vld [vmem:[%s0 + $0x54] sm:$0xff]
    %v56 = vld [vmem:[%s0 + $0x5c] sm:$0xff]
    %v57 = vld [vmem:[%s0 + $0x64] sm:$0xff]
    %v58 = vld [vmem:[%s0 + $0x6c] sm:$0xf]
    %v59 = vld [vmem:[%s0 + $0x70] sm:$0xff]
    %v60 = vld [vmem:[%s0 + $0x78] sm:$0xff]
    %v61 = vld [vmem:[%s0 + $0x80] sm:$0xff]
    %v62 = vld [vmem:[%s0 + $0x88] sm:$0xf]
    %v63 = vld [vmem:[%s0 + $0x8c] sm:$0xff]
    %v64 = vld [vmem:[%s0 + $0x94] sm:$0xff]
    %v65 = vld [vmem:[%s0 + $0x9c] sm:$0xff]
    %v66 = vld [vmem:[%s0 + $0xa4] sm:$0xf]
    %v67 = vld [vmem:[%s0 + $0xa8] sm:$0xff]
    %v68 = vld [vmem:[%s0 + $0xb0] sm:$0xff]
    %v69 = vld [vmem:[%s0 + $0xb8] sm:$0xff]
    %v70 = vld [vmem:[%s0 + $0xc0] sm:$0xf]
    %v71 = vld [vmem:[%s0 + $0xc4] sm:$0xff]
    %v72 = vld [vmem:[%s0 + $0xcc] sm:$0xff]
    %v73 = vld [vmem:[%s0 + $0xd4] sm:$0xff]
    %v74 = vld [vmem:[%s0 + $0xdc] sm:$0xf]
    %v75 = vld [vmem:[%s0 + $0xe0] sm:$0xff]
    %v76 = vld [vmem:[%s0 + $0xe8] sm:$0xff]
    %v77 = vld [vmem:[%s0 + $0xf0] sm:$0xff]
    %v78 = vld [vmem:[%s0 + $0xf8] sm:$0xf]
    %v79 = vld [vmem:[%s0 + $0xfc] sm:$0xff]
    %v80 = vld [vmem:[%s0 + $0x104] sm:$0xff]
    %v81 = vld [vmem:[%s0 + $0x10c] sm:$0xff]
    %v82 = vld [vmem:[%s0 + $0x114] sm:$0xf]
    %v83 = vld [vmem:[%s0 + $0x118] sm:$0xff]
    %v84 = vld [vmem:[%s0 + $0x120] sm:$0xff]
    %v85 = vld [vmem:[%s0 + $0x128] sm:$0xff]
    %v86 = vld [vmem:[%s0 + $0x130] sm:$0xf]
    %v87 = vld [vmem:[%s0 + $0x134] sm:$0xff]
    %v88 = vld [vmem:[%s0 + $0x13c] sm:$0xff]
    %v89 = vld [vmem:[%s0 + $0x144] sm:$0xff]
    %v90 = vld [vmem:[%s0 + $0x14c] sm:$0xf]
    %v91 = vld [vmem:[%s0 + $0x150] sm:$0xff]
    %v92 = vld [vmem:[%s0 + $0x158] sm:$0xff]
    %v93 = vld [vmem:[%s0 + $0x160] sm:$0xff]
    %v94 = vld [vmem:[%s0 + $0x168] sm:$0xf]
    %v95 = vld [vmem:[%s0 + $0x16c] sm:$0xff]
    %v96 = vld [vmem:[%s0 + $0x174] sm:$0xff]
    %v97 = vld [vmem:[%s0 + $0x17c] sm:$0xff]
    %v98 = vld [vmem:[%s0 + $0x184] sm:$0xf]
    %v99 = vld [vmem:[%s0 + $0x188] sm:$0xff]
    %v100 = vld [vmem:[%s0 + $0x190] sm:$0xff]
    %v101 = vld [vmem:[%s0 + $0x198] sm:$0xff]
    %v102 = vld [vmem:[%s0 + $0x1a0] sm:$0xf]
    %v103 = vld [vmem:[%s0 + $0x1a4] sm:$0xff]
    %v104 = vld [vmem:[%s0 + $0x1ac] sm:$0xff]
    %v105 = vld [vmem:[%s0 + $0x1b4] sm:$0xff]
    %v106 = vld [vmem:[%s0 + $0x1bc] sm:$0xf]
    %v107 = vld [vmem:[%s0 + $0x1c0] sm:$0xff]
    %v108 = vld [vmem:[%s0 + $0x1c8] sm:$0xff]
    %v109 = vld [vmem:[%s0 + $0x1d0] sm:$0xff]
    %v110 = vld [vmem:[%s0 + $0x1d8] sm:$0xf]
    %v111 = vld [vmem:[%s0 + $0x1dc] sm:$0xff]
    %v112 = vld [vmem:[%s0 + $0x1e4] sm:$0xff]
    %v113 = vld [vmem:[%s0 + $0x1ec] sm:$0xff]
    %v114 = vld [vmem:[%s0 + $0x1f4] sm:$0xf]
    %v115 = vld [vmem:[%s0 + $0x1f8] sm:$0xff]
    %v116 = vld [vmem:[%s0 + $0x200] sm:$0xff]
    %v117 = vld [vmem:[%s0 + $0x208] sm:$0xff]
    %v118 = vld [vmem:[%s0 + $0x210] sm:$0xf]
    %v119 = vld [vmem:[%s0 + $0x214] sm:$0xff]
    %v120 = vld [vmem:[%s0 + $0x21c] sm:$0xff]
    %v121 = vld [vmem:[%s0 + $0x224] sm:$0xff]
    %v122 = vld [vmem:[%s0 + $0x22c] sm:$0xf]
    %v123 = vld [vmem:[%s0 + $0x230] sm:$0xff]
    %v124 = vld [vmem:[%s0 + $0x238] sm:$0xff]
    %v125 = vld [vmem:[%s0 + $0x240] sm:$0xff]
    %v126 = vld [vmem:[%s0 + $0x248] sm:$0xf]
    %v127 = vld [vmem:[%s0 + $0x24c] sm:$0xff]
    %v128 = vld [vmem:[%s0 + $0x254] sm:$0xff]
    %v129 = vld [vmem:[%s0 + $0x25c] sm:$0xff]
    %v130 = vld [vmem:[%s0 + $0x264] sm:$0xf]
    %v131 = vld [vmem:[%s0 + $0x268] sm:$0xff]
    %v132 = vld [vmem:[%s0 + $0x270] sm:$0xff]
    %v133 = vld [vmem:[%s0 + $0x278] sm:$0xff]
    %v134 = vld [vmem:[%s0 + $0x280] sm:$0xf]
    %v135 = vld [vmem:[%s0 + $0x284] sm:$0xff]
    %v136 = vld [vmem:[%s0 + $0x28c] sm:$0xff]
    %v137 = vld [vmem:[%s0 + $0x294] sm:$0xff]
    %v138 = vld [vmem:[%s0 + $0x29c] sm:$0xf]
    %v139 = vld [vmem:[%s0 + $0x2a0] sm:$0xff]
    %v140 = vld [vmem:[%s0 + $0x2a8] sm:$0xff]
    %v141 = vld [vmem:[%s0 + $0x2b0] sm:$0xff]
    %v142 = vld [vmem:[%s0 + $0x2b8] sm:$0xf]
    %v143 = vld [vmem:[%s0 + $0x2bc] sm:$0xff]
    %v144 = vld [vmem:[%s0 + $0x2c4] sm:$0xff]
    %v145 = vld [vmem:[%s0 + $0x2cc] sm:$0xff]
    %v146 = vld [vmem:[%s0 + $0x2d4] sm:$0xf]
    %v147 = vld [vmem:[%s0 + $0x2d8] sm:$0xff]
    %v148 = vld [vmem:[%s0 + $0x2e0] sm:$0xff]
    %v149 = vld [vmem:[%s0 + $0x2e8] sm:$0xff]
    %v150 = vld [vmem:[%s0 + $0x2f0] sm:$0xf]
    %v151 = vld [vmem:[%s0 + $0x2f4] sm:$0xff]
    %v152 = vld [vmem:[%s0 + $0x2fc] sm:$0xff]
    %v153 = vld [vmem:[%s0 + $0x304] sm:$0xff]
    %v154 = vld [vmem:[%s0 + $0x30c] sm:$0xf]
    %v155 = vld [vmem:[%s0 + $0x310] sm:$0xff]
    %v156 = vld [vmem:[%s0 + $0x318] sm:$0xff]
    %v157 = vld [vmem:[%s0 + $0x320] sm:$0xff]
    %v158 = vld [vmem:[%s0 + $0x328] sm:$0xf]
    %v159 = vld [vmem:[%s0 + $0x32c] sm:$0xff]
    %v160 = vld [vmem:[%s0 + $0x334] sm:$0xff]
    %v161 = vld [vmem:[%s0 + $0x33c] sm:$0xff]
    %v162 = vld [vmem:[%s0 + $0x344] sm:$0xf]
    %v163 = vld [vmem:[%s0 + $0x348] sm:$0xff]
    %v164 = vld [vmem:[%s0 + $0x350] sm:$0xff]
    %v165 = vld [vmem:[%s0 + $0x358] sm:$0xff]
    %v166 = vld [vmem:[%s0 + $0x360] sm:$0xf]
    %v167 = vld [vmem:[%s0 + $0x364] sm:$0xff]
    %v168 = vld [vmem:[%s0 + $0x36c] sm:$0xff]
    %v169 = vld [vmem:[%s0 + $0x374] sm:$0xff]
    %v170 = vld [vmem:[%s0 + $0x37c] sm:$0xf]
    %v171 = vld [vmem:[%s1] sm:$0xff]
    %v172 = vld [vmem:[%s1 + $0x8] sm:$0xff]
    %v173 = vld [vmem:[%s1 + $0x10] sm:$0xff]
    %v174 = vld [vmem:[%s1 + $0x18] sm:$0xff]
    %v175 = vld [vmem:[%s1 + $0x20] sm:$0xff]
    %v176 = vld [vmem:[%s1 + $0x28] sm:$0xff]
    %v177 = vld [vmem:[%s1 + $0x30] sm:$0xff]
    %v178 = vld [vmem:[%s1 + $0x38] sm:$0xff]
    %v179 = vld [vmem:[%s1 + $0x40] sm:$0xff]
    %v180 = vld [vmem:[%s1 + $0x48] sm:$0xff]
    %v181 = vld [vmem:[%s1 + $0x50] sm:$0xff]
    %v182 = vld [vmem:[%s1 + $0x58] sm:$0xff]
    %v183 = vld [vmem:[%s1 + $0x60] sm:$0xff]
    %v184 = vld [vmem:[%s1 + $0x68] sm:$0xff]
    %v185 = vld [vmem:[%s1 + $0x70] sm:$0xff]
    %v186 = vld [vmem:[%s1 + $0x78] sm:$0xff]
    %v187 = vld [vmem:[%s1 + $0x80] sm:$0xff]
    %v188 = vld [vmem:[%s1 + $0x88] sm:$0xff]
    %v189 = vld [vmem:[%s1 + $0x90] sm:$0xff]
    %v190 = vld [vmem:[%s1 + $0x98] sm:$0xff]
    %v191 = vld [vmem:[%s1 + $0xa0] sm:$0xff]
    %v192 = vld [vmem:[%s1 + $0xa8] sm:$0xff]
    %v193 = vld [vmem:[%s1 + $0xb0] sm:$0xff]
    %v194 = vld [vmem:[%s1 + $0xb8] sm:$0xff]
    %v195 = vld [vmem:[%s1 + $0xc0] sm:$0xff]
    %v196 = vld [vmem:[%s1 + $0xc8] sm:$0xff]
    %v197 = vld [vmem:[%s1 + $0xd0] sm:$0xff]
    %v198 = vld [vmem:[%s1 + $0xd8] sm:$0xff]
    %v199 = vld [vmem:[%s1 + $0xe0] sm:$0xff]
    %v200 = vld [vmem:[%s1 + $0xe8] sm:$0xff]
    %v201 = vld [vmem:[%s1 + $0xf0] sm:$0xff]
    %v202 = vld [vmem:[%s1 + $0xf8] sm:$0xff]
    %v203 = vld [vmem:[%s1 + $0x100] sm:$0xff]
    %v204 = vld [vmem:[%s1 + $0x108] sm:$0xff]
    %v205 = vld [vmem:[%s1 + $0x110] sm:$0xff]
    %v206 = vld [vmem:[%s1 + $0x118] sm:$0xff]
    %v207 = vld [vmem:[%s1 + $0x120] sm:$0xff]
    %v208 = vld [vmem:[%s1 + $0x128] sm:$0xff]
    %v209 = vld [vmem:[%s1 + $0x130] sm:$0xff]
    %v210 = vld [vmem:[%s1 + $0x138] sm:$0xff]
    %v211 = vld [vmem:[%s1 + $0x140] sm:$0xff]
    %v212 = vld [vmem:[%s1 + $0x148] sm:$0xff]
    %v213 = vld [vmem:[%s1 + $0x150] sm:$0xff]
    %v214 = vld [vmem:[%s1 + $0x158] sm:$0xff]
    %v215 = vld [vmem:[%s1 + $0x160] sm:$0xff]
    %v216 = vld [vmem:[%s1 + $0x168] sm:$0xff]
    %v217 = vld [vmem:[%s1 + $0x170] sm:$0xff]
    %v218 = vld [vmem:[%s1 + $0x178] sm:$0xff]
    %v219 = vld [vmem:[%s1 + $0x180] sm:$0xff]
    %v220 = vld [vmem:[%s1 + $0x188] sm:$0xff]
    %v221 = vld [vmem:[%s1 + $0x190] sm:$0xff]
    %v222 = vld [vmem:[%s1 + $0x198] sm:$0xff]
    %v223 = vld [vmem:[%s1 + $0x1a0] sm:$0xff]
    %v224 = vld [vmem:[%s1 + $0x1a8] sm:$0xff]
    %v225 = vld [vmem:[%s1 + $0x1b0] sm:$0xff]
    %v226 = vld [vmem:[%s1 + $0x1b8] sm:$0xff]
    %v227 = vld [vmem:[%s1 + $0x1c0] sm:$0xff]
    %v228 = vld [vmem:[%s1 + $0x1c8] sm:$0xff]
    %v229 = vld [vmem:[%s1 + $0x1d0] sm:$0xff]
    %v230 = vld [vmem:[%s1 + $0x1d8] sm:$0xff]
    %v231 = vld [vmem:[%s1 + $0x1e0] sm:$0xff]
    %v232 = vld [vmem:[%s1 + $0x1e8] sm:$0xff]
    %v233 = vld [vmem:[%s1 + $0x1f0] sm:$0xff]
    %v234 = vld [vmem:[%s1 + $0x1f8] sm:$0xff]
    %v235 = vld [vmem:[%s1 + $0x200] sm:$0xff]
    %v236 = vld [vmem:[%s1 + $0x208] sm:$0xff]
    %v237 = vld [vmem:[%s1 + $0x210] sm:$0xff]
    %v238 = vld [vmem:[%s1 + $0x218] sm:$0xff]
    %v239 = vld [vmem:[%s1 + $0x220] sm:$0xff]
    %v240 = vld [vmem:[%s1 + $0x228] sm:$0xff]
    %v241 = vld [vmem:[%s1 + $0x230] sm:$0xff]
    %v242 = vld [vmem:[%s1 + $0x238] sm:$0xff]
    %v243 = vld [vmem:[%s1 + $0x240] sm:$0xff]
    %v244 = vld [vmem:[%s1 + $0x248] sm:$0xff]
    %v245 = vld [vmem:[%s1 + $0x250] sm:$0xff]
    %v246 = vld [vmem:[%s1 + $0x258] sm:$0xff]
    %v247 = vld [vmem:[%s1 + $0x260] sm:$0xff]
    %v248 = vld [vmem:[%s1 + $0x268] sm:$0xff]
    %v249 = vld [vmem:[%s1 + $0x270] sm:$0xff]
    %v250 = vld [vmem:[%s1 + $0x278] sm:$0xff]
    %v251 = vld [vmem:[%s1 + $0x280] sm:$0xff]
    %v252 = vld [vmem:[%s1 + $0x288] sm:$0xff]
    %v253 = vld [vmem:[%s1 + $0x290] sm:$0xff]
    %v254 = vld [vmem:[%s1 + $0x298] sm:$0xff]
    %v255 = vld [vmem:[%s1 + $0x2a0] sm:$0xff]
    %v256 = vld [vmem:[%s1 + $0x2a8] sm:$0xff]
    %v257 = vld [vmem:[%s1 + $0x2b0] sm:$0xff]
    %v258 = vld [vmem:[%s1 + $0x2b8] sm:$0xff]
    %v259 = vld [vmem:[%s1 + $0x2c0] sm:$0xff]
    %v260 = vld [vmem:[%s1 + $0x2c8] sm:$0xff]
    %v261 = vld [vmem:[%s1 + $0x2d0] sm:$0xff]
    %v262 = vld [vmem:[%s1 + $0x2d8] sm:$0xff]
    %v263 = vld [vmem:[%s1 + $0x2e0] sm:$0xff]
    %v264 = vld [vmem:[%s1 + $0x2e8] sm:$0xff]
    %v265 = vld [vmem:[%s1 + $0x2f0] sm:$0xff]
    %v266 = vld [vmem:[%s1 + $0x2f8] sm:$0xff]
    %v267 = vld [vmem:[%s1 + $0x300] sm:$0xff]
    %v268 = vld [vmem:[%s1 + $0x308] sm:$0xff]
    %v269 = vld [vmem:[%s1 + $0x310] sm:$0xff]
    %v270 = vld [vmem:[%s1 + $0x318] sm:$0xff]
    %v271 = vld [vmem:[%s1 + $0x320] sm:$0xff]
    %v272 = vld [vmem:[%s1 + $0x328] sm:$0xff]
    %v273 = vld [vmem:[%s1 + $0x330] sm:$0xff]
    %v274 = vld [vmem:[%s1 + $0x338] sm:$0xff]
    %v275 = vld [vmem:[%s1 + $0x340] sm:$0xff]
    %v276 = vld [vmem:[%s1 + $0x348] sm:$0xff]
    %v277 = vld [vmem:[%s1 + $0x350] sm:$0xff]
    %v278 = vld [vmem:[%s1 + $0x358] sm:$0xff]
    %v279 = vld [vmem:[%s1 + $0x360] sm:$0xff]
    %v280 = vld [vmem:[%s1 + $0x368] sm:$0xff]
    %v281 = vld [vmem:[%s1 + $0x370] sm:$0xff]
    %v282 = vld [vmem:[%s1 + $0x378] sm:$0xff]
    %v283 = vld [vmem:[%s1 + $0x380] sm:$0xff]
    %v284 = vld [vmem:[%s1 + $0x388] sm:$0xff]
    %v285 = vld [vmem:[%s1 + $0x390] sm:$0xff]
    %v286 = vld [vmem:[%s1 + $0x398] sm:$0xff]
    %v287 = vld [vmem:[%s1 + $0x3a0] sm:$0xff]
    %v288 = vld [vmem:[%s1 + $0x3a8] sm:$0xff]
    %v289 = vld [vmem:[%s1 + $0x3b0] sm:$0xff]
    %v290 = vld [vmem:[%s1 + $0x3b8] sm:$0xff]
    %v291 = vld [vmem:[%s1 + $0x3c0] sm:$0xff]
    %v292 = vld [vmem:[%s1 + $0x3c8] sm:$0xff]
    %v293 = vld [vmem:[%s1 + $0x3d0] sm:$0xff]
    %v294 = vld [vmem:[%s1 + $0x3d8] sm:$0xff]
    %v295 = vld [vmem:[%s1 + $0x3e0] sm:$0xff]
    %v296 = vld [vmem:[%s1 + $0x3e8] sm:$0xff]
    %v297 = vld [vmem:[%s1 + $0x3f0] sm:$0xff]
    %v298 = vld [vmem:[%s1 + $0x3f8] sm:$0xff]
    %v299 = vld [vmem:[%s1 + $0x400] sm:$0xff]
    %v300 = vld [vmem:[%s1 + $0x408] sm:$0xff]
    %v301 = vld [vmem:[%s1 + $0x410] sm:$0xff]
    %v302 = vld [vmem:[%s1 + $0x418] sm:$0xff]
    %v303 = vld [vmem:[%s1 + $0x420] sm:$0xff]
    %v304 = vld [vmem:[%s1 + $0x428] sm:$0xff]
    %v305 = vld [vmem:[%s1 + $0x430] sm:$0xff]
    %v306 = vld [vmem:[%s1 + $0x438] sm:$0xff]
    %v307 = vld [vmem:[%s1 + $0x440] sm:$0xff]
    %v308 = vld [vmem:[%s1 + $0x448] sm:$0xff]
    %v309 = vld [vmem:[%s1 + $0x450] sm:$0xff]
    %v310 = vld [vmem:[%s1 + $0x458] sm:$0xff]
    %v311 = vld [vmem:[%s1 + $0x460] sm:$0xff]
    %v312 = vld [vmem:[%s1 + $0x468] sm:$0xff]
    %v313 = vld [vmem:[%s1 + $0x470] sm:$0xff]
    %v314 = vld [vmem:[%s1 + $0x478] sm:$0xff]
    %v315 = vld [vmem:[%s1 + $0x480] sm:$0xff]
    %v316 = vld [vmem:[%s1 + $0x488] sm:$0xff]
    %v317 = vld [vmem:[%s1 + $0x490] sm:$0xff]
    %v318 = vld [vmem:[%s1 + $0x498] sm:$0xff]
    %v319 = vld [vmem:[%s1 + $0x4a0] sm:$0xff]
    %v320 = vld [vmem:[%s1 + $0x4a8] sm:$0xff]
    %v321 = vld [vmem:[%s1 + $0x4b0] sm:$0xff]
    %v322 = vld [vmem:[%s1 + $0x4b8] sm:$0xff]
    %v323 = vld [vmem:[%s1 + $0x4c0] sm:$0xff]
    %v324 = vld [vmem:[%s1 + $0x4c8] sm:$0xff]
    %v325 = vld [vmem:[%s1 + $0x4d0] sm:$0xff]
    %v326 = vld [vmem:[%s1 + $0x4d8] sm:$0xff]
    %v327 = vld [vmem:[%s1 + $0x4e0] sm:$0xff]
    %v328 = vld [vmem:[%s1 + $0x4e8] sm:$0xff]
    %v329 = vld [vmem:[%s1 + $0x4f0] sm:$0xff]
    %v330 = vld [vmem:[%s1 + $0x4f8] sm:$0xff]
    %v331 = vld [vmem:[%s1 + $0x500] sm:$0xff]
    %v332 = vld [vmem:[%s1 + $0x508] sm:$0xff]
    %v333 = vld [vmem:[%s1 + $0x510] sm:$0xff]
    %v334 = vld [vmem:[%s1 + $0x518] sm:$0xff]
    %v335 = vld [vmem:[%s1 + $0x520] sm:$0xff]
    %v336 = vld [vmem:[%s1 + $0x528] sm:$0xff]
    %v337 = vld [vmem:[%s1 + $0x530] sm:$0xff]
    %v338 = vld [vmem:[%s1 + $0x538] sm:$0xff]
    %v339 = vld [vmem:[%s1 + $0x540] sm:$0xff]
    %v340 = vld [vmem:[%s1 + $0x548] sm:$0xff]
    %v341 = vld [vmem:[%s1 + $0x550] sm:$0xff]
    %v342 = vld [vmem:[%s1 + $0x558] sm:$0xff]
    %v343 = vld [vmem:[%s1 + $0x560] sm:$0xff]
    %v344 = vld [vmem:[%s1 + $0x568] sm:$0xff]
    %v345 = vld [vmem:[%s1 + $0x570] sm:$0xff]
    %v346 = vld [vmem:[%s1 + $0x578] sm:$0xff]
    %v347 = vld [vmem:[%s1 + $0x580] sm:$0xff]
    %v348 = vld [vmem:[%s1 + $0x588] sm:$0xff]
    %v349 = vld [vmem:[%s1 + $0x590] sm:$0xff]
    %v350 = vld [vmem:[%s1 + $0x598] sm:$0xff]
    %v351 = vld [vmem:[%s1 + $0x5a0] sm:$0xff]
    %v352 = vld [vmem:[%s1 + $0x5a8] sm:$0xff]
    %v353 = vld [vmem:[%s1 + $0x5b0] sm:$0xff]
    %v354 = vld [vmem:[%s1 + $0x5b8] sm:$0xff]
    %v355 = vld [vmem:[%s1 + $0x5c0] sm:$0xff]
    %v356 = vld [vmem:[%s1 + $0x5c8] sm:$0xff]
    %v357 = vld [vmem:[%s1 + $0x5d0] sm:$0xff]
    %v358 = vld [vmem:[%s1 + $0x5d8] sm:$0xff]
    %v359 = vld [vmem:[%s1 + $0x5e0] sm:$0xff]
    %v360 = vld [vmem:[%s1 + $0x5e8] sm:$0xff]
    %v361 = vld [vmem:[%s1 + $0x5f0] sm:$0xff]
    %v362 = vld [vmem:[%s1 + $0x5f8] sm:$0xff]
    %v363 = vld [vmem:[%s1 + $0x600] sm:$0xff]
    %v364 = vld [vmem:[%s1 + $0x608] sm:$0xff]
    %v365 = vld [vmem:[%s1 + $0x610] sm:$0xff]
    %v366 = vld [vmem:[%s1 + $0x618] sm:$0xff]
    %v367 = vld [vmem:[%s2] sm:$0xf]
    %v369 = vlaneseq
    %v370 = vshrl.u32 %v369, 7
    %v371 = vsub.s32 0, %v370
    %v372 = vrot.slane %v367, %v371
    %v373 = vlaneseq
    %v374 = vshrl.u32 %v373, 7
    %v375 = vsub.s32 1, %v374
    %v376 = vrot.slane %v367, %v375
    %v377 = vlaneseq
    %v378 = vshrl.u32 %v377, 7
    %v379 = vsub.s32 2, %v378
    %v380 = vrot.slane %v367, %v379
    %v381 = vlaneseq
    %v382 = vshrl.u32 %v381, 7
    %v383 = vsub.s32 3, %v382
    %v384 = vrot.slane %v367, %v383
    %v517 = vunpack.c.l.b16 %v43
    %v518 = vunpack.c.h.b16 %v43
    %v519 = vunpack.c.l.b16 %v44
    %v520 = vunpack.c.h.b16 %v44
    %v521 = vunpack.c.l.b16 %v45
    %v522 = vunpack.c.h.b16 %v45
    %v523 = vunpack.c.l.b16 %v46
    %v524 = vunpack.c.l.b16 %v47
    %v525 = vunpack.c.h.b16 %v47
    %v526 = vunpack.c.l.b16 %v48
    %v527 = vunpack.c.h.b16 %v48
    %v528 = vunpack.c.l.b16 %v49
    %v529 = vunpack.c.h.b16 %v49
    %v530 = vunpack.c.l.b16 %v50
    %v531 = vunpack.c.l.b16 %v51
    %v532 = vunpack.c.h.b16 %v51
    %v533 = vunpack.c.l.b16 %v52
    %v534 = vunpack.c.h.b16 %v52
    %v535 = vunpack.c.l.b16 %v53
    %v536 = vunpack.c.h.b16 %v53
    %v537 = vunpack.c.l.b16 %v54
    %v538 = vunpack.c.l.b16 %v55
    %v539 = vunpack.c.h.b16 %v55
    %v540 = vunpack.c.l.b16 %v56
    %v541 = vunpack.c.h.b16 %v56
    %v542 = vunpack.c.l.b16 %v57
    %v543 = vunpack.c.h.b16 %v57
    %v544 = vunpack.c.l.b16 %v58
    %v545 = vunpack.c.l.b16 %v59
    %v546 = vunpack.c.h.b16 %v59
    %v547 = vunpack.c.l.b16 %v60
    %v548 = vunpack.c.h.b16 %v60
    %v549 = vunpack.c.l.b16 %v61
    %v550 = vunpack.c.h.b16 %v61
    %v551 = vunpack.c.l.b16 %v62
    %v552 = vunpack.c.l.b16 %v63
    %v553 = vunpack.c.h.b16 %v63
    %v554 = vunpack.c.l.b16 %v64
    %v555 = vunpack.c.h.b16 %v64
    %v556 = vunpack.c.l.b16 %v65
    %v557 = vunpack.c.h.b16 %v65
    %v558 = vunpack.c.l.b16 %v66
    %v559 = vunpack.c.l.b16 %v67
    %v560 = vunpack.c.h.b16 %v67
    %v561 = vunpack.c.l.b16 %v68
    %v562 = vunpack.c.h.b16 %v68
    %v563 = vunpack.c.l.b16 %v69
    %v564 = vunpack.c.h.b16 %v69
    %v565 = vunpack.c.l.b16 %v70
    %v566 = vunpack.c.l.b16 %v71
    %v567 = vunpack.c.h.b16 %v71
    %v568 = vunpack.c.l.b16 %v72
    %v569 = vunpack.c.h.b16 %v72
    %v570 = vunpack.c.l.b16 %v73
    %v571 = vunpack.c.h.b16 %v73
    %v572 = vunpack.c.l.b16 %v74
    %v573 = vunpack.c.l.b16 %v75
    %v574 = vunpack.c.h.b16 %v75
    %v575 = vunpack.c.l.b16 %v76
    %v576 = vunpack.c.h.b16 %v76
    %v577 = vunpack.c.l.b16 %v77
    %v578 = vunpack.c.h.b16 %v77
    %v579 = vunpack.c.l.b16 %v78
    %v580 = vunpack.c.l.b16 %v79
    %v581 = vunpack.c.h.b16 %v79
    %v582 = vunpack.c.l.b16 %v80
    %v583 = vunpack.c.h.b16 %v80
    %v584 = vunpack.c.l.b16 %v81
    %v585 = vunpack.c.h.b16 %v81
    %v586 = vunpack.c.l.b16 %v82
    %v587 = vunpack.c.l.b16 %v83
    %v588 = vunpack.c.h.b16 %v83
    %v589 = vunpack.c.l.b16 %v84
    %v590 = vunpack.c.h.b16 %v84
    %v591 = vunpack.c.l.b16 %v85
    %v592 = vunpack.c.h.b16 %v85
    %v593 = vunpack.c.l.b16 %v86
    %v594 = vunpack.c.l.b16 %v87
    %v595 = vunpack.c.h.b16 %v87
    %v596 = vunpack.c.l.b16 %v88
    %v597 = vunpack.c.h.b16 %v88
    %v598 = vunpack.c.l.b16 %v89
    %v599 = vunpack.c.h.b16 %v89
    %v600 = vunpack.c.l.b16 %v90
    %v601 = vunpack.c.l.b16 %v91
    %v602 = vunpack.c.h.b16 %v91
    %v603 = vunpack.c.l.b16 %v92
    %v604 = vunpack.c.h.b16 %v92
    %v605 = vunpack.c.l.b16 %v93
    %v606 = vunpack.c.h.b16 %v93
    %v607 = vunpack.c.l.b16 %v94
    %v608 = vunpack.c.l.b16 %v95
    %v609 = vunpack.c.h.b16 %v95
    %v610 = vunpack.c.l.b16 %v96
    %v611 = vunpack.c.h.b16 %v96
    %v612 = vunpack.c.l.b16 %v97
    %v613 = vunpack.c.h.b16 %v97
    %v614 = vunpack.c.l.b16 %v98
    %v615 = vunpack.c.l.b16 %v99
    %v616 = vunpack.c.h.b16 %v99
    %v617 = vunpack.c.l.b16 %v100
    %v618 = vunpack.c.h.b16 %v100
    %v619 = vunpack.c.l.b16 %v101
    %v620 = vunpack.c.h.b16 %v101
    %v621 = vunpack.c.l.b16 %v102
    %v622 = vunpack.c.l.b16 %v103
    %v623 = vunpack.c.h.b16 %v103
    %v624 = vunpack.c.l.b16 %v104
    %v625 = vunpack.c.h.b16 %v104
    %v626 = vunpack.c.l.b16 %v105
    %v627 = vunpack.c.h.b16 %v105
    %v628 = vunpack.c.l.b16 %v106
    %v629 = vunpack.c.l.b16 %v107
    %v630 = vunpack.c.h.b16 %v107
    %v631 = vunpack.c.l.b16 %v108
    %v632 = vunpack.c.h.b16 %v108
    %v633 = vunpack.c.l.b16 %v109
    %v634 = vunpack.c.h.b16 %v109
    %v635 = vunpack.c.l.b16 %v110
    %v636 = vunpack.c.l.b16 %v111
    %v637 = vunpack.c.h.b16 %v111
    %v638 = vunpack.c.l.b16 %v112
    %v639 = vunpack.c.h.b16 %v112
    %v640 = vunpack.c.l.b16 %v113
    %v641 = vunpack.c.h.b16 %v113
    %v642 = vunpack.c.l.b16 %v114
    %v643 = vunpack.c.l.b16 %v115
    %v644 = vunpack.c.h.b16 %v115
    %v645 = vunpack.c.l.b16 %v116
    %v646 = vunpack.c.h.b16 %v116
    %v647 = vunpack.c.l.b16 %v117
    %v648 = vunpack.c.h.b16 %v117
    %v649 = vunpack.c.l.b16 %v118
    %v650 = vunpack.c.l.b16 %v119
    %v651 = vunpack.c.h.b16 %v119
    %v652 = vunpack.c.l.b16 %v120
    %v653 = vunpack.c.h.b16 %v120
    %v654 = vunpack.c.l.b16 %v121
    %v655 = vunpack.c.h.b16 %v121
    %v656 = vunpack.c.l.b16 %v122
    %v657 = vunpack.c.l.b16 %v123
    %v658 = vunpack.c.h.b16 %v123
    %v659 = vunpack.c.l.b16 %v124
    %v660 = vunpack.c.h.b16 %v124
    %v661 = vunpack.c.l.b16 %v125
    %v662 = vunpack.c.h.b16 %v125
    %v663 = vunpack.c.l.b16 %v126
    %v664 = vunpack.c.l.b16 %v127
    %v665 = vunpack.c.h.b16 %v127
    %v666 = vunpack.c.l.b16 %v128
    %v667 = vunpack.c.h.b16 %v128
    %v668 = vunpack.c.l.b16 %v129
    %v669 = vunpack.c.h.b16 %v129
    %v670 = vunpack.c.l.b16 %v130
    %v671 = vunpack.c.l.b16 %v131
    %v672 = vunpack.c.h.b16 %v131
    %v673 = vunpack.c.l.b16 %v132
    %v674 = vunpack.c.h.b16 %v132
    %v675 = vunpack.c.l.b16 %v133
    %v676 = vunpack.c.h.b16 %v133
    %v677 = vunpack.c.l.b16 %v134
    %v678 = vunpack.c.l.b16 %v135
    %v679 = vunpack.c.h.b16 %v135
    %v680 = vunpack.c.l.b16 %v136
    %v681 = vunpack.c.h.b16 %v136
    %v682 = vunpack.c.l.b16 %v137
    %v683 = vunpack.c.h.b16 %v137
    %v684 = vunpack.c.l.b16 %v138
    %v685 = vunpack.c.l.b16 %v139
    %v686 = vunpack.c.h.b16 %v139
    %v687 = vunpack.c.l.b16 %v140
    %v688 = vunpack.c.h.b16 %v140
    %v689 = vunpack.c.l.b16 %v141
    %v690 = vunpack.c.h.b16 %v141
    %v691 = vunpack.c.l.b16 %v142
    %v692 = vunpack.c.l.b16 %v143
    %v693 = vunpack.c.h.b16 %v143
    %v694 = vunpack.c.l.b16 %v144
    %v695 = vunpack.c.h.b16 %v144
    %v696 = vunpack.c.l.b16 %v145
    %v697 = vunpack.c.h.b16 %v145
    %v698 = vunpack.c.l.b16 %v146
    %v699 = vunpack.c.l.b16 %v147
    %v700 = vunpack.c.h.b16 %v147
    %v701 = vunpack.c.l.b16 %v148
    %v702 = vunpack.c.h.b16 %v148
    %v703 = vunpack.c.l.b16 %v149
    %v704 = vunpack.c.h.b16 %v149
    %v705 = vunpack.c.l.b16 %v150
    %v706 = vunpack.c.l.b16 %v151
    %v707 = vunpack.c.h.b16 %v151
    %v708 = vunpack.c.l.b16 %v152
    %v709 = vunpack.c.h.b16 %v152
    %v710 = vunpack.c.l.b16 %v153
    %v711 = vunpack.c.h.b16 %v153
    %v712 = vunpack.c.l.b16 %v154
    %v713 = vunpack.c.l.b16 %v155
    %v714 = vunpack.c.h.b16 %v155
    %v715 = vunpack.c.l.b16 %v156
    %v716 = vunpack.c.h.b16 %v156
    %v717 = vunpack.c.l.b16 %v157
    %v718 = vunpack.c.h.b16 %v157
    %v719 = vunpack.c.l.b16 %v158
    %v720 = vunpack.c.l.b16 %v159
    %v721 = vunpack.c.h.b16 %v159
    %v722 = vunpack.c.l.b16 %v160
    %v723 = vunpack.c.h.b16 %v160
    %v724 = vunpack.c.l.b16 %v161
    %v725 = vunpack.c.h.b16 %v161
    %v726 = vunpack.c.l.b16 %v162
    %v727 = vunpack.c.l.b16 %v163
    %v728 = vunpack.c.h.b16 %v163
    %v729 = vunpack.c.l.b16 %v164
    %v730 = vunpack.c.h.b16 %v164
    %v731 = vunpack.c.l.b16 %v165
    %v732 = vunpack.c.h.b16 %v165
    %v733 = vunpack.c.l.b16 %v166
    %v734 = vunpack.c.l.b16 %v167
    %v735 = vunpack.c.h.b16 %v167
    %v736 = vunpack.c.l.b16 %v168
    %v737 = vunpack.c.h.b16 %v168
    %v738 = vunpack.c.l.b16 %v169
    %v739 = vunpack.c.h.b16 %v169
    %v740 = vunpack.c.l.b16 %v170
    %v741 = vpack.c.b16 %v524, %v517
    %v742 = vpack.c.b16 %v525, %v518
    %v743 = vpack.c.b16 %v526, %v519
    %v744 = vpack.c.b16 %v527, %v520
    %v745 = vpack.c.b16 %v528, %v521
    %v746 = vpack.c.b16 %v529, %v522
    %v747 = vpack.c.b16 %v530, %v523
    %v748 = vpack.c.b16 %v538, %v531
    %v749 = vpack.c.b16 %v539, %v532
    %v750 = vpack.c.b16 %v540, %v533
    %v751 = vpack.c.b16 %v541, %v534
    %v752 = vpack.c.b16 %v542, %v535
    %v753 = vpack.c.b16 %v543, %v536
    %v754 = vpack.c.b16 %v544, %v537
    %v755 = vpack.c.b16 %v552, %v545
    %v756 = vpack.c.b16 %v553, %v546
    %v757 = vpack.c.b16 %v554, %v547
    %v758 = vpack.c.b16 %v555, %v548
    %v759 = vpack.c.b16 %v556, %v549
    %v760 = vpack.c.b16 %v557, %v550
    %v761 = vpack.c.b16 %v558, %v551
    %v762 = vpack.c.b16 %v566, %v559
    %v763 = vpack.c.b16 %v567, %v560
    %v764 = vpack.c.b16 %v568, %v561
    %v765 = vpack.c.b16 %v569, %v562
    %v766 = vpack.c.b16 %v570, %v563
    %v767 = vpack.c.b16 %v571, %v564
    %v768 = vpack.c.b16 %v572, %v565
    %v769 = vpack.c.b16 %v580, %v573
    %v770 = vpack.c.b16 %v581, %v574
    %v771 = vpack.c.b16 %v582, %v575
    %v772 = vpack.c.b16 %v583, %v576
    %v773 = vpack.c.b16 %v584, %v577
    %v774 = vpack.c.b16 %v585, %v578
    %v775 = vpack.c.b16 %v586, %v579
    %v776 = vpack.c.b16 %v594, %v587
    %v777 = vpack.c.b16 %v595, %v588
    %v778 = vpack.c.b16 %v596, %v589
    %v779 = vpack.c.b16 %v597, %v590
    %v780 = vpack.c.b16 %v598, %v591
    %v781 = vpack.c.b16 %v599, %v592
    %v782 = vpack.c.b16 %v600, %v593
    %v783 = vpack.c.b16 %v608, %v601
    %v784 = vpack.c.b16 %v609, %v602
    %v785 = vpack.c.b16 %v610, %v603
    %v786 = vpack.c.b16 %v611, %v604
    %v787 = vpack.c.b16 %v612, %v605
    %v788 = vpack.c.b16 %v613, %v606
    %v789 = vpack.c.b16 %v614, %v607
    %v790 = vpack.c.b16 %v622, %v615
    %v791 = vpack.c.b16 %v623, %v616
    %v792 = vpack.c.b16 %v624, %v617
    %v793 = vpack.c.b16 %v625, %v618
    %v794 = vpack.c.b16 %v626, %v619
    %v795 = vpack.c.b16 %v627, %v620
    %v796 = vpack.c.b16 %v628, %v621
    %v797 = vpack.c.b16 %v636, %v629
    %v798 = vpack.c.b16 %v637, %v630
    %v799 = vpack.c.b16 %v638, %v631
    %v800 = vpack.c.b16 %v639, %v632
    %v801 = vpack.c.b16 %v640, %v633
    %v802 = vpack.c.b16 %v641, %v634
    %v803 = vpack.c.b16 %v642, %v635
    %v804 = vpack.c.b16 %v650, %v643
    %v805 = vpack.c.b16 %v651, %v644
    %v806 = vpack.c.b16 %v652, %v645
    %v807 = vpack.c.b16 %v653, %v646
    %v808 = vpack.c.b16 %v654, %v647
    %v809 = vpack.c.b16 %v655, %v648
    %v810 = vpack.c.b16 %v656, %v649
    %v811 = vpack.c.b16 %v664, %v657
    %v812 = vpack.c.b16 %v665, %v658
    %v813 = vpack.c.b16 %v666, %v659
    %v814 = vpack.c.b16 %v667, %v660
    %v815 = vpack.c.b16 %v668, %v661
    %v816 = vpack.c.b16 %v669, %v662
    %v817 = vpack.c.b16 %v670, %v663
    %v818 = vpack.c.b16 %v678, %v671
    %v819 = vpack.c.b16 %v679, %v672
    %v820 = vpack.c.b16 %v680, %v673
    %v821 = vpack.c.b16 %v681, %v674
    %v822 = vpack.c.b16 %v682, %v675
    %v823 = vpack.c.b16 %v683, %v676
    %v824 = vpack.c.b16 %v684, %v677
    %v825 = vpack.c.b16 %v692, %v685
    %v826 = vpack.c.b16 %v693, %v686
    %v827 = vpack.c.b16 %v694, %v687
    %v828 = vpack.c.b16 %v695, %v688
    %v829 = vpack.c.b16 %v696, %v689
    %v830 = vpack.c.b16 %v697, %v690
    %v831 = vpack.c.b16 %v698, %v691
    %v832 = vpack.c.b16 %v706, %v699
    %v833 = vpack.c.b16 %v707, %v700
    %v834 = vpack.c.b16 %v708, %v701
    %v835 = vpack.c.b16 %v709, %v702
    %v836 = vpack.c.b16 %v710, %v703
    %v837 = vpack.c.b16 %v711, %v704
    %v838 = vpack.c.b16 %v712, %v705
    %v839 = vpack.c.b16 %v720, %v713
    %v840 = vpack.c.b16 %v721, %v714
    %v841 = vpack.c.b16 %v722, %v715
    %v842 = vpack.c.b16 %v723, %v716
    %v843 = vpack.c.b16 %v724, %v717
    %v844 = vpack.c.b16 %v725, %v718
    %v845 = vpack.c.b16 %v726, %v719
    %v846 = vpack.c.b16 %v734, %v727
    %v847 = vpack.c.b16 %v735, %v728
    %v848 = vpack.c.b16 %v736, %v729
    %v849 = vpack.c.b16 %v737, %v730
    %v850 = vpack.c.b16 %v738, %v731
    %v851 = vpack.c.b16 %v739, %v732
    %v852 = vpack.c.b16 %v740, %v733
    %v1145 = vunpack.c.l.b16 %v171
    %v1146 = vunpack.c.h.b16 %v171
    %v1147 = vunpack.c.l.b16 %v172
    %v1148 = vunpack.c.h.b16 %v172
    %v1149 = vunpack.c.l.b16 %v173
    %v1150 = vunpack.c.h.b16 %v173
    %v1151 = vunpack.c.l.b16 %v174
    %v1152 = vunpack.c.h.b16 %v174
    %v1153 = vunpack.c.l.b16 %v175
    %v1154 = vunpack.c.h.b16 %v175
    %v1155 = vunpack.c.l.b16 %v176
    %v1156 = vunpack.c.h.b16 %v176
    %v1157 = vunpack.c.l.b16 %v177
    %v1158 = vunpack.c.h.b16 %v177
    %v1159 = vunpack.c.l.b16 %v178
    %v1160 = vunpack.c.h.b16 %v178
    %v1161 = vunpack.c.l.b16 %v179
    %v1162 = vunpack.c.h.b16 %v179
    %v1163 = vunpack.c.l.b16 %v180
    %v1164 = vunpack.c.h.b16 %v180
    %v1165 = vunpack.c.l.b16 %v181
    %v1166 = vunpack.c.h.b16 %v181
    %v1167 = vunpack.c.l.b16 %v182
    %v1168 = vunpack.c.h.b16 %v182
    %v1169 = vunpack.c.l.b16 %v183
    %v1170 = vunpack.c.h.b16 %v183
    %v1171 = vunpack.c.l.b16 %v184
    %v1172 = vunpack.c.h.b16 %v184
    %v1173 = vunpack.c.l.b16 %v185
    %v1174 = vunpack.c.h.b16 %v185
    %v1175 = vunpack.c.l.b16 %v186
    %v1176 = vunpack.c.h.b16 %v186
    %v1177 = vunpack.c.l.b16 %v187
    %v1178 = vunpack.c.h.b16 %v187
    %v1179 = vunpack.c.l.b16 %v188
    %v1180 = vunpack.c.h.b16 %v188
    %v1181 = vunpack.c.l.b16 %v189
    %v1182 = vunpack.c.h.b16 %v189
    %v1183 = vunpack.c.l.b16 %v190
    %v1184 = vunpack.c.h.b16 %v190
    %v1185 = vunpack.c.l.b16 %v191
    %v1186 = vunpack.c.h.b16 %v191
    %v1187 = vunpack.c.l.b16 %v192
    %v1188 = vunpack.c.h.b16 %v192
    %v1189 = vunpack.c.l.b16 %v193
    %v1190 = vunpack.c.h.b16 %v193
    %v1191 = vunpack.c.l.b16 %v194
    %v1192 = vunpack.c.h.b16 %v194
    %v1193 = vunpack.c.l.b16 %v195
    %v1194 = vunpack.c.h.b16 %v195
    %v1195 = vunpack.c.l.b16 %v196
    %v1196 = vunpack.c.h.b16 %v196
    %v1197 = vunpack.c.l.b16 %v197
    %v1198 = vunpack.c.h.b16 %v197
    %v1199 = vunpack.c.l.b16 %v198
    %v1200 = vunpack.c.h.b16 %v198
    %v1201 = vunpack.c.l.b16 %v199
    %v1202 = vunpack.c.h.b16 %v199
    %v1203 = vunpack.c.l.b16 %v200
    %v1204 = vunpack.c.h.b16 %v200
    %v1205 = vunpack.c.l.b16 %v201
    %v1206 = vunpack.c.h.b16 %v201
    %v1207 = vunpack.c.l.b16 %v202
    %v1208 = vunpack.c.h.b16 %v202
    %v1209 = vunpack.c.l.b16 %v203
    %v1210 = vunpack.c.h.b16 %v203
    %v1211 = vunpack.c.l.b16 %v204
    %v1212 = vunpack.c.h.b16 %v204
    %v1213 = vunpack.c.l.b16 %v205
    %v1214 = vunpack.c.h.b16 %v205
    %v1215 = vunpack.c.l.b16 %v206
    %v1216 = vunpack.c.h.b16 %v206
    %v1217 = vunpack.c.l.b16 %v207
    %v1218 = vunpack.c.h.b16 %v207
    %v1219 = vunpack.c.l.b16 %v208
    %v1220 = vunpack.c.h.b16 %v208
    %v1221 = vunpack.c.l.b16 %v209
    %v1222 = vunpack.c.h.b16 %v209
    %v1223 = vunpack.c.l.b16 %v210
    %v1224 = vunpack.c.h.b16 %v210
    %v1225 = vunpack.c.l.b16 %v211
    %v1226 = vunpack.c.h.b16 %v211
    %v1227 = vunpack.c.l.b16 %v212
    %v1228 = vunpack.c.h.b16 %v212
    %v1229 = vunpack.c.l.b16 %v213
    %v1230 = vunpack.c.h.b16 %v213
    %v1231 = vunpack.c.l.b16 %v214
    %v1232 = vunpack.c.h.b16 %v214
    %v1233 = vunpack.c.l.b16 %v215
    %v1234 = vunpack.c.h.b16 %v215
    %v1235 = vunpack.c.l.b16 %v216
    %v1236 = vunpack.c.h.b16 %v216
    %v1237 = vunpack.c.l.b16 %v217
    %v1238 = vunpack.c.h.b16 %v217
    %v1239 = vunpack.c.l.b16 %v218
    %v1240 = vunpack.c.h.b16 %v218
    %v1241 = vunpack.c.l.b16 %v219
    %v1242 = vunpack.c.h.b16 %v219
    %v1243 = vunpack.c.l.b16 %v220
    %v1244 = vunpack.c.h.b16 %v220
    %v1245 = vunpack.c.l.b16 %v221
    %v1246 = vunpack.c.h.b16 %v221
    %v1247 = vunpack.c.l.b16 %v222
    %v1248 = vunpack.c.h.b16 %v222
    %v1249 = vunpack.c.l.b16 %v223
    %v1250 = vunpack.c.h.b16 %v223
    %v1251 = vunpack.c.l.b16 %v224
    %v1252 = vunpack.c.h.b16 %v224
    %v1253 = vunpack.c.l.b16 %v225
    %v1254 = vunpack.c.h.b16 %v225
    %v1255 = vunpack.c.l.b16 %v226
    %v1256 = vunpack.c.h.b16 %v226
    %v1257 = vunpack.c.l.b16 %v227
    %v1258 = vunpack.c.h.b16 %v227
    %v1259 = vunpack.c.l.b16 %v228
    %v1260 = vunpack.c.h.b16 %v228
    %v1261 = vunpack.c.l.b16 %v229
    %v1262 = vunpack.c.h.b16 %v229
    %v1263 = vunpack.c.l.b16 %v230
    %v1264 = vunpack.c.h.b16 %v230
    %v1265 = vunpack.c.l.b16 %v231
    %v1266 = vunpack.c.h.b16 %v231
    %v1267 = vunpack.c.l.b16 %v232
    %v1268 = vunpack.c.h.b16 %v232
    %v1269 = vunpack.c.l.b16 %v233
    %v1270 = vunpack.c.h.b16 %v233
    %v1271 = vunpack.c.l.b16 %v234
    %v1272 = vunpack.c.h.b16 %v234
    %v1273 = vunpack.c.l.b16 %v235
    %v1274 = vunpack.c.h.b16 %v235
    %v1275 = vunpack.c.l.b16 %v236
    %v1276 = vunpack.c.h.b16 %v236
    %v1277 = vunpack.c.l.b16 %v237
    %v1278 = vunpack.c.h.b16 %v237
    %v1279 = vunpack.c.l.b16 %v238
    %v1280 = vunpack.c.h.b16 %v238
    %v1281 = vunpack.c.l.b16 %v239
    %v1282 = vunpack.c.h.b16 %v239
    %v1283 = vunpack.c.l.b16 %v240
    %v1284 = vunpack.c.h.b16 %v240
    %v1285 = vunpack.c.l.b16 %v241
    %v1286 = vunpack.c.h.b16 %v241
    %v1287 = vunpack.c.l.b16 %v242
    %v1288 = vunpack.c.h.b16 %v242
    %v1289 = vunpack.c.l.b16 %v243
    %v1290 = vunpack.c.h.b16 %v243
    %v1291 = vunpack.c.l.b16 %v244
    %v1292 = vunpack.c.h.b16 %v244
    %v1293 = vunpack.c.l.b16 %v245
    %v1294 = vunpack.c.h.b16 %v245
    %v1295 = vunpack.c.l.b16 %v246
    %v1296 = vunpack.c.h.b16 %v246
    %v1297 = vunpack.c.l.b16 %v247
    %v1298 = vunpack.c.h.b16 %v247
    %v1299 = vunpack.c.l.b16 %v248
    %v1300 = vunpack.c.h.b16 %v248
    %v1301 = vunpack.c.l.b16 %v249
    %v1302 = vunpack.c.h.b16 %v249
    %v1303 = vunpack.c.l.b16 %v250
    %v1304 = vunpack.c.h.b16 %v250
    %v1305 = vunpack.c.l.b16 %v251
    %v1306 = vunpack.c.h.b16 %v251
    %v1307 = vunpack.c.l.b16 %v252
    %v1308 = vunpack.c.h.b16 %v252
    %v1309 = vunpack.c.l.b16 %v253
    %v1310 = vunpack.c.h.b16 %v253
    %v1311 = vunpack.c.l.b16 %v254
    %v1312 = vunpack.c.h.b16 %v254
    %v1313 = vunpack.c.l.b16 %v255
    %v1314 = vunpack.c.h.b16 %v255
    %v1315 = vunpack.c.l.b16 %v256
    %v1316 = vunpack.c.h.b16 %v256
    %v1317 = vunpack.c.l.b16 %v257
    %v1318 = vunpack.c.h.b16 %v257
    %v1319 = vunpack.c.l.b16 %v258
    %v1320 = vunpack.c.h.b16 %v258
    %v1321 = vunpack.c.l.b16 %v259
    %v1322 = vunpack.c.h.b16 %v259
    %v1323 = vunpack.c.l.b16 %v260
    %v1324 = vunpack.c.h.b16 %v260
    %v1325 = vunpack.c.l.b16 %v261
    %v1326 = vunpack.c.h.b16 %v261
    %v1327 = vunpack.c.l.b16 %v262
    %v1328 = vunpack.c.h.b16 %v262
    %v1329 = vunpack.c.l.b16 %v263
    %v1330 = vunpack.c.h.b16 %v263
    %v1331 = vunpack.c.l.b16 %v264
    %v1332 = vunpack.c.h.b16 %v264
    %v1333 = vunpack.c.l.b16 %v265
    %v1334 = vunpack.c.h.b16 %v265
    %v1335 = vunpack.c.l.b16 %v266
    %v1336 = vunpack.c.h.b16 %v266
    %v1337 = vunpack.c.l.b16 %v267
    %v1338 = vunpack.c.h.b16 %v267
    %v1339 = vunpack.c.l.b16 %v268
    %v1340 = vunpack.c.h.b16 %v268
    %v1341 = vunpack.c.l.b16 %v269
    %v1342 = vunpack.c.h.b16 %v269
    %v1343 = vunpack.c.l.b16 %v270
    %v1344 = vunpack.c.h.b16 %v270
    %v1345 = vunpack.c.l.b16 %v271
    %v1346 = vunpack.c.h.b16 %v271
    %v1347 = vunpack.c.l.b16 %v272
    %v1348 = vunpack.c.h.b16 %v272
    %v1349 = vunpack.c.l.b16 %v273
    %v1350 = vunpack.c.h.b16 %v273
    %v1351 = vunpack.c.l.b16 %v274
    %v1352 = vunpack.c.h.b16 %v274
    %v1353 = vunpack.c.l.b16 %v275
    %v1354 = vunpack.c.h.b16 %v275
    %v1355 = vunpack.c.l.b16 %v276
    %v1356 = vunpack.c.h.b16 %v276
    %v1357 = vunpack.c.l.b16 %v277
    %v1358 = vunpack.c.h.b16 %v277
    %v1359 = vunpack.c.l.b16 %v278
    %v1360 = vunpack.c.h.b16 %v278
    %v1361 = vunpack.c.l.b16 %v279
    %v1362 = vunpack.c.h.b16 %v279
    %v1363 = vunpack.c.l.b16 %v280
    %v1364 = vunpack.c.h.b16 %v280
    %v1365 = vunpack.c.l.b16 %v281
    %v1366 = vunpack.c.h.b16 %v281
    %v1367 = vunpack.c.l.b16 %v282
    %v1368 = vunpack.c.h.b16 %v282
    %v1369 = vunpack.c.l.b16 %v283
    %v1370 = vunpack.c.h.b16 %v283
    %v1371 = vunpack.c.l.b16 %v284
    %v1372 = vunpack.c.h.b16 %v284
    %v1373 = vunpack.c.l.b16 %v285
    %v1374 = vunpack.c.h.b16 %v285
    %v1375 = vunpack.c.l.b16 %v286
    %v1376 = vunpack.c.h.b16 %v286
    %v1377 = vunpack.c.l.b16 %v287
    %v1378 = vunpack.c.h.b16 %v287
    %v1379 = vunpack.c.l.b16 %v288
    %v1380 = vunpack.c.h.b16 %v288
    %v1381 = vunpack.c.l.b16 %v289
    %v1382 = vunpack.c.h.b16 %v289
    %v1383 = vunpack.c.l.b16 %v290
    %v1384 = vunpack.c.h.b16 %v290
    %v1385 = vunpack.c.l.b16 %v291
    %v1386 = vunpack.c.h.b16 %v291
    %v1387 = vunpack.c.l.b16 %v292
    %v1388 = vunpack.c.h.b16 %v292
    %v1389 = vunpack.c.l.b16 %v293
    %v1390 = vunpack.c.h.b16 %v293
    %v1391 = vunpack.c.l.b16 %v294
    %v1392 = vunpack.c.h.b16 %v294
    %v1393 = vunpack.c.l.b16 %v295
    %v1394 = vunpack.c.h.b16 %v295
    %v1395 = vunpack.c.l.b16 %v296
    %v1396 = vunpack.c.h.b16 %v296
    %v1397 = vunpack.c.l.b16 %v297
    %v1398 = vunpack.c.h.b16 %v297
    %v1399 = vunpack.c.l.b16 %v298
    %v1400 = vunpack.c.h.b16 %v298
    %v1401 = vunpack.c.l.b16 %v299
    %v1402 = vunpack.c.h.b16 %v299
    %v1403 = vunpack.c.l.b16 %v300
    %v1404 = vunpack.c.h.b16 %v300
    %v1405 = vunpack.c.l.b16 %v301
    %v1406 = vunpack.c.h.b16 %v301
    %v1407 = vunpack.c.l.b16 %v302
    %v1408 = vunpack.c.h.b16 %v302
    %v1409 = vunpack.c.l.b16 %v303
    %v1410 = vunpack.c.h.b16 %v303
    %v1411 = vunpack.c.l.b16 %v304
    %v1412 = vunpack.c.h.b16 %v304
    %v1413 = vunpack.c.l.b16 %v305
    %v1414 = vunpack.c.h.b16 %v305
    %v1415 = vunpack.c.l.b16 %v306
    %v1416 = vunpack.c.h.b16 %v306
    %v1417 = vunpack.c.l.b16 %v307
    %v1418 = vunpack.c.h.b16 %v307
    %v1419 = vunpack.c.l.b16 %v308
    %v1420 = vunpack.c.h.b16 %v308
    %v1421 = vunpack.c.l.b16 %v309
    %v1422 = vunpack.c.h.b16 %v309
    %v1423 = vunpack.c.l.b16 %v310
    %v1424 = vunpack.c.h.b16 %v310
    %v1425 = vunpack.c.l.b16 %v311
    %v1426 = vunpack.c.h.b16 %v311
    %v1427 = vunpack.c.l.b16 %v312
    %v1428 = vunpack.c.h.b16 %v312
    %v1429 = vunpack.c.l.b16 %v313
    %v1430 = vunpack.c.h.b16 %v313
    %v1431 = vunpack.c.l.b16 %v314
    %v1432 = vunpack.c.h.b16 %v314
    %v1433 = vunpack.c.l.b16 %v315
    %v1434 = vunpack.c.h.b16 %v315
    %v1435 = vunpack.c.l.b16 %v316
    %v1436 = vunpack.c.h.b16 %v316
    %v1437 = vunpack.c.l.b16 %v317
    %v1438 = vunpack.c.h.b16 %v317
    %v1439 = vunpack.c.l.b16 %v318
    %v1440 = vunpack.c.h.b16 %v318
    %v1441 = vunpack.c.l.b16 %v319
    %v1442 = vunpack.c.h.b16 %v319
    %v1443 = vunpack.c.l.b16 %v320
    %v1444 = vunpack.c.h.b16 %v320
    %v1445 = vunpack.c.l.b16 %v321
    %v1446 = vunpack.c.h.b16 %v321
    %v1447 = vunpack.c.l.b16 %v322
    %v1448 = vunpack.c.h.b16 %v322
    %v1449 = vunpack.c.l.b16 %v323
    %v1450 = vunpack.c.h.b16 %v323
    %v1451 = vunpack.c.l.b16 %v324
    %v1452 = vunpack.c.h.b16 %v324
    %v1453 = vunpack.c.l.b16 %v325
    %v1454 = vunpack.c.h.b16 %v325
    %v1455 = vunpack.c.l.b16 %v326
    %v1456 = vunpack.c.h.b16 %v326
    %v1457 = vunpack.c.l.b16 %v327
    %v1458 = vunpack.c.h.b16 %v327
    %v1459 = vunpack.c.l.b16 %v328
    %v1460 = vunpack.c.h.b16 %v328
    %v1461 = vunpack.c.l.b16 %v329
    %v1462 = vunpack.c.h.b16 %v329
    %v1463 = vunpack.c.l.b16 %v330
    %v1464 = vunpack.c.h.b16 %v330
    %v1465 = vunpack.c.l.b16 %v331
    %v1466 = vunpack.c.h.b16 %v331
    %v1467 = vunpack.c.l.b16 %v332
    %v1468 = vunpack.c.h.b16 %v332
    %v1469 = vunpack.c.l.b16 %v333
    %v1470 = vunpack.c.h.b16 %v333
    %v1471 = vunpack.c.l.b16 %v334
    %v1472 = vunpack.c.h.b16 %v334
    %v1473 = vunpack.c.l.b16 %v335
    %v1474 = vunpack.c.h.b16 %v335
    %v1475 = vunpack.c.l.b16 %v336
    %v1476 = vunpack.c.h.b16 %v336
    %v1477 = vunpack.c.l.b16 %v337
    %v1478 = vunpack.c.h.b16 %v337
    %v1479 = vunpack.c.l.b16 %v338
    %v1480 = vunpack.c.h.b16 %v338
    %v1481 = vunpack.c.l.b16 %v339
    %v1482 = vunpack.c.h.b16 %v339
    %v1483 = vunpack.c.l.b16 %v340
    %v1484 = vunpack.c.h.b16 %v340
    %v1485 = vunpack.c.l.b16 %v341
    %v1486 = vunpack.c.h.b16 %v341
    %v1487 = vunpack.c.l.b16 %v342
    %v1488 = vunpack.c.h.b16 %v342
    %v1489 = vunpack.c.l.b16 %v343
    %v1490 = vunpack.c.h.b16 %v343
    %v1491 = vunpack.c.l.b16 %v344
    %v1492 = vunpack.c.h.b16 %v344
    %v1493 = vunpack.c.l.b16 %v345
    %v1494 = vunpack.c.h.b16 %v345
    %v1495 = vunpack.c.l.b16 %v346
    %v1496 = vunpack.c.h.b16 %v346
    %v1497 = vunpack.c.l.b16 %v347
    %v1498 = vunpack.c.h.b16 %v347
    %v1499 = vunpack.c.l.b16 %v348
    %v1500 = vunpack.c.h.b16 %v348
    %v1501 = vunpack.c.l.b16 %v349
    %v1502 = vunpack.c.h.b16 %v349
    %v1503 = vunpack.c.l.b16 %v350
    %v1504 = vunpack.c.h.b16 %v350
    %v1505 = vunpack.c.l.b16 %v351
    %v1506 = vunpack.c.h.b16 %v351
    %v1507 = vunpack.c.l.b16 %v352
    %v1508 = vunpack.c.h.b16 %v352
    %v1509 = vunpack.c.l.b16 %v353
    %v1510 = vunpack.c.h.b16 %v353
    %v1511 = vunpack.c.l.b16 %v354
    %v1512 = vunpack.c.h.b16 %v354
    %v1513 = vunpack.c.l.b16 %v355
    %v1514 = vunpack.c.h.b16 %v355
    %v1515 = vunpack.c.l.b16 %v356
    %v1516 = vunpack.c.h.b16 %v356
    %v1517 = vunpack.c.l.b16 %v357
    %v1518 = vunpack.c.h.b16 %v357
    %v1519 = vunpack.c.l.b16 %v358
    %v1520 = vunpack.c.h.b16 %v358
    %v1521 = vunpack.c.l.b16 %v359
    %v1522 = vunpack.c.h.b16 %v359
    %v1523 = vunpack.c.l.b16 %v360
    %v1524 = vunpack.c.h.b16 %v360
    %v1525 = vunpack.c.l.b16 %v361
    %v1526 = vunpack.c.h.b16 %v361
    %v1527 = vunpack.c.l.b16 %v362
    %v1528 = vunpack.c.h.b16 %v362
    %v1529 = vunpack.c.l.b16 %v363
    %v1530 = vunpack.c.h.b16 %v363
    %v1531 = vunpack.c.l.b16 %v364
    %v1532 = vunpack.c.h.b16 %v364
    %v1533 = vunpack.c.l.b16 %v365
    %v1534 = vunpack.c.h.b16 %v365
    %v1535 = vunpack.c.l.b16 %v366
    %v1536 = vunpack.c.h.b16 %v366
    %v1537 = vpack.c.b16 %v1149, %v1145
    %v1538 = vpack.c.b16 %v1150, %v1146
    %v1539 = vpack.c.b16 %v1151, %v1147
    %v1540 = vpack.c.b16 %v1152, %v1148
    %v1541 = vpack.c.b16 %v1157, %v1153
    %v1542 = vpack.c.b16 %v1158, %v1154
    %v1543 = vpack.c.b16 %v1159, %v1155
    %v1544 = vpack.c.b16 %v1160, %v1156
    %v1545 = vpack.c.b16 %v1165, %v1161
    %v1546 = vpack.c.b16 %v1166, %v1162
    %v1547 = vpack.c.b16 %v1167, %v1163
    %v1548 = vpack.c.b16 %v1168, %v1164
    %v1549 = vpack.c.b16 %v1173, %v1169
    %v1550 = vpack.c.b16 %v1174, %v1170
    %v1551 = vpack.c.b16 %v1175, %v1171
    %v1552 = vpack.c.b16 %v1176, %v1172
    %v1553 = vpack.c.b16 %v1181, %v1177
    %v1554 = vpack.c.b16 %v1182, %v1178
    %v1555 = vpack.c.b16 %v1183, %v1179
    %v1556 = vpack.c.b16 %v1184, %v1180
    %v1557 = vpack.c.b16 %v1189, %v1185
    %v1558 = vpack.c.b16 %v1190, %v1186
    %v1559 = vpack.c.b16 %v1191, %v1187
    %v1560 = vpack.c.b16 %v1192, %v1188
    %v1561 = vpack.c.b16 %v1197, %v1193
    %v1562 = vpack.c.b16 %v1198, %v1194
    %v1563 = vpack.c.b16 %v1199, %v1195
    %v1564 = vpack.c.b16 %v1200, %v1196
    %v1565 = vpack.c.b16 %v1205, %v1201
    %v1566 = vpack.c.b16 %v1206, %v1202
    %v1567 = vpack.c.b16 %v1207, %v1203
    %v1568 = vpack.c.b16 %v1208, %v1204
    %v1569 = vpack.c.b16 %v1213, %v1209
    %v1570 = vpack.c.b16 %v1214, %v1210
    %v1571 = vpack.c.b16 %v1215, %v1211
    %v1572 = vpack.c.b16 %v1216, %v1212
    %v1573 = vpack.c.b16 %v1221, %v1217
    %v1574 = vpack.c.b16 %v1222, %v1218
    %v1575 = vpack.c.b16 %v1223, %v1219
    %v1576 = vpack.c.b16 %v1224, %v1220
    %v1577 = vpack.c.b16 %v1229, %v1225
    %v1578 = vpack.c.b16 %v1230, %v1226
    %v1579 = vpack.c.b16 %v1231, %v1227
    %v1580 = vpack.c.b16 %v1232, %v1228
    %v1581 = vpack.c.b16 %v1237, %v1233
    %v1582 = vpack.c.b16 %v1238, %v1234
    %v1583 = vpack.c.b16 %v1239, %v1235
    %v1584 = vpack.c.b16 %v1240, %v1236
    %v1585 = vpack.c.b16 %v1245, %v1241
    %v1586 = vpack.c.b16 %v1246, %v1242
    %v1587 = vpack.c.b16 %v1247, %v1243
    %v1588 = vpack.c.b16 %v1248, %v1244
    %v1589 = vpack.c.b16 %v1253, %v1249
    %v1590 = vpack.c.b16 %v1254, %v1250
    %v1591 = vpack.c.b16 %v1255, %v1251
    %v1592 = vpack.c.b16 %v1256, %v1252
    %v1593 = vpack.c.b16 %v1261, %v1257
    %v1594 = vpack.c.b16 %v1262, %v1258
    %v1595 = vpack.c.b16 %v1263, %v1259
    %v1596 = vpack.c.b16 %v1264, %v1260
    %v1597 = vpack.c.b16 %v1269, %v1265
    %v1598 = vpack.c.b16 %v1270, %v1266
    %v1599 = vpack.c.b16 %v1271, %v1267
    %v1600 = vpack.c.b16 %v1272, %v1268
    %v1601 = vpack.c.b16 %v1277, %v1273
    %v1602 = vpack.c.b16 %v1278, %v1274
    %v1603 = vpack.c.b16 %v1279, %v1275
    %v1604 = vpack.c.b16 %v1280, %v1276
    %v1605 = vpack.c.b16 %v1285, %v1281
    %v1606 = vpack.c.b16 %v1286, %v1282
    %v1607 = vpack.c.b16 %v1287, %v1283
    %v1608 = vpack.c.b16 %v1288, %v1284
    %v1609 = vpack.c.b16 %v1293, %v1289
    %v1610 = vpack.c.b16 %v1294, %v1290
    %v1611 = vpack.c.b16 %v1295, %v1291
    %v1612 = vpack.c.b16 %v1296, %v1292
    %v1613 = vpack.c.b16 %v1301, %v1297
    %v1614 = vpack.c.b16 %v1302, %v1298
    %v1615 = vpack.c.b16 %v1303, %v1299
    %v1616 = vpack.c.b16 %v1304, %v1300
    %v1617 = vpack.c.b16 %v1309, %v1305
    %v1618 = vpack.c.b16 %v1310, %v1306
    %v1619 = vpack.c.b16 %v1311, %v1307
    %v1620 = vpack.c.b16 %v1312, %v1308
    %v1621 = vpack.c.b16 %v1317, %v1313
    %v1622 = vpack.c.b16 %v1318, %v1314
    %v1623 = vpack.c.b16 %v1319, %v1315
    %v1624 = vpack.c.b16 %v1320, %v1316
    %v1625 = vpack.c.b16 %v1325, %v1321
    %v1626 = vpack.c.b16 %v1326, %v1322
    %v1627 = vpack.c.b16 %v1327, %v1323
    %v1628 = vpack.c.b16 %v1328, %v1324
    %v1629 = vpack.c.b16 %v1333, %v1329
    %v1630 = vpack.c.b16 %v1334, %v1330
    %v1631 = vpack.c.b16 %v1335, %v1331
    %v1632 = vpack.c.b16 %v1336, %v1332
    %v1633 = vpack.c.b16 %v1341, %v1337
    %v1634 = vpack.c.b16 %v1342, %v1338
    %v1635 = vpack.c.b16 %v1343, %v1339
    %v1636 = vpack.c.b16 %v1344, %v1340
    %v1637 = vpack.c.b16 %v1349, %v1345
    %v1638 = vpack.c.b16 %v1350, %v1346
    %v1639 = vpack.c.b16 %v1351, %v1347
    %v1640 = vpack.c.b16 %v1352, %v1348
    %v1641 = vpack.c.b16 %v1357, %v1353
    %v1642 = vpack.c.b16 %v1358, %v1354
    %v1643 = vpack.c.b16 %v1359, %v1355
    %v1644 = vpack.c.b16 %v1360, %v1356
    %v1645 = vpack.c.b16 %v1365, %v1361
    %v1646 = vpack.c.b16 %v1366, %v1362
    %v1647 = vpack.c.b16 %v1367, %v1363
    %v1648 = vpack.c.b16 %v1368, %v1364
    %v1649 = vpack.c.b16 %v1373, %v1369
    %v1650 = vpack.c.b16 %v1374, %v1370
    %v1651 = vpack.c.b16 %v1375, %v1371
    %v1652 = vpack.c.b16 %v1376, %v1372
    %v1653 = vpack.c.b16 %v1381, %v1377
    %v1654 = vpack.c.b16 %v1382, %v1378
    %v1655 = vpack.c.b16 %v1383, %v1379
    %v1656 = vpack.c.b16 %v1384, %v1380
    %v1657 = vpack.c.b16 %v1389, %v1385
    %v1658 = vpack.c.b16 %v1390, %v1386
    %v1659 = vpack.c.b16 %v1391, %v1387
    %v1660 = vpack.c.b16 %v1392, %v1388
    %v1661 = vpack.c.b16 %v1397, %v1393
    %v1662 = vpack.c.b16 %v1398, %v1394
    %v1663 = vpack.c.b16 %v1399, %v1395
    %v1664 = vpack.c.b16 %v1400, %v1396
    %v1665 = vpack.c.b16 %v1405, %v1401
    %v1666 = vpack.c.b16 %v1406, %v1402
    %v1667 = vpack.c.b16 %v1407, %v1403
    %v1668 = vpack.c.b16 %v1408, %v1404
    %v1669 = vpack.c.b16 %v1413, %v1409
    %v1670 = vpack.c.b16 %v1414, %v1410
    %v1671 = vpack.c.b16 %v1415, %v1411
    %v1672 = vpack.c.b16 %v1416, %v1412
    %v1673 = vpack.c.b16 %v1421, %v1417
    %v1674 = vpack.c.b16 %v1422, %v1418
    %v1675 = vpack.c.b16 %v1423, %v1419
    %v1676 = vpack.c.b16 %v1424, %v1420
    %v1677 = vpack.c.b16 %v1429, %v1425
    %v1678 = vpack.c.b16 %v1430, %v1426
    %v1679 = vpack.c.b16 %v1431, %v1427
    %v1680 = vpack.c.b16 %v1432, %v1428
    %v1681 = vpack.c.b16 %v1437, %v1433
    %v1682 = vpack.c.b16 %v1438, %v1434
    %v1683 = vpack.c.b16 %v1439, %v1435
    %v1684 = vpack.c.b16 %v1440, %v1436
    %v1685 = vpack.c.b16 %v1445, %v1441
    %v1686 = vpack.c.b16 %v1446, %v1442
    %v1687 = vpack.c.b16 %v1447, %v1443
    %v1688 = vpack.c.b16 %v1448, %v1444
    %v1689 = vpack.c.b16 %v1453, %v1449
    %v1690 = vpack.c.b16 %v1454, %v1450
    %v1691 = vpack.c.b16 %v1455, %v1451
    %v1692 = vpack.c.b16 %v1456, %v1452
    %v1693 = vpack.c.b16 %v1461, %v1457
    %v1694 = vpack.c.b16 %v1462, %v1458
    %v1695 = vpack.c.b16 %v1463, %v1459
    %v1696 = vpack.c.b16 %v1464, %v1460
    %v1697 = vpack.c.b16 %v1469, %v1465
    %v1698 = vpack.c.b16 %v1470, %v1466
    %v1699 = vpack.c.b16 %v1471, %v1467
    %v1700 = vpack.c.b16 %v1472, %v1468
    %v1701 = vpack.c.b16 %v1477, %v1473
    %v1702 = vpack.c.b16 %v1478, %v1474
    %v1703 = vpack.c.b16 %v1479, %v1475
    %v1704 = vpack.c.b16 %v1480, %v1476
    %v1705 = vpack.c.b16 %v1485, %v1481
    %v1706 = vpack.c.b16 %v1486, %v1482
    %v1707 = vpack.c.b16 %v1487, %v1483
    %v1708 = vpack.c.b16 %v1488, %v1484
    %v1709 = vpack.c.b16 %v1493, %v1489
    %v1710 = vpack.c.b16 %v1494, %v1490
    %v1711 = vpack.c.b16 %v1495, %v1491
    %v1712 = vpack.c.b16 %v1496, %v1492
    %v1713 = vpack.c.b16 %v1501, %v1497
    %v1714 = vpack.c.b16 %v1502, %v1498
    %v1715 = vpack.c.b16 %v1503, %v1499
    %v1716 = vpack.c.b16 %v1504, %v1500
    %v1717 = vpack.c.b16 %v1509, %v1505
    %v1718 = vpack.c.b16 %v1510, %v1506
    %v1719 = vpack.c.b16 %v1511, %v1507
    %v1720 = vpack.c.b16 %v1512, %v1508
    %v1721 = vpack.c.b16 %v1517, %v1513
    %v1722 = vpack.c.b16 %v1518, %v1514
    %v1723 = vpack.c.b16 %v1519, %v1515
    %v1724 = vpack.c.b16 %v1520, %v1516
    %v1725 = vpack.c.b16 %v1525, %v1521
    %v1726 = vpack.c.b16 %v1526, %v1522
    %v1727 = vpack.c.b16 %v1527, %v1523
    %v1728 = vpack.c.b16 %v1528, %v1524
    %v1729 = vpack.c.b16 %v1533, %v1529
    %v1730 = vpack.c.b16 %v1534, %v1530
    %v1731 = vpack.c.b16 %v1535, %v1531
    %v1732 = vpack.c.b16 %v1536, %v1532
    %vm1929 = vcmask 130048
    %v1931 = vsel %vm1929, %v747, 0
    %v1934 = vsel %vm1929, %v754, 0
    %v1937 = vsel %vm1929, %v761, 0
    %v1940 = vsel %vm1929, %v768, 0
    %v1943 = vsel %vm1929, %v775, 0
    %v1946 = vsel %vm1929, %v782, 0
    %v1949 = vsel %vm1929, %v789, 0
    %v1952 = vsel %vm1929, %v796, 0
    %v1955 = vsel %vm1929, %v803, 0
    %v1958 = vsel %vm1929, %v810, 0
    %v1961 = vsel %vm1929, %v817, 0
    %v1964 = vsel %vm1929, %v824, 0
    %v1967 = vsel %vm1929, %v831, 0
    %v1970 = vsel %vm1929, %v838, 0
    %v1973 = vsel %vm1929, %v845, 0
    %v1976 = vsel %vm1929, %v852, 0
    %1978 = vmatprep.subr.bf16.mxu0 %v1538
    %1979 = vmatpush1.bf16.msra.mxu0 %v1537
    %1980 = vmatprep.subr.bf16.mxu0 %v1542
    %1981 = vmatpush1.bf16.msra.mxu0 %v1541
    %1982 = vmatprep.subr.bf16.mxu0 %v1546
    %1983 = vmatpush1.bf16.msra.mxu0 %v1545
    %1984 = vmatprep.subr.bf16.mxu0 %v1550
    %1985 = vmatpush1.bf16.msra.mxu0 %v1549
    %1986 = vmatprep.subr.bf16.mxu0 %v1554
    %1987 = vmatpush1.bf16.msra.mxu0 %v1553
    %1988 = vmatprep.subr.bf16.mxu0 %v1558
    %1989 = vmatpush1.bf16.msra.mxu0 %v1557
    %1990 = vmatprep.subr.bf16.mxu0 %v1562
    %1991 = vmatpush1.bf16.msra.mxu0 %v1561
    %1992 = vmatprep.subr.bf16.mxu0 %v1566
    %1993 = vmatpush1.bf16.msra.mxu0 %v1565
    %1994 = vmatprep.subr.bf16.mxu0 %v1570
    %1995 = vmatpush1.bf16.msra.mxu0 %v1569
    %1996 = vmatprep.subr.bf16.mxu0 %v1574
    %1997 = vmatpush1.bf16.msra.mxu0 %v1573
    %1998 = vmatprep.subr.bf16.mxu0 %v1578
    %1999 = vmatpush1.bf16.msra.mxu0 %v1577
    %2000 = vmatprep.subr.bf16.mxu0 %v1582
    %2001 = vmatpush1.bf16.msra.mxu0 %v1581
    %2002 = vmatprep.subr.bf16.mxu0 %v1586
    %2003 = vmatpush1.bf16.msra.mxu0 %v1585
    %2004 = vmatprep.subr.bf16.mxu0 %v1590
    %2005 = vmatpush1.bf16.msra.mxu0 %v1589
    %2006 = vmatprep.subr.bf16.mxu0 %v1594
    %2007 = vmatpush1.bf16.msra.mxu0 %v1593
    %2008 = vmatprep.subr.bf16.mxu0 %v1598
    %2009 = vmatpush1.bf16.msra.mxu0 %v1597
    %2010 = vmatprep.mubr.bf16.mxu0 %v742
    %2011 = vmatmul.mubr.bf16.gmra.mrb[0].mxu0 %v741
    %v2012 = vpop.f32.mrb[0].mxu0
    %v2013 = vadd.f32 %v372, %v2012
    %v2014 = vpop.f32.mrb[0].mxu0
    %v2015 = vadd.f32 %v376, %v2014
    %v2016 = vpop.f32.mrb[0].mxu0
    %v2017 = vadd.f32 %v372, %v2016
    %v2018 = vpop.f32.mrb[0].mxu0
    %v2019 = vadd.f32 %v376, %v2018
    %2020 = vmatprep.mubr.bf16.mxu0 %v749
    %2021 = vmatmul.mubr.bf16.gmra.mrb[0].mxu0 %v748
    %v2022 = vpop.f32.mrb[0].mxu0
    %v2023 = vadd.f32 %v372, %v2022
    %v2024 = vpop.f32.mrb[0].mxu0
    %v2025 = vadd.f32 %v376, %v2024
    %v2026 = vpop.f32.mrb[0].mxu0
    %v2027 = vadd.f32 %v372, %v2026
    %v2028 = vpop.f32.mrb[0].mxu0
    %v2029 = vadd.f32 %v376, %v2028
    %2030 = vmatprep.mubr.bf16.mxu0 %v756
    %2031 = vmatmul.mubr.bf16.gmra.mrb[0].mxu0 %v755
    %v2032 = vpop.f32.mrb[0].mxu0
    %v2033 = vadd.f32 %v372, %v2032
    %v2034 = vpop.f32.mrb[0].mxu0
    %v2035 = vadd.f32 %v376, %v2034
    %v2036 = vpop.f32.mrb[0].mxu0
    %v2037 = vadd.f32 %v372, %v2036
    %v2038 = vpop.f32.mrb[0].mxu0
    %v2039 = vadd.f32 %v376, %v2038
    %2040 = vmatprep.mubr.bf16.mxu0 %v763
    %2041 = vmatmul.mubr.bf16.gmra.mrb[0].mxu0 %v762
    %v2042 = vpop.f32.mrb[0].mxu0
    %v2043 = vadd.f32 %v372, %v2042
    %v2044 = vpop.f32.mrb[0].mxu0
    %v2045 = vadd.f32 %v376, %v2044
    %v2046 = vpop.f32.mrb[0].mxu0
    %v2047 = vadd.f32 %v372, %v2046
    %v2048 = vpop.f32.mrb[0].mxu0
    %v2049 = vadd.f32 %v376, %v2048
    %2050 = vmatprep.mubr.bf16.mxu0 %v770
    %2051 = vmatmul.mubr.bf16.gmra.mrb[0].mxu0 %v769
    %v2052 = vpop.f32.mrb[0].mxu0
    %v2053 = vadd.f32 %v372, %v2052
    %v2054 = vpop.f32.mrb[0].mxu0
    %v2055 = vadd.f32 %v376, %v2054
    %v2056 = vpop.f32.mrb[0].mxu0
    %v2057 = vadd.f32 %v372, %v2056
    %v2058 = vpop.f32.mrb[0].mxu0
    %v2059 = vadd.f32 %v376, %v2058
    %2060 = vmatprep.mubr.bf16.mxu0 %v777
    %2061 = vmatmul.mubr.bf16.gmra.mrb[0].mxu0 %v776
    %v2062 = vpop.f32.mrb[0].mxu0
    %v2063 = vadd.f32 %v372, %v2062
    %v2064 = vpop.f32.mrb[0].mxu0
    %v2065 = vadd.f32 %v376, %v2064
    %v2066 = vpop.f32.mrb[0].mxu0
    %v2067 = vadd.f32 %v372, %v2066
    %v2068 = vpop.f32.mrb[0].mxu0
    %v2069 = vadd.f32 %v376, %v2068
    %2070 = vmatprep.mubr.bf16.mxu0 %v784
    %2071 = vmatmul.mubr.bf16.gmra.mrb[0].mxu0 %v783
    %v2072 = vpop.f32.mrb[0].mxu0
    %v2073 = vadd.f32 %v372, %v2072
    %v2074 = vpop.f32.mrb[0].mxu0
    %v2075 = vadd.f32 %v376, %v2074
    %v2076 = vpop.f32.mrb[0].mxu0
    %v2077 = vadd.f32 %v372, %v2076
    %v2078 = vpop.f32.mrb[0].mxu0
    %v2079 = vadd.f32 %v376, %v2078
    %2080 = vmatprep.mubr.bf16.mxu0 %v791
    %2081 = vmatmul.mubr.bf16.gmra.mrb[0].mxu0 %v790
    %v2082 = vpop.f32.mrb[0].mxu0
    %v2083 = vadd.f32 %v372, %v2082
    %v2084 = vpop.f32.mrb[0].mxu0
    %v2085 = vadd.f32 %v376, %v2084
    %v2086 = vpop.f32.mrb[0].mxu0
    %v2087 = vadd.f32 %v372, %v2086
    %v2088 = vpop.f32.mrb[0].mxu0
    %v2089 = vadd.f32 %v376, %v2088
    %2090 = vmatprep.mubr.bf16.mxu0 %v798
    %2091 = vmatmul.mubr.bf16.gmra.mrb[0].mxu0 %v797
    %v2092 = vpop.f32.mrb[0].mxu0
    %v2093 = vadd.f32 %v372, %v2092
    %v2094 = vpop.f32.mrb[0].mxu0
    %v2095 = vadd.f32 %v376, %v2094
    %v2096 = vpop.f32.mrb[0].mxu0
    %v2097 = vadd.f32 %v372, %v2096
    %v2098 = vpop.f32.mrb[0].mxu0
    %v2099 = vadd.f32 %v376, %v2098
    %2100 = vmatprep.mubr.bf16.mxu0 %v805
    %2101 = vmatmul.mubr.bf16.gmra.mrb[0].mxu0 %v804
    %v2102 = vpop.f32.mrb[0].mxu0
    %v2103 = vadd.f32 %v372, %v2102
    %v2104 = vpop.f32.mrb[0].mxu0
    %v2105 = vadd.f32 %v376, %v2104
    %v2106 = vpop.f32.mrb[0].mxu0
    %v2107 = vadd.f32 %v372, %v2106
    %v2108 = vpop.f32.mrb[0].mxu0
    %v2109 = vadd.f32 %v376, %v2108
    %2110 = vmatprep.mubr.bf16.mxu0 %v812
    %2111 = vmatmul.mubr.bf16.gmra.mrb[0].mxu0 %v811
    %v2112 = vpop.f32.mrb[0].mxu0
    %v2113 = vadd.f32 %v372, %v2112
    %v2114 = vpop.f32.mrb[0].mxu0
    %v2115 = vadd.f32 %v376, %v2114
    %v2116 = vpop.f32.mrb[0].mxu0
    %v2117 = vadd.f32 %v372, %v2116
    %v2118 = vpop.f32.mrb[0].mxu0
    %v2119 = vadd.f32 %v376, %v2118
    %2120 = vmatprep.mubr.bf16.mxu0 %v819
    %2121 = vmatmul.mubr.bf16.gmra.mrb[0].mxu0 %v818
    %v2122 = vpop.f32.mrb[0].mxu0
    %v2123 = vadd.f32 %v372, %v2122
    %v2124 = vpop.f32.mrb[0].mxu0
    %v2125 = vadd.f32 %v376, %v2124
    %v2126 = vpop.f32.mrb[0].mxu0
    %v2127 = vadd.f32 %v372, %v2126
    %v2128 = vpop.f32.mrb[0].mxu0
    %v2129 = vadd.f32 %v376, %v2128
    %2130 = vmatprep.mubr.bf16.mxu0 %v826
    %2131 = vmatmul.mubr.bf16.gmra.mrb[0].mxu0 %v825
    %v2132 = vpop.f32.mrb[0].mxu0
    %v2133 = vadd.f32 %v372, %v2132
    %v2134 = vpop.f32.mrb[0].mxu0
    %v2135 = vadd.f32 %v376, %v2134
    %v2136 = vpop.f32.mrb[0].mxu0
    %v2137 = vadd.f32 %v372, %v2136
    %v2138 = vpop.f32.mrb[0].mxu0
    %v2139 = vadd.f32 %v376, %v2138
    %2140 = vmatprep.mubr.bf16.mxu0 %v833
    %2141 = vmatmul.mubr.bf16.gmra.mrb[0].mxu0 %v832
    %v2142 = vpop.f32.mrb[0].mxu0
    %v2143 = vadd.f32 %v372, %v2142
    %v2144 = vpop.f32.mrb[0].mxu0
    %v2145 = vadd.f32 %v376, %v2144
    %v2146 = vpop.f32.mrb[0].mxu0
    %v2147 = vadd.f32 %v372, %v2146
    %v2148 = vpop.f32.mrb[0].mxu0
    %v2149 = vadd.f32 %v376, %v2148
    %2150 = vmatprep.mubr.bf16.mxu0 %v840
    %2151 = vmatmul.mubr.bf16.gmra.mrb[0].mxu0 %v839
    %v2152 = vpop.f32.mrb[0].mxu0
    %v2153 = vadd.f32 %v372, %v2152
    %v2154 = vpop.f32.mrb[0].mxu0
    %v2155 = vadd.f32 %v376, %v2154
    %v2156 = vpop.f32.mrb[0].mxu0
    %v2157 = vadd.f32 %v372, %v2156
    %v2158 = vpop.f32.mrb[0].mxu0
    %v2159 = vadd.f32 %v376, %v2158
    %2160 = vmatprep.mubr.bf16.mxu0 %v847
    %2161 = vmatmul.mubr.bf16.gmra.mrb[0].mxu0 %v846
    %v2162 = vpop.f32.mrb[0].mxu0
    %v2163 = vadd.f32 %v372, %v2162
    %v2164 = vpop.f32.mrb[0].mxu0
    %v2165 = vadd.f32 %v376, %v2164
    %v2166 = vpop.f32.mrb[0].mxu0
    %v2167 = vadd.f32 %v372, %v2166
    %v2168 = vpop.f32.mrb[0].mxu0
    %v2169 = vadd.f32 %v376, %v2168
    %2170 = vdwg.mxu0
    %2171 = vmatprep.subr.bf16.mxu0 %v1602
    %2172 = vmatpush1.bf16.msra.mxu0 %v1601
    %2173 = vmatprep.subr.bf16.mxu0 %v1606
    %2174 = vmatpush1.bf16.msra.mxu0 %v1605
    %2175 = vmatprep.subr.bf16.mxu0 %v1610
    %2176 = vmatpush1.bf16.msra.mxu0 %v1609
    %2177 = vmatprep.subr.bf16.mxu0 %v1614
    %2178 = vmatpush1.bf16.msra.mxu0 %v1613
    %2179 = vmatprep.subr.bf16.mxu0 %v1618
    %2180 = vmatpush1.bf16.msra.mxu0 %v1617
    %2181 = vmatprep.subr.bf16.mxu0 %v1622
    %2182 = vmatpush1.bf16.msra.mxu0 %v1621
    %2183 = vmatprep.subr.bf16.mxu0 %v1626
    %2184 = vmatpush1.bf16.msra.mxu0 %v1625
    %2185 = vmatprep.subr.bf16.mxu0 %v1630
    %2186 = vmatpush1.bf16.msra.mxu0 %v1629
    %2187 = vmatprep.subr.bf16.mxu0 %v1634
    %2188 = vmatpush1.bf16.msra.mxu0 %v1633
    %2189 = vmatprep.subr.bf16.mxu0 %v1638
    %2190 = vmatpush1.bf16.msra.mxu0 %v1637
    %2191 = vmatprep.subr.bf16.mxu0 %v1642
    %2192 = vmatpush1.bf16.msra.mxu0 %v1641
    %2193 = vmatprep.subr.bf16.mxu0 %v1646
    %2194 = vmatpush1.bf16.msra.mxu0 %v1645
    %2195 = vmatprep.subr.bf16.mxu0 %v1650
    %2196 = vmatpush1.bf16.msra.mxu0 %v1649
    %2197 = vmatprep.subr.bf16.mxu0 %v1654
    %2198 = vmatpush1.bf16.msra.mxu0 %v1653
    %2199 = vmatprep.subr.bf16.mxu0 %v1658
    %2200 = vmatpush1.bf16.msra.mxu0 %v1657
    %2201 = vmatprep.subr.bf16.mxu0 %v1662
    %2202 = vmatpush1.bf16.msra.mxu0 %v1661
    %2203 = vmatprep.mubr.bf16.mxu0 %v744
    %2204 = vmatmul.mubr.bf16.gmra.mrb[0].mxu0 %v743
    %v2205 = vpop.f32.mrb[0].mxu0
    %v2206 = vadd.f32 %v2013, %v2205
    %v2207 = vpop.f32.mrb[0].mxu0
    %v2208 = vadd.f32 %v2015, %v2207
    %v2209 = vpop.f32.mrb[0].mxu0
    %v2210 = vadd.f32 %v2017, %v2209
    %v2211 = vpop.f32.mrb[0].mxu0
    %v2212 = vadd.f32 %v2019, %v2211
    %2213 = vmatprep.mubr.bf16.mxu0 %v751
    %2214 = vmatmul.mubr.bf16.gmra.mrb[0].mxu0 %v750
    %v2215 = vpop.f32.mrb[0].mxu0
    %v2216 = vadd.f32 %v2023, %v2215
    %v2217 = vpop.f32.mrb[0].mxu0
    %v2218 = vadd.f32 %v2025, %v2217
    %v2219 = vpop.f32.mrb[0].mxu0
    %v2220 = vadd.f32 %v2027, %v2219
    %v2221 = vpop.f32.mrb[0].mxu0
    %v2222 = vadd.f32 %v2029, %v2221
    %2223 = vmatprep.mubr.bf16.mxu0 %v758
    %2224 = vmatmul.mubr.bf16.gmra.mrb[0].mxu0 %v757
    %v2225 = vpop.f32.mrb[0].mxu0
    %v2226 = vadd.f32 %v2033, %v2225
    %v2227 = vpop.f32.mrb[0].mxu0
    %v2228 = vadd.f32 %v2035, %v2227
    %v2229 = vpop.f32.mrb[0].mxu0
    %v2230 = vadd.f32 %v2037, %v2229
    %v2231 = vpop.f32.mrb[0].mxu0
    %v2232 = vadd.f32 %v2039, %v2231
    %2233 = vmatprep.mubr.bf16.mxu0 %v765
    %2234 = vmatmul.mubr.bf16.gmra.mrb[0].mxu0 %v764
    %v2235 = vpop.f32.mrb[0].mxu0
    %v2236 = vadd.f32 %v2043, %v2235
    %v2237 = vpop.f32.mrb[0].mxu0
    %v2238 = vadd.f32 %v2045, %v2237
    %v2239 = vpop.f32.mrb[0].mxu0
    %v2240 = vadd.f32 %v2047, %v2239
    %v2241 = vpop.f32.mrb[0].mxu0
    %v2242 = vadd.f32 %v2049, %v2241
    %2243 = vmatprep.mubr.bf16.mxu0 %v772
    %2244 = vmatmul.mubr.bf16.gmra.mrb[0].mxu0 %v771
    %v2245 = vpop.f32.mrb[0].mxu0
    %v2246 = vadd.f32 %v2053, %v2245
    %v2247 = vpop.f32.mrb[0].mxu0
    %v2248 = vadd.f32 %v2055, %v2247
    %v2249 = vpop.f32.mrb[0].mxu0
    %v2250 = vadd.f32 %v2057, %v2249
    %v2251 = vpop.f32.mrb[0].mxu0
    %v2252 = vadd.f32 %v2059, %v2251
    %2253 = vmatprep.mubr.bf16.mxu0 %v779
    %2254 = vmatmul.mubr.bf16.gmra.mrb[0].mxu0 %v778
    %v2255 = vpop.f32.mrb[0].mxu0
    %v2256 = vadd.f32 %v2063, %v2255
    %v2257 = vpop.f32.mrb[0].mxu0
    %v2258 = vadd.f32 %v2065, %v2257
    %v2259 = vpop.f32.mrb[0].mxu0
    %v2260 = vadd.f32 %v2067, %v2259
    %v2261 = vpop.f32.mrb[0].mxu0
    %v2262 = vadd.f32 %v2069, %v2261
    %2263 = vmatprep.mubr.bf16.mxu0 %v786
    %2264 = vmatmul.mubr.bf16.gmra.mrb[0].mxu0 %v785
    %v2265 = vpop.f32.mrb[0].mxu0
    %v2266 = vadd.f32 %v2073, %v2265
    %v2267 = vpop.f32.mrb[0].mxu0
    %v2268 = vadd.f32 %v2075, %v2267
    %v2269 = vpop.f32.mrb[0].mxu0
    %v2270 = vadd.f32 %v2077, %v2269
    %v2271 = vpop.f32.mrb[0].mxu0
    %v2272 = vadd.f32 %v2079, %v2271
    %2273 = vmatprep.mubr.bf16.mxu0 %v793
    %2274 = vmatmul.mubr.bf16.gmra.mrb[0].mxu0 %v792
    %v2275 = vpop.f32.mrb[0].mxu0
    %v2276 = vadd.f32 %v2083, %v2275
    %v2277 = vpop.f32.mrb[0].mxu0
    %v2278 = vadd.f32 %v2085, %v2277
    %v2279 = vpop.f32.mrb[0].mxu0
    %v2280 = vadd.f32 %v2087, %v2279
    %v2281 = vpop.f32.mrb[0].mxu0
    %v2282 = vadd.f32 %v2089, %v2281
    %2283 = vmatprep.mubr.bf16.mxu0 %v800
    %2284 = vmatmul.mubr.bf16.gmra.mrb[0].mxu0 %v799
    %v2285 = vpop.f32.mrb[0].mxu0
    %v2286 = vadd.f32 %v2093, %v2285
    %v2287 = vpop.f32.mrb[0].mxu0
    %v2288 = vadd.f32 %v2095, %v2287
    %v2289 = vpop.f32.mrb[0].mxu0
    %v2290 = vadd.f32 %v2097, %v2289
    %v2291 = vpop.f32.mrb[0].mxu0
    %v2292 = vadd.f32 %v2099, %v2291
    %2293 = vmatprep.mubr.bf16.mxu0 %v807
    %2294 = vmatmul.mubr.bf16.gmra.mrb[0].mxu0 %v806
    %v2295 = vpop.f32.mrb[0].mxu0
    %v2296 = vadd.f32 %v2103, %v2295
    %v2297 = vpop.f32.mrb[0].mxu0
    %v2298 = vadd.f32 %v2105, %v2297
    %v2299 = vpop.f32.mrb[0].mxu0
    %v2300 = vadd.f32 %v2107, %v2299
    %v2301 = vpop.f32.mrb[0].mxu0
    %v2302 = vadd.f32 %v2109, %v2301
    %2303 = vmatprep.mubr.bf16.mxu0 %v814
    %2304 = vmatmul.mubr.bf16.gmra.mrb[0].mxu0 %v813
    %v2305 = vpop.f32.mrb[0].mxu0
    %v2306 = vadd.f32 %v2113, %v2305
    %v2307 = vpop.f32.mrb[0].mxu0
    %v2308 = vadd.f32 %v2115, %v2307
    %v2309 = vpop.f32.mrb[0].mxu0
    %v2310 = vadd.f32 %v2117, %v2309
    %v2311 = vpop.f32.mrb[0].mxu0
    %v2312 = vadd.f32 %v2119, %v2311
    %2313 = vmatprep.mubr.bf16.mxu0 %v821
    %2314 = vmatmul.mubr.bf16.gmra.mrb[0].mxu0 %v820
    %v2315 = vpop.f32.mrb[0].mxu0
    %v2316 = vadd.f32 %v2123, %v2315
    %v2317 = vpop.f32.mrb[0].mxu0
    %v2318 = vadd.f32 %v2125, %v2317
    %v2319 = vpop.f32.mrb[0].mxu0
    %v2320 = vadd.f32 %v2127, %v2319
    %v2321 = vpop.f32.mrb[0].mxu0
    %v2322 = vadd.f32 %v2129, %v2321
    %2323 = vmatprep.mubr.bf16.mxu0 %v828
    %2324 = vmatmul.mubr.bf16.gmra.mrb[0].mxu0 %v827
    %v2325 = vpop.f32.mrb[0].mxu0
    %v2326 = vadd.f32 %v2133, %v2325
    %v2327 = vpop.f32.mrb[0].mxu0
    %v2328 = vadd.f32 %v2135, %v2327
    %v2329 = vpop.f32.mrb[0].mxu0
    %v2330 = vadd.f32 %v2137, %v2329
    %v2331 = vpop.f32.mrb[0].mxu0
    %v2332 = vadd.f32 %v2139, %v2331
    %2333 = vmatprep.mubr.bf16.mxu0 %v835
    %2334 = vmatmul.mubr.bf16.gmra.mrb[0].mxu0 %v834
    %v2335 = vpop.f32.mrb[0].mxu0
    %v2336 = vadd.f32 %v2143, %v2335
    %v2337 = vpop.f32.mrb[0].mxu0
    %v2338 = vadd.f32 %v2145, %v2337
    %v2339 = vpop.f32.mrb[0].mxu0
    %v2340 = vadd.f32 %v2147, %v2339
    %v2341 = vpop.f32.mrb[0].mxu0
    %v2342 = vadd.f32 %v2149, %v2341
    %2343 = vmatprep.mubr.bf16.mxu0 %v842
    %2344 = vmatmul.mubr.bf16.gmra.mrb[0].mxu0 %v841
    %v2345 = vpop.f32.mrb[0].mxu0
    %v2346 = vadd.f32 %v2153, %v2345
    %v2347 = vpop.f32.mrb[0].mxu0
    %v2348 = vadd.f32 %v2155, %v2347
    %v2349 = vpop.f32.mrb[0].mxu0
    %v2350 = vadd.f32 %v2157, %v2349
    %v2351 = vpop.f32.mrb[0].mxu0
    %v2352 = vadd.f32 %v2159, %v2351
    %2353 = vmatprep.mubr.bf16.mxu0 %v849
    %2354 = vmatmul.mubr.bf16.gmra.mrb[0].mxu0 %v848
    %v2355 = vpop.f32.mrb[0].mxu0
    %v2356 = vadd.f32 %v2163, %v2355
    %v2357 = vpop.f32.mrb[0].mxu0
    %v2358 = vadd.f32 %v2165, %v2357
    %v2359 = vpop.f32.mrb[0].mxu0
    %v2360 = vadd.f32 %v2167, %v2359
    %v2361 = vpop.f32.mrb[0].mxu0
    %v2362 = vadd.f32 %v2169, %v2361
    %2363 = vdwg.mxu0
    %2364 = vmatprep.subr.bf16.mxu0 %v1666
    %2365 = vmatpush1.bf16.msra.mxu0 %v1665
    %2366 = vmatprep.subr.bf16.mxu0 %v1670
    %2367 = vmatpush1.bf16.msra.mxu0 %v1669
    %2368 = vmatprep.subr.bf16.mxu0 %v1674
    %2369 = vmatpush1.bf16.msra.mxu0 %v1673
    %2370 = vmatprep.subr.bf16.mxu0 %v1678
    %2371 = vmatpush1.bf16.msra.mxu0 %v1677
    %2372 = vmatprep.subr.bf16.mxu0 %v1682
    %2373 = vmatpush1.bf16.msra.mxu0 %v1681
    %2374 = vmatprep.subr.bf16.mxu0 %v1686
    %2375 = vmatpush1.bf16.msra.mxu0 %v1685
    %2376 = vmatprep.subr.bf16.mxu0 %v1690
    %2377 = vmatpush1.bf16.msra.mxu0 %v1689
    %2378 = vmatprep.subr.bf16.mxu0 %v1694
    %2379 = vmatpush1.bf16.msra.mxu0 %v1693
    %2380 = vmatprep.subr.bf16.mxu0 %v1698
    %2381 = vmatpush1.bf16.msra.mxu0 %v1697
    %2382 = vmatprep.subr.bf16.mxu0 %v1702
    %2383 = vmatpush1.bf16.msra.mxu0 %v1701
    %2384 = vmatprep.subr.bf16.mxu0 %v1706
    %2385 = vmatpush1.bf16.msra.mxu0 %v1705
    %2386 = vmatprep.subr.bf16.mxu0 %v1710
    %2387 = vmatpush1.bf16.msra.mxu0 %v1709
    %2388 = vmatprep.subr.bf16.mxu0 %v1714
    %2389 = vmatpush1.bf16.msra.mxu0 %v1713
    %2390 = vmatprep.subr.bf16.mxu0 %v1718
    %2391 = vmatpush1.bf16.msra.mxu0 %v1717
    %2392 = vmatprep.subr.bf16.mxu0 %v1722
    %2393 = vmatpush1.bf16.msra.mxu0 %v1721
    %2394 = vmatprep.subr.bf16.mxu0 %v1726
    %2395 = vmatpush1.bf16.msra.mxu0 %v1725
    %2396 = vmatprep.mubr.bf16.mxu0 %v746
    %2397 = vmatmul.mubr.bf16.gmra.mrb[0].mxu0 %v745
    %v2398 = vpop.f32.mrb[0].mxu0
    %v2399 = vadd.f32 %v2206, %v2398
    %v2400 = vpop.f32.mrb[0].mxu0
    %v2401 = vadd.f32 %v2208, %v2400
    %v2402 = vpop.f32.mrb[0].mxu0
    %v2403 = vadd.f32 %v2210, %v2402
    %v2404 = vpop.f32.mrb[0].mxu0
    %v2405 = vadd.f32 %v2212, %v2404
    %2406 = vmatprep.mubr.bf16.mxu0 %v753
    %2407 = vmatmul.mubr.bf16.gmra.mrb[0].mxu0 %v752
    %v2408 = vpop.f32.mrb[0].mxu0
    %v2409 = vadd.f32 %v2216, %v2408
    %v2410 = vpop.f32.mrb[0].mxu0
    %v2411 = vadd.f32 %v2218, %v2410
    %v2412 = vpop.f32.mrb[0].mxu0
    %v2413 = vadd.f32 %v2220, %v2412
    %v2414 = vpop.f32.mrb[0].mxu0
    %v2415 = vadd.f32 %v2222, %v2414
    %2416 = vmatprep.mubr.bf16.mxu0 %v760
    %2417 = vmatmul.mubr.bf16.gmra.mrb[0].mxu0 %v759
    %v2418 = vpop.f32.mrb[0].mxu0
    %v2419 = vadd.f32 %v2226, %v2418
    %v2420 = vpop.f32.mrb[0].mxu0
    %v2421 = vadd.f32 %v2228, %v2420
    %v2422 = vpop.f32.mrb[0].mxu0
    %v2423 = vadd.f32 %v2230, %v2422
    %v2424 = vpop.f32.mrb[0].mxu0
    %v2425 = vadd.f32 %v2232, %v2424
    %2426 = vmatprep.mubr.bf16.mxu0 %v767
    %2427 = vmatmul.mubr.bf16.gmra.mrb[0].mxu0 %v766
    %v2428 = vpop.f32.mrb[0].mxu0
    %v2429 = vadd.f32 %v2236, %v2428
    %v2430 = vpop.f32.mrb[0].mxu0
    %v2431 = vadd.f32 %v2238, %v2430
    %v2432 = vpop.f32.mrb[0].mxu0
    %v2433 = vadd.f32 %v2240, %v2432
    %v2434 = vpop.f32.mrb[0].mxu0
    %v2435 = vadd.f32 %v2242, %v2434
    %2436 = vmatprep.mubr.bf16.mxu0 %v774
    %2437 = vmatmul.mubr.bf16.gmra.mrb[0].mxu0 %v773
    %v2438 = vpop.f32.mrb[0].mxu0
    %v2439 = vadd.f32 %v2246, %v2438
    %v2440 = vpop.f32.mrb[0].mxu0
    %v2441 = vadd.f32 %v2248, %v2440
    %v2442 = vpop.f32.mrb[0].mxu0
    %v2443 = vadd.f32 %v2250, %v2442
    %v2444 = vpop.f32.mrb[0].mxu0
    %v2445 = vadd.f32 %v2252, %v2444
    %2446 = vmatprep.mubr.bf16.mxu0 %v781
    %2447 = vmatmul.mubr.bf16.gmra.mrb[0].mxu0 %v780
    %v2448 = vpop.f32.mrb[0].mxu0
    %v2449 = vadd.f32 %v2256, %v2448
    %v2450 = vpop.f32.mrb[0].mxu0
    %v2451 = vadd.f32 %v2258, %v2450
    %v2452 = vpop.f32.mrb[0].mxu0
    %v2453 = vadd.f32 %v2260, %v2452
    %v2454 = vpop.f32.mrb[0].mxu0
    %v2455 = vadd.f32 %v2262, %v2454
    %2456 = vmatprep.mubr.bf16.mxu0 %v788
    %2457 = vmatmul.mubr.bf16.gmra.mrb[0].mxu0 %v787
    %v2458 = vpop.f32.mrb[0].mxu0
    %v2459 = vadd.f32 %v2266, %v2458
    %v2460 = vpop.f32.mrb[0].mxu0
    %v2461 = vadd.f32 %v2268, %v2460
    %v2462 = vpop.f32.mrb[0].mxu0
    %v2463 = vadd.f32 %v2270, %v2462
    %v2464 = vpop.f32.mrb[0].mxu0
    %v2465 = vadd.f32 %v2272, %v2464
    %2466 = vmatprep.mubr.bf16.mxu0 %v795
    %2467 = vmatmul.mubr.bf16.gmra.mrb[0].mxu0 %v794
    %v2468 = vpop.f32.mrb[0].mxu0
    %v2469 = vadd.f32 %v2276, %v2468
    %v2470 = vpop.f32.mrb[0].mxu0
    %v2471 = vadd.f32 %v2278, %v2470
    %v2472 = vpop.f32.mrb[0].mxu0
    %v2473 = vadd.f32 %v2280, %v2472
    %v2474 = vpop.f32.mrb[0].mxu0
    %v2475 = vadd.f32 %v2282, %v2474
    %2476 = vmatprep.mubr.bf16.mxu0 %v802
    %2477 = vmatmul.mubr.bf16.gmra.mrb[0].mxu0 %v801
    %v2478 = vpop.f32.mrb[0].mxu0
    %v2479 = vadd.f32 %v2286, %v2478
    %v2480 = vpop.f32.mrb[0].mxu0
    %v2481 = vadd.f32 %v2288, %v2480
    %v2482 = vpop.f32.mrb[0].mxu0
    %v2483 = vadd.f32 %v2290, %v2482
    %v2484 = vpop.f32.mrb[0].mxu0
    %v2485 = vadd.f32 %v2292, %v2484
    %2486 = vmatprep.mubr.bf16.mxu0 %v809
    %2487 = vmatmul.mubr.bf16.gmra.mrb[0].mxu0 %v808
    %v2488 = vpop.f32.mrb[0].mxu0
    %v2489 = vadd.f32 %v2296, %v2488
    %v2490 = vpop.f32.mrb[0].mxu0
    %v2491 = vadd.f32 %v2298, %v2490
    %v2492 = vpop.f32.mrb[0].mxu0
    %v2493 = vadd.f32 %v2300, %v2492
    %v2494 = vpop.f32.mrb[0].mxu0
    %v2495 = vadd.f32 %v2302, %v2494
    %2496 = vmatprep.mubr.bf16.mxu0 %v816
    %2497 = vmatmul.mubr.bf16.gmra.mrb[0].mxu0 %v815
    %v2498 = vpop.f32.mrb[0].mxu0
    %v2499 = vadd.f32 %v2306, %v2498
    %v2500 = vpop.f32.mrb[0].mxu0
    %v2501 = vadd.f32 %v2308, %v2500
    %v2502 = vpop.f32.mrb[0].mxu0
    %v2503 = vadd.f32 %v2310, %v2502
    %v2504 = vpop.f32.mrb[0].mxu0
    %v2505 = vadd.f32 %v2312, %v2504
    %2506 = vmatprep.mubr.bf16.mxu0 %v823
    %2507 = vmatmul.mubr.bf16.gmra.mrb[0].mxu0 %v822
    %v2508 = vpop.f32.mrb[0].mxu0
    %v2509 = vadd.f32 %v2316, %v2508
    %v2510 = vpop.f32.mrb[0].mxu0
    %v2511 = vadd.f32 %v2318, %v2510
    %v2512 = vpop.f32.mrb[0].mxu0
    %v2513 = vadd.f32 %v2320, %v2512
    %v2514 = vpop.f32.mrb[0].mxu0
    %v2515 = vadd.f32 %v2322, %v2514
    %2516 = vmatprep.mubr.bf16.mxu0 %v830
    %2517 = vmatmul.mubr.bf16.gmra.mrb[0].mxu0 %v829
    %v2518 = vpop.f32.mrb[0].mxu0
    %v2519 = vadd.f32 %v2326, %v2518
    %v2520 = vpop.f32.mrb[0].mxu0
    %v2521 = vadd.f32 %v2328, %v2520
    %v2522 = vpop.f32.mrb[0].mxu0
    %v2523 = vadd.f32 %v2330, %v2522
    %v2524 = vpop.f32.mrb[0].mxu0
    %v2525 = vadd.f32 %v2332, %v2524
    %2526 = vmatprep.mubr.bf16.mxu0 %v837
    %2527 = vmatmul.mubr.bf16.gmra.mrb[0].mxu0 %v836
    %v2528 = vpop.f32.mrb[0].mxu0
    %v2529 = vadd.f32 %v2336, %v2528
    %v2530 = vpop.f32.mrb[0].mxu0
    %v2531 = vadd.f32 %v2338, %v2530
    %v2532 = vpop.f32.mrb[0].mxu0
    %v2533 = vadd.f32 %v2340, %v2532
    %v2534 = vpop.f32.mrb[0].mxu0
    %v2535 = vadd.f32 %v2342, %v2534
    %2536 = vmatprep.mubr.bf16.mxu0 %v844
    %2537 = vmatmul.mubr.bf16.gmra.mrb[0].mxu0 %v843
    %v2538 = vpop.f32.mrb[0].mxu0
    %v2539 = vadd.f32 %v2346, %v2538
    %v2540 = vpop.f32.mrb[0].mxu0
    %v2541 = vadd.f32 %v2348, %v2540
    %v2542 = vpop.f32.mrb[0].mxu0
    %v2543 = vadd.f32 %v2350, %v2542
    %v2544 = vpop.f32.mrb[0].mxu0
    %v2545 = vadd.f32 %v2352, %v2544
    %2546 = vmatprep.mubr.bf16.mxu0 %v851
    %2547 = vmatmul.mubr.bf16.gmra.mrb[0].mxu0 %v850
    %v2548 = vpop.f32.mrb[0].mxu0
    %v2549 = vadd.f32 %v2356, %v2548
    %v2550 = vpop.f32.mrb[0].mxu0
    %v2551 = vadd.f32 %v2358, %v2550
    %v2552 = vpop.f32.mrb[0].mxu0
    %v2553 = vadd.f32 %v2360, %v2552
    %v2554 = vpop.f32.mrb[0].mxu0
    %v2555 = vadd.f32 %v2362, %v2554
    %2556 = vdwg.mxu0
    %2557 = vmatprep.subr.bf16.mxu0 %v1730
    %2558 = vmatpush1.bf16.msra.mxu0 %v1729
    %2559 = vmatprep.subr.bf16.mxu0 0
    %2560 = vmatpush1.bf16.msra.mxu0 0
    %2561 = vmatprep.subr.bf16.mxu0 0
    %2562 = vmatpush1.bf16.msra.mxu0 0
    %2563 = vmatprep.subr.bf16.mxu0 0
    %2564 = vmatpush1.bf16.msra.mxu0 0
    %2565 = vmatprep.subr.bf16.mxu0 0
    %2566 = vmatpush1.bf16.msra.mxu0 0
    %2567 = vmatprep.subr.bf16.mxu0 0
    %2568 = vmatpush1.bf16.msra.mxu0 0
    %2569 = vmatprep.subr.bf16.mxu0 0
    %2570 = vmatpush1.bf16.msra.mxu0 0
    %2571 = vmatprep.subr.bf16.mxu0 0
    %2572 = vmatpush1.bf16.msra.mxu0 0
    %2573 = vmatprep.subr.bf16.mxu0 0
    %2574 = vmatpush1.bf16.msra.mxu0 0
    %2575 = vmatprep.subr.bf16.mxu0 0
    %2576 = vmatpush1.bf16.msra.mxu0 0
    %2577 = vmatprep.subr.bf16.mxu0 0
    %2578 = vmatpush1.bf16.msra.mxu0 0
    %2579 = vmatprep.subr.bf16.mxu0 0
    %2580 = vmatpush1.bf16.msra.mxu0 0
    %2581 = vmatprep.subr.bf16.mxu0 0
    %2582 = vmatpush1.bf16.msra.mxu0 0
    %2583 = vmatprep.subr.bf16.mxu0 0
    %2584 = vmatpush1.bf16.msra.mxu0 0
    %2585 = vmatprep.subr.bf16.mxu0 0
    %2586 = vmatpush1.bf16.msra.mxu0 0
    %2587 = vmatprep.subr.bf16.mxu0 0
    %2588 = vmatpush1.bf16.msra.mxu0 0
    %2589 = vmatprep.mubr.bf16.mxu0 0
    %2590 = vmatmul.mubr.bf16.gmra.mrb[0].mxu0 %v1931
    %v2591 = vpop.f32.mrb[0].mxu0
    %v2592 = vadd.f32 %v2399, %v2591
    %v2593 = vpop.f32.mrb[0].mxu0
    %v2594 = vadd.f32 %v2401, %v2593
    %v2595 = vpop.f32.mrb[0].mxu0
    %v2596 = vadd.f32 %v2403, %v2595
    %v2597 = vpop.f32.mrb[0].mxu0
    %v2598 = vadd.f32 %v2405, %v2597
    %2599 = vmatprep.mubr.bf16.mxu0 0
    %2600 = vmatmul.mubr.bf16.gmra.mrb[0].mxu0 %v1934
    %v2601 = vpop.f32.mrb[0].mxu0
    %v2602 = vadd.f32 %v2409, %v2601
    %v2603 = vpop.f32.mrb[0].mxu0
    %v2604 = vadd.f32 %v2411, %v2603
    %v2605 = vpop.f32.mrb[0].mxu0
    %v2606 = vadd.f32 %v2413, %v2605
    %v2607 = vpop.f32.mrb[0].mxu0
    %v2608 = vadd.f32 %v2415, %v2607
    %2609 = vmatprep.mubr.bf16.mxu0 0
    %2610 = vmatmul.mubr.bf16.gmra.mrb[0].mxu0 %v1937
    %v2611 = vpop.f32.mrb[0].mxu0
    %v2612 = vadd.f32 %v2419, %v2611
    %v2613 = vpop.f32.mrb[0].mxu0
    %v2614 = vadd.f32 %v2421, %v2613
    %v2615 = vpop.f32.mrb[0].mxu0
    %v2616 = vadd.f32 %v2423, %v2615
    %v2617 = vpop.f32.mrb[0].mxu0
    %v2618 = vadd.f32 %v2425, %v2617
    %2619 = vmatprep.mubr.bf16.mxu0 0
    %2620 = vmatmul.mubr.bf16.gmra.mrb[0].mxu0 %v1940
    %v2621 = vpop.f32.mrb[0].mxu0
    %v2622 = vadd.f32 %v2429, %v2621
    %v2623 = vpop.f32.mrb[0].mxu0
    %v2624 = vadd.f32 %v2431, %v2623
    %v2625 = vpop.f32.mrb[0].mxu0
    %v2626 = vadd.f32 %v2433, %v2625
    %v2627 = vpop.f32.mrb[0].mxu0
    %v2628 = vadd.f32 %v2435, %v2627
    %2629 = vmatprep.mubr.bf16.mxu0 0
    %2630 = vmatmul.mubr.bf16.gmra.mrb[0].mxu0 %v1943
    %v2631 = vpop.f32.mrb[0].mxu0
    %v2632 = vadd.f32 %v2439, %v2631
    %v2633 = vpop.f32.mrb[0].mxu0
    %v2634 = vadd.f32 %v2441, %v2633
    %v2635 = vpop.f32.mrb[0].mxu0
    %v2636 = vadd.f32 %v2443, %v2635
    %v2637 = vpop.f32.mrb[0].mxu0
    %v2638 = vadd.f32 %v2445, %v2637
    %2639 = vmatprep.mubr.bf16.mxu0 0
    %2640 = vmatmul.mubr.bf16.gmra.mrb[0].mxu0 %v1946
    %v2641 = vpop.f32.mrb[0].mxu0
    %v2642 = vadd.f32 %v2449, %v2641
    %v2643 = vpop.f32.mrb[0].mxu0
    %v2644 = vadd.f32 %v2451, %v2643
    %v2645 = vpop.f32.mrb[0].mxu0
    %v2646 = vadd.f32 %v2453, %v2645
    %v2647 = vpop.f32.mrb[0].mxu0
    %v2648 = vadd.f32 %v2455, %v2647
    %2649 = vmatprep.mubr.bf16.mxu0 0
    %2650 = vmatmul.mubr.bf16.gmra.mrb[0].mxu0 %v1949
    %v2651 = vpop.f32.mrb[0].mxu0
    %v2652 = vadd.f32 %v2459, %v2651
    %v2653 = vpop.f32.mrb[0].mxu0
    %v2654 = vadd.f32 %v2461, %v2653
    %v2655 = vpop.f32.mrb[0].mxu0
    %v2656 = vadd.f32 %v2463, %v2655
    %v2657 = vpop.f32.mrb[0].mxu0
    %v2658 = vadd.f32 %v2465, %v2657
    %2659 = vmatprep.mubr.bf16.mxu0 0
    %2660 = vmatmul.mubr.bf16.gmra.mrb[0].mxu0 %v1952
    %v2661 = vpop.f32.mrb[0].mxu0
    %v2662 = vadd.f32 %v2469, %v2661
    %v2663 = vpop.f32.mrb[0].mxu0
    %v2664 = vadd.f32 %v2471, %v2663
    %v2665 = vpop.f32.mrb[0].mxu0
    %v2666 = vadd.f32 %v2473, %v2665
    %v2667 = vpop.f32.mrb[0].mxu0
    %v2668 = vadd.f32 %v2475, %v2667
    %2669 = vmatprep.mubr.bf16.mxu0 0
    %2670 = vmatmul.mubr.bf16.gmra.mrb[0].mxu0 %v1955
    %v2671 = vpop.f32.mrb[0].mxu0
    %v2672 = vadd.f32 %v2479, %v2671
    %v2673 = vpop.f32.mrb[0].mxu0
    %v2674 = vadd.f32 %v2481, %v2673
    %v2675 = vpop.f32.mrb[0].mxu0
    %v2676 = vadd.f32 %v2483, %v2675
    %v2677 = vpop.f32.mrb[0].mxu0
    %v2678 = vadd.f32 %v2485, %v2677
    %2679 = vmatprep.mubr.bf16.mxu0 0
    %2680 = vmatmul.mubr.bf16.gmra.mrb[0].mxu0 %v1958
    %v2681 = vpop.f32.mrb[0].mxu0
    %v2682 = vadd.f32 %v2489, %v2681
    %v2683 = vpop.f32.mrb[0].mxu0
    %v2684 = vadd.f32 %v2491, %v2683
    %v2685 = vpop.f32.mrb[0].mxu0
    %v2686 = vadd.f32 %v2493, %v2685
    %v2687 = vpop.f32.mrb[0].mxu0
    %v2688 = vadd.f32 %v2495, %v2687
    %2689 = vmatprep.mubr.bf16.mxu0 0
    %2690 = vmatmul.mubr.bf16.gmra.mrb[0].mxu0 %v1961
    %v2691 = vpop.f32.mrb[0].mxu0
    %v2692 = vadd.f32 %v2499, %v2691
    %v2693 = vpop.f32.mrb[0].mxu0
    %v2694 = vadd.f32 %v2501, %v2693
    %v2695 = vpop.f32.mrb[0].mxu0
    %v2696 = vadd.f32 %v2503, %v2695
    %v2697 = vpop.f32.mrb[0].mxu0
    %v2698 = vadd.f32 %v2505, %v2697
    %2699 = vmatprep.mubr.bf16.mxu0 0
    %2700 = vmatmul.mubr.bf16.gmra.mrb[0].mxu0 %v1964
    %v2701 = vpop.f32.mrb[0].mxu0
    %v2702 = vadd.f32 %v2509, %v2701
    %v2703 = vpop.f32.mrb[0].mxu0
    %v2704 = vadd.f32 %v2511, %v2703
    %v2705 = vpop.f32.mrb[0].mxu0
    %v2706 = vadd.f32 %v2513, %v2705
    %v2707 = vpop.f32.mrb[0].mxu0
    %v2708 = vadd.f32 %v2515, %v2707
    %2709 = vmatprep.mubr.bf16.mxu0 0
    %2710 = vmatmul.mubr.bf16.gmra.mrb[0].mxu0 %v1967
    %v2711 = vpop.f32.mrb[0].mxu0
    %v2712 = vadd.f32 %v2519, %v2711
    %v2713 = vpop.f32.mrb[0].mxu0
    %v2714 = vadd.f32 %v2521, %v2713
    %v2715 = vpop.f32.mrb[0].mxu0
    %v2716 = vadd.f32 %v2523, %v2715
    %v2717 = vpop.f32.mrb[0].mxu0
    %v2718 = vadd.f32 %v2525, %v2717
    %2719 = vmatprep.mubr.bf16.mxu0 0
    %2720 = vmatmul.mubr.bf16.gmra.mrb[0].mxu0 %v1970
    %v2721 = vpop.f32.mrb[0].mxu0
    %v2722 = vadd.f32 %v2529, %v2721
    %v2723 = vpop.f32.mrb[0].mxu0
    %v2724 = vadd.f32 %v2531, %v2723
    %v2725 = vpop.f32.mrb[0].mxu0
    %v2726 = vadd.f32 %v2533, %v2725
    %v2727 = vpop.f32.mrb[0].mxu0
    %v2728 = vadd.f32 %v2535, %v2727
    %2729 = vmatprep.mubr.bf16.mxu0 0
    %2730 = vmatmul.mubr.bf16.gmra.mrb[0].mxu0 %v1973
    %v2731 = vpop.f32.mrb[0].mxu0
    %v2732 = vadd.f32 %v2539, %v2731
    %v2733 = vpop.f32.mrb[0].mxu0
    %v2734 = vadd.f32 %v2541, %v2733
    %v2735 = vpop.f32.mrb[0].mxu0
    %v2736 = vadd.f32 %v2543, %v2735
    %v2737 = vpop.f32.mrb[0].mxu0
    %v2738 = vadd.f32 %v2545, %v2737
    %2739 = vmatprep.mubr.bf16.mxu0 0
    %2740 = vmatmul.mubr.bf16.gmra.mrb[0].mxu0 %v1976
    %v2741 = vpop.f32.mrb[0].mxu0
    %v2742 = vadd.f32 %v2549, %v2741
    %v2743 = vpop.f32.mrb[0].mxu0
    %v2744 = vadd.f32 %v2551, %v2743
    %v2745 = vpop.f32.mrb[0].mxu0
    %v2746 = vadd.f32 %v2553, %v2745
    %v2747 = vpop.f32.mrb[0].mxu0
    %v2748 = vadd.f32 %v2555, %v2747
    %2749 = vdwg.mxu0
    %2750 = vmatprep.subr.bf16.mxu0 %v1540
    %2751 = vmatpush1.bf16.msra.mxu0 %v1539
    %2752 = vmatprep.subr.bf16.mxu0 %v1544
    %2753 = vmatpush1.bf16.msra.mxu0 %v1543
    %2754 = vmatprep.subr.bf16.mxu0 %v1548
    %2755 = vmatpush1.bf16.msra.mxu0 %v1547
    %2756 = vmatprep.subr.bf16.mxu0 %v1552
    %2757 = vmatpush1.bf16.msra.mxu0 %v1551
    %2758 = vmatprep.subr.bf16.mxu0 %v1556
    %2759 = vmatpush1.bf16.msra.mxu0 %v1555
    %2760 = vmatprep.subr.bf16.mxu0 %v1560
    %2761 = vmatpush1.bf16.msra.mxu0 %v1559
    %2762 = vmatprep.subr.bf16.mxu0 %v1564
    %2763 = vmatpush1.bf16.msra.mxu0 %v1563
    %2764 = vmatprep.subr.bf16.mxu0 %v1568
    %2765 = vmatpush1.bf16.msra.mxu0 %v1567
    %2766 = vmatprep.subr.bf16.mxu0 %v1572
    %2767 = vmatpush1.bf16.msra.mxu0 %v1571
    %2768 = vmatprep.subr.bf16.mxu0 %v1576
    %2769 = vmatpush1.bf16.msra.mxu0 %v1575
    %2770 = vmatprep.subr.bf16.mxu0 %v1580
    %2771 = vmatpush1.bf16.msra.mxu0 %v1579
    %2772 = vmatprep.subr.bf16.mxu0 %v1584
    %2773 = vmatpush1.bf16.msra.mxu0 %v1583
    %2774 = vmatprep.subr.bf16.mxu0 %v1588
    %2775 = vmatpush1.bf16.msra.mxu0 %v1587
    %2776 = vmatprep.subr.bf16.mxu0 %v1592
    %2777 = vmatpush1.bf16.msra.mxu0 %v1591
    %2778 = vmatprep.subr.bf16.mxu0 %v1596
    %2779 = vmatpush1.bf16.msra.mxu0 %v1595
    %2780 = vmatprep.subr.bf16.mxu0 %v1600
    %2781 = vmatpush1.bf16.msra.mxu0 %v1599
    %2782 = vmatprep.mubr.bf16.mxu0 %v742
    %2783 = vmatmul.mubr.bf16.gmra.mrb[0].mxu0 %v741
    %v2784 = vpop.f32.mrb[0].mxu0
    %v2785 = vadd.f32 %v380, %v2784
    %v2786 = vpop.f32.mrb[0].mxu0
    %v2787 = vadd.f32 %v384, %v2786
    %v2788 = vpop.f32.mrb[0].mxu0
    %v2789 = vadd.f32 %v380, %v2788
    %v2790 = vpop.f32.mrb[0].mxu0
    %v2791 = vadd.f32 %v384, %v2790
    %2792 = vmatprep.mubr.bf16.mxu0 %v749
    %2793 = vmatmul.mubr.bf16.gmra.mrb[0].mxu0 %v748
    %v2794 = vpop.f32.mrb[0].mxu0
    %v2795 = vadd.f32 %v380, %v2794
    %v2796 = vpop.f32.mrb[0].mxu0
    %v2797 = vadd.f32 %v384, %v2796
    %v2798 = vpop.f32.mrb[0].mxu0
    %v2799 = vadd.f32 %v380, %v2798
    %v2800 = vpop.f32.mrb[0].mxu0
    %v2801 = vadd.f32 %v384, %v2800
    %2802 = vmatprep.mubr.bf16.mxu0 %v756
    %2803 = vmatmul.mubr.bf16.gmra.mrb[0].mxu0 %v755
    %v2804 = vpop.f32.mrb[0].mxu0
    %v2805 = vadd.f32 %v380, %v2804
    %v2806 = vpop.f32.mrb[0].mxu0
    %v2807 = vadd.f32 %v384, %v2806
    %v2808 = vpop.f32.mrb[0].mxu0
    %v2809 = vadd.f32 %v380, %v2808
    %v2810 = vpop.f32.mrb[0].mxu0
    %v2811 = vadd.f32 %v384, %v2810
    %2812 = vmatprep.mubr.bf16.mxu0 %v763
    %2813 = vmatmul.mubr.bf16.gmra.mrb[0].mxu0 %v762
    %v2814 = vpop.f32.mrb[0].mxu0
    %v2815 = vadd.f32 %v380, %v2814
    %v2816 = vpop.f32.mrb[0].mxu0
    %v2817 = vadd.f32 %v384, %v2816
    %v2818 = vpop.f32.mrb[0].mxu0
    %v2819 = vadd.f32 %v380, %v2818
    %v2820 = vpop.f32.mrb[0].mxu0
    %v2821 = vadd.f32 %v384, %v2820
    %2822 = vmatprep.mubr.bf16.mxu0 %v770
    %2823 = vmatmul.mubr.bf16.gmra.mrb[0].mxu0 %v769
    %v2824 = vpop.f32.mrb[0].mxu0
    %v2825 = vadd.f32 %v380, %v2824
    %v2826 = vpop.f32.mrb[0].mxu0
    %v2827 = vadd.f32 %v384, %v2826
    %v2828 = vpop.f32.mrb[0].mxu0
    %v2829 = vadd.f32 %v380, %v2828
    %v2830 = vpop.f32.mrb[0].mxu0
    %v2831 = vadd.f32 %v384, %v2830
    %2832 = vmatprep.mubr.bf16.mxu0 %v777
    %2833 = vmatmul.mubr.bf16.gmra.mrb[0].mxu0 %v776
    %v2834 = vpop.f32.mrb[0].mxu0
    %v2835 = vadd.f32 %v380, %v2834
    %v2836 = vpop.f32.mrb[0].mxu0
    %v2837 = vadd.f32 %v384, %v2836
    %v2838 = vpop.f32.mrb[0].mxu0
    %v2839 = vadd.f32 %v380, %v2838
    %v2840 = vpop.f32.mrb[0].mxu0
    %v2841 = vadd.f32 %v384, %v2840
    %2842 = vmatprep.mubr.bf16.mxu0 %v784
    %2843 = vmatmul.mubr.bf16.gmra.mrb[0].mxu0 %v783
    %v2844 = vpop.f32.mrb[0].mxu0
    %v2845 = vadd.f32 %v380, %v2844
    %v2846 = vpop.f32.mrb[0].mxu0
    %v2847 = vadd.f32 %v384, %v2846
    %v2848 = vpop.f32.mrb[0].mxu0
    %v2849 = vadd.f32 %v380, %v2848
    %v2850 = vpop.f32.mrb[0].mxu0
    %v2851 = vadd.f32 %v384, %v2850
    %2852 = vmatprep.mubr.bf16.mxu0 %v791
    %2853 = vmatmul.mubr.bf16.gmra.mrb[0].mxu0 %v790
    %v2854 = vpop.f32.mrb[0].mxu0
    %v2855 = vadd.f32 %v380, %v2854
    %v2856 = vpop.f32.mrb[0].mxu0
    %v2857 = vadd.f32 %v384, %v2856
    %v2858 = vpop.f32.mrb[0].mxu0
    %v2859 = vadd.f32 %v380, %v2858
    %v2860 = vpop.f32.mrb[0].mxu0
    %v2861 = vadd.f32 %v384, %v2860
    %2862 = vmatprep.mubr.bf16.mxu0 %v798
    %2863 = vmatmul.mubr.bf16.gmra.mrb[0].mxu0 %v797
    %v2864 = vpop.f32.mrb[0].mxu0
    %v2865 = vadd.f32 %v380, %v2864
    %v2866 = vpop.f32.mrb[0].mxu0
    %v2867 = vadd.f32 %v384, %v2866
    %v2868 = vpop.f32.mrb[0].mxu0
    %v2869 = vadd.f32 %v380, %v2868
    %v2870 = vpop.f32.mrb[0].mxu0
    %v2871 = vadd.f32 %v384, %v2870
    %2872 = vmatprep.mubr.bf16.mxu0 %v805
    %2873 = vmatmul.mubr.bf16.gmra.mrb[0].mxu0 %v804
    %v2874 = vpop.f32.mrb[0].mxu0
    %v2875 = vadd.f32 %v380, %v2874
    %v2876 = vpop.f32.mrb[0].mxu0
    %v2877 = vadd.f32 %v384, %v2876
    %v2878 = vpop.f32.mrb[0].mxu0
    %v2879 = vadd.f32 %v380, %v2878
    %v2880 = vpop.f32.mrb[0].mxu0
    %v2881 = vadd.f32 %v384, %v2880
    %2882 = vmatprep.mubr.bf16.mxu0 %v812
    %2883 = vmatmul.mubr.bf16.gmra.mrb[0].mxu0 %v811
    %v2884 = vpop.f32.mrb[0].mxu0
    %v2885 = vadd.f32 %v380, %v2884
    %v2886 = vpop.f32.mrb[0].mxu0
    %v2887 = vadd.f32 %v384, %v2886
    %v2888 = vpop.f32.mrb[0].mxu0
    %v2889 = vadd.f32 %v380, %v2888
    %v2890 = vpop.f32.mrb[0].mxu0
    %v2891 = vadd.f32 %v384, %v2890
    %2892 = vmatprep.mubr.bf16.mxu0 %v819
    %2893 = vmatmul.mubr.bf16.gmra.mrb[0].mxu0 %v818
    %v2894 = vpop.f32.mrb[0].mxu0
    %v2895 = vadd.f32 %v380, %v2894
    %v2896 = vpop.f32.mrb[0].mxu0
    %v2897 = vadd.f32 %v384, %v2896
    %v2898 = vpop.f32.mrb[0].mxu0
    %v2899 = vadd.f32 %v380, %v2898
    %v2900 = vpop.f32.mrb[0].mxu0
    %v2901 = vadd.f32 %v384, %v2900
    %2902 = vmatprep.mubr.bf16.mxu0 %v826
    %2903 = vmatmul.mubr.bf16.gmra.mrb[0].mxu0 %v825
    %v2904 = vpop.f32.mrb[0].mxu0
    %v2905 = vadd.f32 %v380, %v2904
    %v2906 = vpop.f32.mrb[0].mxu0
    %v2907 = vadd.f32 %v384, %v2906
    %v2908 = vpop.f32.mrb[0].mxu0
    %v2909 = vadd.f32 %v380, %v2908
    %v2910 = vpop.f32.mrb[0].mxu0
    %v2911 = vadd.f32 %v384, %v2910
    %2912 = vmatprep.mubr.bf16.mxu0 %v833
    %2913 = vmatmul.mubr.bf16.gmra.mrb[0].mxu0 %v832
    %v2914 = vpop.f32.mrb[0].mxu0
    %v2915 = vadd.f32 %v380, %v2914
    %v2916 = vpop.f32.mrb[0].mxu0
    %v2917 = vadd.f32 %v384, %v2916
    %v2918 = vpop.f32.mrb[0].mxu0
    %v2919 = vadd.f32 %v380, %v2918
    %v2920 = vpop.f32.mrb[0].mxu0
    %v2921 = vadd.f32 %v384, %v2920
    %2922 = vmatprep.mubr.bf16.mxu0 %v840
    %2923 = vmatmul.mubr.bf16.gmra.mrb[0].mxu0 %v839
    %v2924 = vpop.f32.mrb[0].mxu0
    %v2925 = vadd.f32 %v380, %v2924
    %v2926 = vpop.f32.mrb[0].mxu0
    %v2927 = vadd.f32 %v384, %v2926
    %v2928 = vpop.f32.mrb[0].mxu0
    %v2929 = vadd.f32 %v380, %v2928
    %v2930 = vpop.f32.mrb[0].mxu0
    %v2931 = vadd.f32 %v384, %v2930
    %2932 = vmatprep.mubr.bf16.mxu0 %v847
    %2933 = vmatmul.mubr.bf16.gmra.mrb[0].mxu0 %v846
    %v2934 = vpop.f32.mrb[0].mxu0
    %v2935 = vadd.f32 %v380, %v2934
    %v2936 = vpop.f32.mrb[0].mxu0
    %v2937 = vadd.f32 %v384, %v2936
    %v2938 = vpop.f32.mrb[0].mxu0
    %v2939 = vadd.f32 %v380, %v2938
    %v2940 = vpop.f32.mrb[0].mxu0
    %v2941 = vadd.f32 %v384, %v2940
    %2942 = vdwg.mxu0
    %2943 = vmatprep.subr.bf16.mxu0 %v1604
    %2944 = vmatpush1.bf16.msra.mxu0 %v1603
    %2945 = vmatprep.subr.bf16.mxu0 %v1608
    %2946 = vmatpush1.bf16.msra.mxu0 %v1607
    %2947 = vmatprep.subr.bf16.mxu0 %v1612
    %2948 = vmatpush1.bf16.msra.mxu0 %v1611
    %2949 = vmatprep.subr.bf16.mxu0 %v1616
    %2950 = vmatpush1.bf16.msra.mxu0 %v1615
    %2951 = vmatprep.subr.bf16.mxu0 %v1620
    %2952 = vmatpush1.bf16.msra.mxu0 %v1619
    %2953 = vmatprep.subr.bf16.mxu0 %v1624
    %2954 = vmatpush1.bf16.msra.mxu0 %v1623
    %2955 = vmatprep.subr.bf16.mxu0 %v1628
    %2956 = vmatpush1.bf16.msra.mxu0 %v1627
    %2957 = vmatprep.subr.bf16.mxu0 %v1632
    %2958 = vmatpush1.bf16.msra.mxu0 %v1631
    %2959 = vmatprep.subr.bf16.mxu0 %v1636
    %2960 = vmatpush1.bf16.msra.mxu0 %v1635
    %2961 = vmatprep.subr.bf16.mxu0 %v1640
    %2962 = vmatpush1.bf16.msra.mxu0 %v1639
    %2963 = vmatprep.subr.bf16.mxu0 %v1644
    %2964 = vmatpush1.bf16.msra.mxu0 %v1643
    %2965 = vmatprep.subr.bf16.mxu0 %v1648
    %2966 = vmatpush1.bf16.msra.mxu0 %v1647
    %2967 = vmatprep.subr.bf16.mxu0 %v1652
    %2968 = vmatpush1.bf16.msra.mxu0 %v1651
    %2969 = vmatprep.subr.bf16.mxu0 %v1656
    %2970 = vmatpush1.bf16.msra.mxu0 %v1655
    %2971 = vmatprep.subr.bf16.mxu0 %v1660
    %2972 = vmatpush1.bf16.msra.mxu0 %v1659
    %2973 = vmatprep.subr.bf16.mxu0 %v1664
    %2974 = vmatpush1.bf16.msra.mxu0 %v1663
    %2975 = vmatprep.mubr.bf16.mxu0 %v744
    %2976 = vmatmul.mubr.bf16.gmra.mrb[0].mxu0 %v743
    %v2977 = vpop.f32.mrb[0].mxu0
    %v2978 = vadd.f32 %v2785, %v2977
    %v2979 = vpop.f32.mrb[0].mxu0
    %v2980 = vadd.f32 %v2787, %v2979
    %v2981 = vpop.f32.mrb[0].mxu0
    %v2982 = vadd.f32 %v2789, %v2981
    %v2983 = vpop.f32.mrb[0].mxu0
    %v2984 = vadd.f32 %v2791, %v2983
    %2985 = vmatprep.mubr.bf16.mxu0 %v751
    %2986 = vmatmul.mubr.bf16.gmra.mrb[0].mxu0 %v750
    %v2987 = vpop.f32.mrb[0].mxu0
    %v2988 = vadd.f32 %v2795, %v2987
    %v2989 = vpop.f32.mrb[0].mxu0
    %v2990 = vadd.f32 %v2797, %v2989
    %v2991 = vpop.f32.mrb[0].mxu0
    %v2992 = vadd.f32 %v2799, %v2991
    %v2993 = vpop.f32.mrb[0].mxu0
    %v2994 = vadd.f32 %v2801, %v2993
    %2995 = vmatprep.mubr.bf16.mxu0 %v758
    %2996 = vmatmul.mubr.bf16.gmra.mrb[0].mxu0 %v757
    %v2997 = vpop.f32.mrb[0].mxu0
    %v2998 = vadd.f32 %v2805, %v2997
    %v2999 = vpop.f32.mrb[0].mxu0
    %v3000 = vadd.f32 %v2807, %v2999
    %v3001 = vpop.f32.mrb[0].mxu0
    %v3002 = vadd.f32 %v2809, %v3001
    %v3003 = vpop.f32.mrb[0].mxu0
    %v3004 = vadd.f32 %v2811, %v3003
    %3005 = vmatprep.mubr.bf16.mxu0 %v765
    %3006 = vmatmul.mubr.bf16.gmra.mrb[0].mxu0 %v764
    %v3007 = vpop.f32.mrb[0].mxu0
    %v3008 = vadd.f32 %v2815, %v3007
    %v3009 = vpop.f32.mrb[0].mxu0
    %v3010 = vadd.f32 %v2817, %v3009
    %v3011 = vpop.f32.mrb[0].mxu0
    %v3012 = vadd.f32 %v2819, %v3011
    %v3013 = vpop.f32.mrb[0].mxu0
    %v3014 = vadd.f32 %v2821, %v3013
    %3015 = vmatprep.mubr.bf16.mxu0 %v772
    %3016 = vmatmul.mubr.bf16.gmra.mrb[0].mxu0 %v771
    %v3017 = vpop.f32.mrb[0].mxu0
    %v3018 = vadd.f32 %v2825, %v3017
    %v3019 = vpop.f32.mrb[0].mxu0
    %v3020 = vadd.f32 %v2827, %v3019
    %v3021 = vpop.f32.mrb[0].mxu0
    %v3022 = vadd.f32 %v2829, %v3021
    %v3023 = vpop.f32.mrb[0].mxu0
    %v3024 = vadd.f32 %v2831, %v3023
    %3025 = vmatprep.mubr.bf16.mxu0 %v779
    %3026 = vmatmul.mubr.bf16.gmra.mrb[0].mxu0 %v778
    %v3027 = vpop.f32.mrb[0].mxu0
    %v3028 = vadd.f32 %v2835, %v3027
    %v3029 = vpop.f32.mrb[0].mxu0
    %v3030 = vadd.f32 %v2837, %v3029
    %v3031 = vpop.f32.mrb[0].mxu0
    %v3032 = vadd.f32 %v2839, %v3031
    %v3033 = vpop.f32.mrb[0].mxu0
    %v3034 = vadd.f32 %v2841, %v3033
    %3035 = vmatprep.mubr.bf16.mxu0 %v786
    %3036 = vmatmul.mubr.bf16.gmra.mrb[0].mxu0 %v785
    %v3037 = vpop.f32.mrb[0].mxu0
    %v3038 = vadd.f32 %v2845, %v3037
    %v3039 = vpop.f32.mrb[0].mxu0
    %v3040 = vadd.f32 %v2847, %v3039
    %v3041 = vpop.f32.mrb[0].mxu0
    %v3042 = vadd.f32 %v2849, %v3041
    %v3043 = vpop.f32.mrb[0].mxu0
    %v3044 = vadd.f32 %v2851, %v3043
    %3045 = vmatprep.mubr.bf16.mxu0 %v793
    %3046 = vmatmul.mubr.bf16.gmra.mrb[0].mxu0 %v792
    %v3047 = vpop.f32.mrb[0].mxu0
    %v3048 = vadd.f32 %v2855, %v3047
    %v3049 = vpop.f32.mrb[0].mxu0
    %v3050 = vadd.f32 %v2857, %v3049
    %v3051 = vpop.f32.mrb[0].mxu0
    %v3052 = vadd.f32 %v2859, %v3051
    %v3053 = vpop.f32.mrb[0].mxu0
    %v3054 = vadd.f32 %v2861, %v3053
    %3055 = vmatprep.mubr.bf16.mxu0 %v800
    %3056 = vmatmul.mubr.bf16.gmra.mrb[0].mxu0 %v799
    %v3057 = vpop.f32.mrb[0].mxu0
    %v3058 = vadd.f32 %v2865, %v3057
    %v3059 = vpop.f32.mrb[0].mxu0
    %v3060 = vadd.f32 %v2867, %v3059
    %v3061 = vpop.f32.mrb[0].mxu0
    %v3062 = vadd.f32 %v2869, %v3061
    %v3063 = vpop.f32.mrb[0].mxu0
    %v3064 = vadd.f32 %v2871, %v3063
    %3065 = vmatprep.mubr.bf16.mxu0 %v807
    %3066 = vmatmul.mubr.bf16.gmra.mrb[0].mxu0 %v806
    %v3067 = vpop.f32.mrb[0].mxu0
    %v3068 = vadd.f32 %v2875, %v3067
    %v3069 = vpop.f32.mrb[0].mxu0
    %v3070 = vadd.f32 %v2877, %v3069
    %v3071 = vpop.f32.mrb[0].mxu0
    %v3072 = vadd.f32 %v2879, %v3071
    %v3073 = vpop.f32.mrb[0].mxu0
    %v3074 = vadd.f32 %v2881, %v3073
    %3075 = vmatprep.mubr.bf16.mxu0 %v814
    %3076 = vmatmul.mubr.bf16.gmra.mrb[0].mxu0 %v813
    %v3077 = vpop.f32.mrb[0].mxu0
    %v3078 = vadd.f32 %v2885, %v3077
    %v3079 = vpop.f32.mrb[0].mxu0
    %v3080 = vadd.f32 %v2887, %v3079
    %v3081 = vpop.f32.mrb[0].mxu0
    %v3082 = vadd.f32 %v2889, %v3081
    %v3083 = vpop.f32.mrb[0].mxu0
    %v3084 = vadd.f32 %v2891, %v3083
    %3085 = vmatprep.mubr.bf16.mxu0 %v821
    %3086 = vmatmul.mubr.bf16.gmra.mrb[0].mxu0 %v820
    %v3087 = vpop.f32.mrb[0].mxu0
    %v3088 = vadd.f32 %v2895, %v3087
    %v3089 = vpop.f32.mrb[0].mxu0
    %v3090 = vadd.f32 %v2897, %v3089
    %v3091 = vpop.f32.mrb[0].mxu0
    %v3092 = vadd.f32 %v2899, %v3091
    %v3093 = vpop.f32.mrb[0].mxu0
    %v3094 = vadd.f32 %v2901, %v3093
    %3095 = vmatprep.mubr.bf16.mxu0 %v828
    %3096 = vmatmul.mubr.bf16.gmra.mrb[0].mxu0 %v827
    %v3097 = vpop.f32.mrb[0].mxu0
    %v3098 = vadd.f32 %v2905, %v3097
    %v3099 = vpop.f32.mrb[0].mxu0
    %v3100 = vadd.f32 %v2907, %v3099
    %v3101 = vpop.f32.mrb[0].mxu0
    %v3102 = vadd.f32 %v2909, %v3101
    %v3103 = vpop.f32.mrb[0].mxu0
    %v3104 = vadd.f32 %v2911, %v3103
    %3105 = vmatprep.mubr.bf16.mxu0 %v835
    %3106 = vmatmul.mubr.bf16.gmra.mrb[0].mxu0 %v834
    %v3107 = vpop.f32.mrb[0].mxu0
    %v3108 = vadd.f32 %v2915, %v3107
    %v3109 = vpop.f32.mrb[0].mxu0
    %v3110 = vadd.f32 %v2917, %v3109
    %v3111 = vpop.f32.mrb[0].mxu0
    %v3112 = vadd.f32 %v2919, %v3111
    %v3113 = vpop.f32.mrb[0].mxu0
    %v3114 = vadd.f32 %v2921, %v3113
    %3115 = vmatprep.mubr.bf16.mxu0 %v842
    %3116 = vmatmul.mubr.bf16.gmra.mrb[0].mxu0 %v841
    %v3117 = vpop.f32.mrb[0].mxu0
    %v3118 = vadd.f32 %v2925, %v3117
    %v3119 = vpop.f32.mrb[0].mxu0
    %v3120 = vadd.f32 %v2927, %v3119
    %v3121 = vpop.f32.mrb[0].mxu0
    %v3122 = vadd.f32 %v2929, %v3121
    %v3123 = vpop.f32.mrb[0].mxu0
    %v3124 = vadd.f32 %v2931, %v3123
    %3125 = vmatprep.mubr.bf16.mxu0 %v849
    %3126 = vmatmul.mubr.bf16.gmra.mrb[0].mxu0 %v848
    %v3127 = vpop.f32.mrb[0].mxu0
    %v3128 = vadd.f32 %v2935, %v3127
    %v3129 = vpop.f32.mrb[0].mxu0
    %v3130 = vadd.f32 %v2937, %v3129
    %v3131 = vpop.f32.mrb[0].mxu0
    %v3132 = vadd.f32 %v2939, %v3131
    %v3133 = vpop.f32.mrb[0].mxu0
    %v3134 = vadd.f32 %v2941, %v3133
    %3135 = vdwg.mxu0
    %3136 = vmatprep.subr.bf16.mxu0 %v1668
    %3137 = vmatpush1.bf16.msra.mxu0 %v1667
    %3138 = vmatprep.subr.bf16.mxu0 %v1672
    %3139 = vmatpush1.bf16.msra.mxu0 %v1671
    %3140 = vmatprep.subr.bf16.mxu0 %v1676
    %3141 = vmatpush1.bf16.msra.mxu0 %v1675
    %3142 = vmatprep.subr.bf16.mxu0 %v1680
    %3143 = vmatpush1.bf16.msra.mxu0 %v1679
    %3144 = vmatprep.subr.bf16.mxu0 %v1684
    %3145 = vmatpush1.bf16.msra.mxu0 %v1683
    %3146 = vmatprep.subr.bf16.mxu0 %v1688
    %3147 = vmatpush1.bf16.msra.mxu0 %v1687
    %3148 = vmatprep.subr.bf16.mxu0 %v1692
    %3149 = vmatpush1.bf16.msra.mxu0 %v1691
    %3150 = vmatprep.subr.bf16.mxu0 %v1696
    %3151 = vmatpush1.bf16.msra.mxu0 %v1695
    %3152 = vmatprep.subr.bf16.mxu0 %v1700
    %3153 = vmatpush1.bf16.msra.mxu0 %v1699
    %3154 = vmatprep.subr.bf16.mxu0 %v1704
    %3155 = vmatpush1.bf16.msra.mxu0 %v1703
    %3156 = vmatprep.subr.bf16.mxu0 %v1708
    %3157 = vmatpush1.bf16.msra.mxu0 %v1707
    %3158 = vmatprep.subr.bf16.mxu0 %v1712
    %3159 = vmatpush1.bf16.msra.mxu0 %v1711
    %3160 = vmatprep.subr.bf16.mxu0 %v1716
    %3161 = vmatpush1.bf16.msra.mxu0 %v1715
    %3162 = vmatprep.subr.bf16.mxu0 %v1720
    %3163 = vmatpush1.bf16.msra.mxu0 %v1719
    %3164 = vmatprep.subr.bf16.mxu0 %v1724
    %3165 = vmatpush1.bf16.msra.mxu0 %v1723
    %3166 = vmatprep.subr.bf16.mxu0 %v1728
    %3167 = vmatpush1.bf16.msra.mxu0 %v1727
    %3168 = vmatprep.mubr.bf16.mxu0 %v746
    %3169 = vmatmul.mubr.bf16.gmra.mrb[0].mxu0 %v745
    %v3170 = vpop.f32.mrb[0].mxu0
    %v3171 = vadd.f32 %v2978, %v3170
    %v3172 = vpop.f32.mrb[0].mxu0
    %v3173 = vadd.f32 %v2980, %v3172
    %v3174 = vpop.f32.mrb[0].mxu0
    %v3175 = vadd.f32 %v2982, %v3174
    %v3176 = vpop.f32.mrb[0].mxu0
    %v3177 = vadd.f32 %v2984, %v3176
    %3178 = vmatprep.mubr.bf16.mxu0 %v753
    %3179 = vmatmul.mubr.bf16.gmra.mrb[0].mxu0 %v752
    %v3180 = vpop.f32.mrb[0].mxu0
    %v3181 = vadd.f32 %v2988, %v3180
    %v3182 = vpop.f32.mrb[0].mxu0
    %v3183 = vadd.f32 %v2990, %v3182
    %v3184 = vpop.f32.mrb[0].mxu0
    %v3185 = vadd.f32 %v2992, %v3184
    %v3186 = vpop.f32.mrb[0].mxu0
    %v3187 = vadd.f32 %v2994, %v3186
    %3188 = vmatprep.mubr.bf16.mxu0 %v760
    %3189 = vmatmul.mubr.bf16.gmra.mrb[0].mxu0 %v759
    %v3190 = vpop.f32.mrb[0].mxu0
    %v3191 = vadd.f32 %v2998, %v3190
    %v3192 = vpop.f32.mrb[0].mxu0
    %v3193 = vadd.f32 %v3000, %v3192
    %v3194 = vpop.f32.mrb[0].mxu0
    %v3195 = vadd.f32 %v3002, %v3194
    %v3196 = vpop.f32.mrb[0].mxu0
    %v3197 = vadd.f32 %v3004, %v3196
    %3198 = vmatprep.mubr.bf16.mxu0 %v767
    %3199 = vmatmul.mubr.bf16.gmra.mrb[0].mxu0 %v766
    %v3200 = vpop.f32.mrb[0].mxu0
    %v3201 = vadd.f32 %v3008, %v3200
    %v3202 = vpop.f32.mrb[0].mxu0
    %v3203 = vadd.f32 %v3010, %v3202
    %v3204 = vpop.f32.mrb[0].mxu0
    %v3205 = vadd.f32 %v3012, %v3204
    %v3206 = vpop.f32.mrb[0].mxu0
    %v3207 = vadd.f32 %v3014, %v3206
    %3208 = vmatprep.mubr.bf16.mxu0 %v774
    %3209 = vmatmul.mubr.bf16.gmra.mrb[0].mxu0 %v773
    %v3210 = vpop.f32.mrb[0].mxu0
    %v3211 = vadd.f32 %v3018, %v3210
    %v3212 = vpop.f32.mrb[0].mxu0
    %v3213 = vadd.f32 %v3020, %v3212
    %v3214 = vpop.f32.mrb[0].mxu0
    %v3215 = vadd.f32 %v3022, %v3214
    %v3216 = vpop.f32.mrb[0].mxu0
    %v3217 = vadd.f32 %v3024, %v3216
    %3218 = vmatprep.mubr.bf16.mxu0 %v781
    %3219 = vmatmul.mubr.bf16.gmra.mrb[0].mxu0 %v780
    %v3220 = vpop.f32.mrb[0].mxu0
    %v3221 = vadd.f32 %v3028, %v3220
    %v3222 = vpop.f32.mrb[0].mxu0
    %v3223 = vadd.f32 %v3030, %v3222
    %v3224 = vpop.f32.mrb[0].mxu0
    %v3225 = vadd.f32 %v3032, %v3224
    %v3226 = vpop.f32.mrb[0].mxu0
    %v3227 = vadd.f32 %v3034, %v3226
    %3228 = vmatprep.mubr.bf16.mxu0 %v788
    %3229 = vmatmul.mubr.bf16.gmra.mrb[0].mxu0 %v787
    %v3230 = vpop.f32.mrb[0].mxu0
    %v3231 = vadd.f32 %v3038, %v3230
    %v3232 = vpop.f32.mrb[0].mxu0
    %v3233 = vadd.f32 %v3040, %v3232
    %v3234 = vpop.f32.mrb[0].mxu0
    %v3235 = vadd.f32 %v3042, %v3234
    %v3236 = vpop.f32.mrb[0].mxu0
    %v3237 = vadd.f32 %v3044, %v3236
    %3238 = vmatprep.mubr.bf16.mxu0 %v795
    %3239 = vmatmul.mubr.bf16.gmra.mrb[0].mxu0 %v794
    %v3240 = vpop.f32.mrb[0].mxu0
    %v3241 = vadd.f32 %v3048, %v3240
    %v3242 = vpop.f32.mrb[0].mxu0
    %v3243 = vadd.f32 %v3050, %v3242
    %v3244 = vpop.f32.mrb[0].mxu0
    %v3245 = vadd.f32 %v3052, %v3244
    %v3246 = vpop.f32.mrb[0].mxu0
    %v3247 = vadd.f32 %v3054, %v3246
    %3248 = vmatprep.mubr.bf16.mxu0 %v802
    %3249 = vmatmul.mubr.bf16.gmra.mrb[0].mxu0 %v801
    %v3250 = vpop.f32.mrb[0].mxu0
    %v3251 = vadd.f32 %v3058, %v3250
    %v3252 = vpop.f32.mrb[0].mxu0
    %v3253 = vadd.f32 %v3060, %v3252
    %v3254 = vpop.f32.mrb[0].mxu0
    %v3255 = vadd.f32 %v3062, %v3254
    %v3256 = vpop.f32.mrb[0].mxu0
    %v3257 = vadd.f32 %v3064, %v3256
    %3258 = vmatprep.mubr.bf16.mxu0 %v809
    %3259 = vmatmul.mubr.bf16.gmra.mrb[0].mxu0 %v808
    %v3260 = vpop.f32.mrb[0].mxu0
    %v3261 = vadd.f32 %v3068, %v3260
    %v3262 = vpop.f32.mrb[0].mxu0
    %v3263 = vadd.f32 %v3070, %v3262
    %v3264 = vpop.f32.mrb[0].mxu0
    %v3265 = vadd.f32 %v3072, %v3264
    %v3266 = vpop.f32.mrb[0].mxu0
    %v3267 = vadd.f32 %v3074, %v3266
    %3268 = vmatprep.mubr.bf16.mxu0 %v816
    %3269 = vmatmul.mubr.bf16.gmra.mrb[0].mxu0 %v815
    %v3270 = vpop.f32.mrb[0].mxu0
    %v3271 = vadd.f32 %v3078, %v3270
    %v3272 = vpop.f32.mrb[0].mxu0
    %v3273 = vadd.f32 %v3080, %v3272
    %v3274 = vpop.f32.mrb[0].mxu0
    %v3275 = vadd.f32 %v3082, %v3274
    %v3276 = vpop.f32.mrb[0].mxu0
    %v3277 = vadd.f32 %v3084, %v3276
    %3278 = vmatprep.mubr.bf16.mxu0 %v823
    %3279 = vmatmul.mubr.bf16.gmra.mrb[0].mxu0 %v822
    %v3280 = vpop.f32.mrb[0].mxu0
    %v3281 = vadd.f32 %v3088, %v3280
    %v3282 = vpop.f32.mrb[0].mxu0
    %v3283 = vadd.f32 %v3090, %v3282
    %v3284 = vpop.f32.mrb[0].mxu0
    %v3285 = vadd.f32 %v3092, %v3284
    %v3286 = vpop.f32.mrb[0].mxu0
    %v3287 = vadd.f32 %v3094, %v3286
    %3288 = vmatprep.mubr.bf16.mxu0 %v830
    %3289 = vmatmul.mubr.bf16.gmra.mrb[0].mxu0 %v829
    %v3290 = vpop.f32.mrb[0].mxu0
    %v3291 = vadd.f32 %v3098, %v3290
    %v3292 = vpop.f32.mrb[0].mxu0
    %v3293 = vadd.f32 %v3100, %v3292
    %v3294 = vpop.f32.mrb[0].mxu0
    %v3295 = vadd.f32 %v3102, %v3294
    %v3296 = vpop.f32.mrb[0].mxu0
    %v3297 = vadd.f32 %v3104, %v3296
    %3298 = vmatprep.mubr.bf16.mxu0 %v837
    %3299 = vmatmul.mubr.bf16.gmra.mrb[0].mxu0 %v836
    %v3300 = vpop.f32.mrb[0].mxu0
    %v3301 = vadd.f32 %v3108, %v3300
    %v3302 = vpop.f32.mrb[0].mxu0
    %v3303 = vadd.f32 %v3110, %v3302
    %v3304 = vpop.f32.mrb[0].mxu0
    %v3305 = vadd.f32 %v3112, %v3304
    %v3306 = vpop.f32.mrb[0].mxu0
    %v3307 = vadd.f32 %v3114, %v3306
    %3308 = vmatprep.mubr.bf16.mxu0 %v844
    %3309 = vmatmul.mubr.bf16.gmra.mrb[0].mxu0 %v843
    %v3310 = vpop.f32.mrb[0].mxu0
    %v3311 = vadd.f32 %v3118, %v3310
    %v3312 = vpop.f32.mrb[0].mxu0
    %v3313 = vadd.f32 %v3120, %v3312
    %v3314 = vpop.f32.mrb[0].mxu0
    %v3315 = vadd.f32 %v3122, %v3314
    %v3316 = vpop.f32.mrb[0].mxu0
    %v3317 = vadd.f32 %v3124, %v3316
    %3318 = vmatprep.mubr.bf16.mxu0 %v851
    %3319 = vmatmul.mubr.bf16.gmra.mrb[0].mxu0 %v850
    %v3320 = vpop.f32.mrb[0].mxu0
    %v3321 = vadd.f32 %v3128, %v3320
    %v3322 = vpop.f32.mrb[0].mxu0
    %v3323 = vadd.f32 %v3130, %v3322
    %v3324 = vpop.f32.mrb[0].mxu0
    %v3325 = vadd.f32 %v3132, %v3324
    %v3326 = vpop.f32.mrb[0].mxu0
    %v3327 = vadd.f32 %v3134, %v3326
    %3328 = vdwg.mxu0
    %3329 = vmatprep.subr.bf16.mxu0 %v1732
    %3330 = vmatpush1.bf16.msra.mxu0 %v1731
    %3331 = vmatprep.subr.bf16.mxu0 0
    %3332 = vmatpush1.bf16.msra.mxu0 0
    %3333 = vmatprep.subr.bf16.mxu0 0
    %3334 = vmatpush1.bf16.msra.mxu0 0
    %3335 = vmatprep.subr.bf16.mxu0 0
    %3336 = vmatpush1.bf16.msra.mxu0 0
    %3337 = vmatprep.subr.bf16.mxu0 0
    %3338 = vmatpush1.bf16.msra.mxu0 0
    %3339 = vmatprep.subr.bf16.mxu0 0
    %3340 = vmatpush1.bf16.msra.mxu0 0
    %3341 = vmatprep.subr.bf16.mxu0 0
    %3342 = vmatpush1.bf16.msra.mxu0 0
    %3343 = vmatprep.subr.bf16.mxu0 0
    %3344 = vmatpush1.bf16.msra.mxu0 0
    %3345 = vmatprep.subr.bf16.mxu0 0
    %3346 = vmatpush1.bf16.msra.mxu0 0
    %3347 = vmatprep.subr.bf16.mxu0 0
    %3348 = vmatpush1.bf16.msra.mxu0 0
    %3349 = vmatprep.subr.bf16.mxu0 0
    %3350 = vmatpush1.bf16.msra.mxu0 0
    %3351 = vmatprep.subr.bf16.mxu0 0
    %3352 = vmatpush1.bf16.msra.mxu0 0
    %3353 = vmatprep.subr.bf16.mxu0 0
    %3354 = vmatpush1.bf16.msra.mxu0 0
    %3355 = vmatprep.subr.bf16.mxu0 0
    %3356 = vmatpush1.bf16.msra.mxu0 0
    %3357 = vmatprep.subr.bf16.mxu0 0
    %3358 = vmatpush1.bf16.msra.mxu0 0
    %3359 = vmatprep.subr.bf16.mxu0 0
    %3360 = vmatpush1.bf16.msra.mxu0 0
    %3361 = vmatprep.mubr.bf16.mxu0 0
    %3362 = vmatmul.mubr.bf16.gmra.mrb[0].mxu0 %v1931
    %v3363 = vpop.f32.mrb[0].mxu0
    %v3364 = vadd.f32 %v3171, %v3363
    %v3365 = vpop.f32.mrb[0].mxu0
    %v3366 = vadd.f32 %v3173, %v3365
    %v3367 = vpop.f32.mrb[0].mxu0
    %v3368 = vadd.f32 %v3175, %v3367
    %v3369 = vpop.f32.mrb[0].mxu0
    %v3370 = vadd.f32 %v3177, %v3369
    %3371 = vmatprep.mubr.bf16.mxu0 0
    %3372 = vmatmul.mubr.bf16.gmra.mrb[0].mxu0 %v1934
    %v3373 = vpop.f32.mrb[0].mxu0
    %v3374 = vadd.f32 %v3181, %v3373
    %v3375 = vpop.f32.mrb[0].mxu0
    %v3376 = vadd.f32 %v3183, %v3375
    %v3377 = vpop.f32.mrb[0].mxu0
    %v3378 = vadd.f32 %v3185, %v3377
    %v3379 = vpop.f32.mrb[0].mxu0
    %v3380 = vadd.f32 %v3187, %v3379
    %3381 = vmatprep.mubr.bf16.mxu0 0
    %3382 = vmatmul.mubr.bf16.gmra.mrb[0].mxu0 %v1937
    %v3383 = vpop.f32.mrb[0].mxu0
    %v3384 = vadd.f32 %v3191, %v3383
    %v3385 = vpop.f32.mrb[0].mxu0
    %v3386 = vadd.f32 %v3193, %v3385
    %v3387 = vpop.f32.mrb[0].mxu0
    %v3388 = vadd.f32 %v3195, %v3387
    %v3389 = vpop.f32.mrb[0].mxu0
    %v3390 = vadd.f32 %v3197, %v3389
    %3391 = vmatprep.mubr.bf16.mxu0 0
    %3392 = vmatmul.mubr.bf16.gmra.mrb[0].mxu0 %v1940
    %v3393 = vpop.f32.mrb[0].mxu0
    %v3394 = vadd.f32 %v3201, %v3393
    %v3395 = vpop.f32.mrb[0].mxu0
    %v3396 = vadd.f32 %v3203, %v3395
    %v3397 = vpop.f32.mrb[0].mxu0
    %v3398 = vadd.f32 %v3205, %v3397
    %v3399 = vpop.f32.mrb[0].mxu0
    %v3400 = vadd.f32 %v3207, %v3399
    %3401 = vmatprep.mubr.bf16.mxu0 0
    %3402 = vmatmul.mubr.bf16.gmra.mrb[0].mxu0 %v1943
    %v3403 = vpop.f32.mrb[0].mxu0
    %v3404 = vadd.f32 %v3211, %v3403
    %v3405 = vpop.f32.mrb[0].mxu0
    %v3406 = vadd.f32 %v3213, %v3405
    %v3407 = vpop.f32.mrb[0].mxu0
    %v3408 = vadd.f32 %v3215, %v3407
    %v3409 = vpop.f32.mrb[0].mxu0
    %v3410 = vadd.f32 %v3217, %v3409
    %3411 = vmatprep.mubr.bf16.mxu0 0
    %3412 = vmatmul.mubr.bf16.gmra.mrb[0].mxu0 %v1946
    %v3413 = vpop.f32.mrb[0].mxu0
    %v3414 = vadd.f32 %v3221, %v3413
    %v3415 = vpop.f32.mrb[0].mxu0
    %v3416 = vadd.f32 %v3223, %v3415
    %v3417 = vpop.f32.mrb[0].mxu0
    %v3418 = vadd.f32 %v3225, %v3417
    %v3419 = vpop.f32.mrb[0].mxu0
    %v3420 = vadd.f32 %v3227, %v3419
    %3421 = vmatprep.mubr.bf16.mxu0 0
    %3422 = vmatmul.mubr.bf16.gmra.mrb[0].mxu0 %v1949
    %v3423 = vpop.f32.mrb[0].mxu0
    %v3424 = vadd.f32 %v3231, %v3423
    %v3425 = vpop.f32.mrb[0].mxu0
    %v3426 = vadd.f32 %v3233, %v3425
    %v3427 = vpop.f32.mrb[0].mxu0
    %v3428 = vadd.f32 %v3235, %v3427
    %v3429 = vpop.f32.mrb[0].mxu0
    %v3430 = vadd.f32 %v3237, %v3429
    %3431 = vmatprep.mubr.bf16.mxu0 0
    %3432 = vmatmul.mubr.bf16.gmra.mrb[0].mxu0 %v1952
    %v3433 = vpop.f32.mrb[0].mxu0
    %v3434 = vadd.f32 %v3241, %v3433
    %v3435 = vpop.f32.mrb[0].mxu0
    %v3436 = vadd.f32 %v3243, %v3435
    %v3437 = vpop.f32.mrb[0].mxu0
    %v3438 = vadd.f32 %v3245, %v3437
    %v3439 = vpop.f32.mrb[0].mxu0
    %v3440 = vadd.f32 %v3247, %v3439
    %3441 = vmatprep.mubr.bf16.mxu0 0
    %3442 = vmatmul.mubr.bf16.gmra.mrb[0].mxu0 %v1955
    %v3443 = vpop.f32.mrb[0].mxu0
    %v3444 = vadd.f32 %v3251, %v3443
    %v3445 = vpop.f32.mrb[0].mxu0
    %v3446 = vadd.f32 %v3253, %v3445
    %v3447 = vpop.f32.mrb[0].mxu0
    %v3448 = vadd.f32 %v3255, %v3447
    %v3449 = vpop.f32.mrb[0].mxu0
    %v3450 = vadd.f32 %v3257, %v3449
    %3451 = vmatprep.mubr.bf16.mxu0 0
    %3452 = vmatmul.mubr.bf16.gmra.mrb[0].mxu0 %v1958
    %v3453 = vpop.f32.mrb[0].mxu0
    %v3454 = vadd.f32 %v3261, %v3453
    %v3455 = vpop.f32.mrb[0].mxu0
    %v3456 = vadd.f32 %v3263, %v3455
    %v3457 = vpop.f32.mrb[0].mxu0
    %v3458 = vadd.f32 %v3265, %v3457
    %v3459 = vpop.f32.mrb[0].mxu0
    %v3460 = vadd.f32 %v3267, %v3459
    %3461 = vmatprep.mubr.bf16.mxu0 0
    %3462 = vmatmul.mubr.bf16.gmra.mrb[0].mxu0 %v1961
    %v3463 = vpop.f32.mrb[0].mxu0
    %v3464 = vadd.f32 %v3271, %v3463
    %v3465 = vpop.f32.mrb[0].mxu0
    %v3466 = vadd.f32 %v3273, %v3465
    %v3467 = vpop.f32.mrb[0].mxu0
    %v3468 = vadd.f32 %v3275, %v3467
    %v3469 = vpop.f32.mrb[0].mxu0
    %v3470 = vadd.f32 %v3277, %v3469
    %3471 = vmatprep.mubr.bf16.mxu0 0
    %3472 = vmatmul.mubr.bf16.gmra.mrb[0].mxu0 %v1964
    %v3473 = vpop.f32.mrb[0].mxu0
    %v3474 = vadd.f32 %v3281, %v3473
    %v3475 = vpop.f32.mrb[0].mxu0
    %v3476 = vadd.f32 %v3283, %v3475
    %v3477 = vpop.f32.mrb[0].mxu0
    %v3478 = vadd.f32 %v3285, %v3477
    %v3479 = vpop.f32.mrb[0].mxu0
    %v3480 = vadd.f32 %v3287, %v3479
    %3481 = vmatprep.mubr.bf16.mxu0 0
    %3482 = vmatmul.mubr.bf16.gmra.mrb[0].mxu0 %v1967
    %v3483 = vpop.f32.mrb[0].mxu0
    %v3484 = vadd.f32 %v3291, %v3483
    %v3485 = vpop.f32.mrb[0].mxu0
    %v3486 = vadd.f32 %v3293, %v3485
    %v3487 = vpop.f32.mrb[0].mxu0
    %v3488 = vadd.f32 %v3295, %v3487
    %v3489 = vpop.f32.mrb[0].mxu0
    %v3490 = vadd.f32 %v3297, %v3489
    %3491 = vmatprep.mubr.bf16.mxu0 0
    %3492 = vmatmul.mubr.bf16.gmra.mrb[0].mxu0 %v1970
    %v3493 = vpop.f32.mrb[0].mxu0
    %v3494 = vadd.f32 %v3301, %v3493
    %v3495 = vpop.f32.mrb[0].mxu0
    %v3496 = vadd.f32 %v3303, %v3495
    %v3497 = vpop.f32.mrb[0].mxu0
    %v3498 = vadd.f32 %v3305, %v3497
    %v3499 = vpop.f32.mrb[0].mxu0
    %v3500 = vadd.f32 %v3307, %v3499
    %3501 = vmatprep.mubr.bf16.mxu0 0
    %3502 = vmatmul.mubr.bf16.gmra.mrb[0].mxu0 %v1973
    %v3503 = vpop.f32.mrb[0].mxu0
    %v3504 = vadd.f32 %v3311, %v3503
    %v3505 = vpop.f32.mrb[0].mxu0
    %v3506 = vadd.f32 %v3313, %v3505
    %v3507 = vpop.f32.mrb[0].mxu0
    %v3508 = vadd.f32 %v3315, %v3507
    %v3509 = vpop.f32.mrb[0].mxu0
    %v3510 = vadd.f32 %v3317, %v3509
    %3511 = vmatprep.mubr.bf16.mxu0 0
    %3512 = vmatmul.mubr.bf16.gmra.mrb[0].mxu0 %v1976
    %v3513 = vpop.f32.mrb[0].mxu0
    %v3514 = vadd.f32 %v3321, %v3513
    %v3515 = vpop.f32.mrb[0].mxu0
    %v3516 = vadd.f32 %v3323, %v3515
    %v3517 = vpop.f32.mrb[0].mxu0
    %v3518 = vadd.f32 %v3325, %v3517
    %v3519 = vpop.f32.mrb[0].mxu0
    %v3520 = vadd.f32 %v3327, %v3519
    %3521 = vdwg.mxu0
    %v3522 = vmul.f32 %v2592, 0.2
    %v3523 = vmul.f32 %v2594, 0.2
    %v3524 = vmul.f32 %v3364, 0.2
    %v3525 = vmul.f32 %v3366, 0.2
    %v3526 = vmul.f32 %v2596, 0.2
    %v3527 = vmul.f32 %v2598, 0.2
    %v3528 = vmul.f32 %v3368, 0.2
    %v3529 = vmul.f32 %v3370, 0.2
    %v3530 = vmul.f32 %v2602, 0.2
    %v3531 = vmul.f32 %v2604, 0.2
    %v3532 = vmul.f32 %v3374, 0.2
    %v3533 = vmul.f32 %v3376, 0.2
    %v3534 = vmul.f32 %v2606, 0.2
    %v3535 = vmul.f32 %v2608, 0.2
    %v3536 = vmul.f32 %v3378, 0.2
    %v3537 = vmul.f32 %v3380, 0.2
    %v3538 = vmul.f32 %v2612, 0.2
    %v3539 = vmul.f32 %v2614, 0.2
    %v3540 = vmul.f32 %v3384, 0.2
    %v3541 = vmul.f32 %v3386, 0.2
    %v3542 = vmul.f32 %v2616, 0.2
    %v3543 = vmul.f32 %v2618, 0.2
    %v3544 = vmul.f32 %v3388, 0.2
    %v3545 = vmul.f32 %v3390, 0.2
    %v3546 = vmul.f32 %v2622, 0.2
    %v3547 = vmul.f32 %v2624, 0.2
    %v3548 = vmul.f32 %v3394, 0.2
    %v3549 = vmul.f32 %v3396, 0.2
    %v3550 = vmul.f32 %v2626, 0.2
    %v3551 = vmul.f32 %v2628, 0.2
    %v3552 = vmul.f32 %v3398, 0.2
    %v3553 = vmul.f32 %v3400, 0.2
    %v3554 = vmul.f32 %v2632, 0.2
    %v3555 = vmul.f32 %v2634, 0.2
    %v3556 = vmul.f32 %v3404, 0.2
    %v3557 = vmul.f32 %v3406, 0.2
    %v3558 = vmul.f32 %v2636, 0.2
    %v3559 = vmul.f32 %v2638, 0.2
    %v3560 = vmul.f32 %v3408, 0.2
    %v3561 = vmul.f32 %v3410, 0.2
    %v3562 = vmul.f32 %v2642, 0.2
    %v3563 = vmul.f32 %v2644, 0.2
    %v3564 = vmul.f32 %v3414, 0.2
    %v3565 = vmul.f32 %v3416, 0.2
    %v3566 = vmul.f32 %v2646, 0.2
    %v3567 = vmul.f32 %v2648, 0.2
    %v3568 = vmul.f32 %v3418, 0.2
    %v3569 = vmul.f32 %v3420, 0.2
    %v3570 = vmul.f32 %v2652, 0.2
    %v3571 = vmul.f32 %v2654, 0.2
    %v3572 = vmul.f32 %v3424, 0.2
    %v3573 = vmul.f32 %v3426, 0.2
    %v3574 = vmul.f32 %v2656, 0.2
    %v3575 = vmul.f32 %v2658, 0.2
    %v3576 = vmul.f32 %v3428, 0.2
    %v3577 = vmul.f32 %v3430, 0.2
    %v3578 = vmul.f32 %v2662, 0.2
    %v3579 = vmul.f32 %v2664, 0.2
    %v3580 = vmul.f32 %v3434, 0.2
    %v3581 = vmul.f32 %v3436, 0.2
    %v3582 = vmul.f32 %v2666, 0.2
    %v3583 = vmul.f32 %v2668, 0.2
    %v3584 = vmul.f32 %v3438, 0.2
    %v3585 = vmul.f32 %v3440, 0.2
    %v3586 = vmul.f32 %v2672, 0.2
    %v3587 = vmul.f32 %v2674, 0.2
    %v3588 = vmul.f32 %v3444, 0.2
    %v3589 = vmul.f32 %v3446, 0.2
    %v3590 = vmul.f32 %v2676, 0.2
    %v3591 = vmul.f32 %v2678, 0.2
    %v3592 = vmul.f32 %v3448, 0.2
    %v3593 = vmul.f32 %v3450, 0.2
    %v3594 = vmul.f32 %v2682, 0.2
    %v3595 = vmul.f32 %v2684, 0.2
    %v3596 = vmul.f32 %v3454, 0.2
    %v3597 = vmul.f32 %v3456, 0.2
    %v3598 = vmul.f32 %v2686, 0.2
    %v3599 = vmul.f32 %v2688, 0.2
    %v3600 = vmul.f32 %v3458, 0.2
    %v3601 = vmul.f32 %v3460, 0.2
    %v3602 = vmul.f32 %v2692, 0.2
    %v3603 = vmul.f32 %v2694, 0.2
    %v3604 = vmul.f32 %v3464, 0.2
    %v3605 = vmul.f32 %v3466, 0.2
    %v3606 = vmul.f32 %v2696, 0.2
    %v3607 = vmul.f32 %v2698, 0.2
    %v3608 = vmul.f32 %v3468, 0.2
    %v3609 = vmul.f32 %v3470, 0.2
    %v3610 = vmul.f32 %v2702, 0.2
    %v3611 = vmul.f32 %v2704, 0.2
    %v3612 = vmul.f32 %v3474, 0.2
    %v3613 = vmul.f32 %v3476, 0.2
    %v3614 = vmul.f32 %v2706, 0.2
    %v3615 = vmul.f32 %v2708, 0.2
    %v3616 = vmul.f32 %v3478, 0.2
    %v3617 = vmul.f32 %v3480, 0.2
    %v3618 = vmul.f32 %v2712, 0.2
    %v3619 = vmul.f32 %v2714, 0.2
    %v3620 = vmul.f32 %v3484, 0.2
    %v3621 = vmul.f32 %v3486, 0.2
    %v3622 = vmul.f32 %v2716, 0.2
    %v3623 = vmul.f32 %v2718, 0.2
    %v3624 = vmul.f32 %v3488, 0.2
    %v3625 = vmul.f32 %v3490, 0.2
    %v3626 = vmul.f32 %v2722, 0.2
    %v3627 = vmul.f32 %v2724, 0.2
    %v3628 = vmul.f32 %v3494, 0.2
    %v3629 = vmul.f32 %v3496, 0.2
    %v3630 = vmul.f32 %v2726, 0.2
    %v3631 = vmul.f32 %v2728, 0.2
    %v3632 = vmul.f32 %v3498, 0.2
    %v3633 = vmul.f32 %v3500, 0.2
    %v3634 = vmul.f32 %v2732, 0.2
    %v3635 = vmul.f32 %v2734, 0.2
    %v3636 = vmul.f32 %v3504, 0.2
    %v3637 = vmul.f32 %v3506, 0.2
    %v3638 = vmul.f32 %v2736, 0.2
    %v3639 = vmul.f32 %v2738, 0.2
    %v3640 = vmul.f32 %v3508, 0.2
    %v3641 = vmul.f32 %v3510, 0.2
    %v3642 = vmul.f32 %v2742, 0.2
    %v3643 = vmul.f32 %v2744, 0.2
    %v3644 = vmul.f32 %v3514, 0.2
    %v3645 = vmul.f32 %v3516, 0.2
    %v3646 = vmul.f32 %v2746, 0.2
    %v3647 = vmul.f32 %v2748, 0.2
    %v3648 = vmul.f32 %v3518, 0.2
    %v3649 = vmul.f32 %v3520, 0.2
    %v3650 = vmax.f32 %v2592, %v3522
    %v3651 = vmax.f32 %v2594, %v3523
    %v3652 = vmax.f32 %v3364, %v3524
    %v3653 = vmax.f32 %v3366, %v3525
    %v3654 = vmax.f32 %v2596, %v3526
    %v3655 = vmax.f32 %v2598, %v3527
    %v3656 = vmax.f32 %v3368, %v3528
    %v3657 = vmax.f32 %v3370, %v3529
    %v3658 = vmax.f32 %v2602, %v3530
    %v3659 = vmax.f32 %v2604, %v3531
    %v3660 = vmax.f32 %v3374, %v3532
    %v3661 = vmax.f32 %v3376, %v3533
    %v3662 = vmax.f32 %v2606, %v3534
    %v3663 = vmax.f32 %v2608, %v3535
    %v3664 = vmax.f32 %v3378, %v3536
    %v3665 = vmax.f32 %v3380, %v3537
    %v3666 = vmax.f32 %v2612, %v3538
    %v3667 = vmax.f32 %v2614, %v3539
    %v3668 = vmax.f32 %v3384, %v3540
    %v3669 = vmax.f32 %v3386, %v3541
    %v3670 = vmax.f32 %v2616, %v3542
    %v3671 = vmax.f32 %v2618, %v3543
    %v3672 = vmax.f32 %v3388, %v3544
    %v3673 = vmax.f32 %v3390, %v3545
    %v3674 = vmax.f32 %v2622, %v3546
    %v3675 = vmax.f32 %v2624, %v3547
    %v3676 = vmax.f32 %v3394, %v3548
    %v3677 = vmax.f32 %v3396, %v3549
    %v3678 = vmax.f32 %v2626, %v3550
    %v3679 = vmax.f32 %v2628, %v3551
    %v3680 = vmax.f32 %v3398, %v3552
    %v3681 = vmax.f32 %v3400, %v3553
    %v3682 = vmax.f32 %v2632, %v3554
    %v3683 = vmax.f32 %v2634, %v3555
    %v3684 = vmax.f32 %v3404, %v3556
    %v3685 = vmax.f32 %v3406, %v3557
    %v3686 = vmax.f32 %v2636, %v3558
    %v3687 = vmax.f32 %v2638, %v3559
    %v3688 = vmax.f32 %v3408, %v3560
    %v3689 = vmax.f32 %v3410, %v3561
    %v3690 = vmax.f32 %v2642, %v3562
    %v3691 = vmax.f32 %v2644, %v3563
    %v3692 = vmax.f32 %v3414, %v3564
    %v3693 = vmax.f32 %v3416, %v3565
    %v3694 = vmax.f32 %v2646, %v3566
    %v3695 = vmax.f32 %v2648, %v3567
    %v3696 = vmax.f32 %v3418, %v3568
    %v3697 = vmax.f32 %v3420, %v3569
    %v3698 = vmax.f32 %v2652, %v3570
    %v3699 = vmax.f32 %v2654, %v3571
    %v3700 = vmax.f32 %v3424, %v3572
    %v3701 = vmax.f32 %v3426, %v3573
    %v3702 = vmax.f32 %v2656, %v3574
    %v3703 = vmax.f32 %v2658, %v3575
    %v3704 = vmax.f32 %v3428, %v3576
    %v3705 = vmax.f32 %v3430, %v3577
    %v3706 = vmax.f32 %v2662, %v3578
    %v3707 = vmax.f32 %v2664, %v3579
    %v3708 = vmax.f32 %v3434, %v3580
    %v3709 = vmax.f32 %v3436, %v3581
    %v3710 = vmax.f32 %v2666, %v3582
    %v3711 = vmax.f32 %v2668, %v3583
    %v3712 = vmax.f32 %v3438, %v3584
    %v3713 = vmax.f32 %v3440, %v3585
    %v3714 = vmax.f32 %v2672, %v3586
    %v3715 = vmax.f32 %v2674, %v3587
    %v3716 = vmax.f32 %v3444, %v3588
    %v3717 = vmax.f32 %v3446, %v3589
    %v3718 = vmax.f32 %v2676, %v3590
    %v3719 = vmax.f32 %v2678, %v3591
    %v3720 = vmax.f32 %v3448, %v3592
    %v3721 = vmax.f32 %v3450, %v3593
    %v3722 = vmax.f32 %v2682, %v3594
    %v3723 = vmax.f32 %v2684, %v3595
    %v3724 = vmax.f32 %v3454, %v3596
    %v3725 = vmax.f32 %v3456, %v3597
    %v3726 = vmax.f32 %v2686, %v3598
    %v3727 = vmax.f32 %v2688, %v3599
    %v3728 = vmax.f32 %v3458, %v3600
    %v3729 = vmax.f32 %v3460, %v3601
    %v3730 = vmax.f32 %v2692, %v3602
    %v3731 = vmax.f32 %v2694, %v3603
    %v3732 = vmax.f32 %v3464, %v3604
    %v3733 = vmax.f32 %v3466, %v3605
    %v3734 = vmax.f32 %v2696, %v3606
    %v3735 = vmax.f32 %v2698, %v3607
    %v3736 = vmax.f32 %v3468, %v3608
    %v3737 = vmax.f32 %v3470, %v3609
    %v3738 = vmax.f32 %v2702, %v3610
    %v3739 = vmax.f32 %v2704, %v3611
    %v3740 = vmax.f32 %v3474, %v3612
    %v3741 = vmax.f32 %v3476, %v3613
    %v3742 = vmax.f32 %v2706, %v3614
    %v3743 = vmax.f32 %v2708, %v3615
    %v3744 = vmax.f32 %v3478, %v3616
    %v3745 = vmax.f32 %v3480, %v3617
    %v3746 = vmax.f32 %v2712, %v3618
    %v3747 = vmax.f32 %v2714, %v3619
    %v3748 = vmax.f32 %v3484, %v3620
    %v3749 = vmax.f32 %v3486, %v3621
    %v3750 = vmax.f32 %v2716, %v3622
    %v3751 = vmax.f32 %v2718, %v3623
    %v3752 = vmax.f32 %v3488, %v3624
    %v3753 = vmax.f32 %v3490, %v3625
    %v3754 = vmax.f32 %v2722, %v3626
    %v3755 = vmax.f32 %v2724, %v3627
    %v3756 = vmax.f32 %v3494, %v3628
    %v3757 = vmax.f32 %v3496, %v3629
    %v3758 = vmax.f32 %v2726, %v3630
    %v3759 = vmax.f32 %v2728, %v3631
    %v3760 = vmax.f32 %v3498, %v3632
    %v3761 = vmax.f32 %v3500, %v3633
    %v3762 = vmax.f32 %v2732, %v3634
    %v3763 = vmax.f32 %v2734, %v3635
    %v3764 = vmax.f32 %v3504, %v3636
    %v3765 = vmax.f32 %v3506, %v3637
    %v3766 = vmax.f32 %v2736, %v3638
    %v3767 = vmax.f32 %v2738, %v3639
    %v3768 = vmax.f32 %v3508, %v3640
    %v3769 = vmax.f32 %v3510, %v3641
    %v3770 = vmax.f32 %v2742, %v3642
    %v3771 = vmax.f32 %v2744, %v3643
    %v3772 = vmax.f32 %v3514, %v3644
    %v3773 = vmax.f32 %v3516, %v3645
    %v3774 = vmax.f32 %v2746, %v3646
    %v3775 = vmax.f32 %v2748, %v3647
    %v3776 = vmax.f32 %v3518, %v3648
    %v3777 = vmax.f32 %v3520, %v3649
    %v3778 = vpack.c.bf16 %v3654, %v3650
    %v3779 = vpack.c.bf16 %v3655, %v3651
    %v3780 = vpack.c.bf16 %v3656, %v3652
    %v3781 = vpack.c.bf16 %v3657, %v3653
    %v3782 = vpack.c.bf16 %v3662, %v3658
    %v3783 = vpack.c.bf16 %v3663, %v3659
    %v3784 = vpack.c.bf16 %v3664, %v3660
    %v3785 = vpack.c.bf16 %v3665, %v3661
    %v3786 = vpack.c.bf16 %v3670, %v3666
    %v3787 = vpack.c.bf16 %v3671, %v3667
    %v3788 = vpack.c.bf16 %v3672, %v3668
    %v3789 = vpack.c.bf16 %v3673, %v3669
    %v3790 = vpack.c.bf16 %v3678, %v3674
    %v3791 = vpack.c.bf16 %v3679, %v3675
    %v3792 = vpack.c.bf16 %v3680, %v3676
    %v3793 = vpack.c.bf16 %v3681, %v3677
    %v3794 = vpack.c.bf16 %v3686, %v3682
    %v3795 = vpack.c.bf16 %v3687, %v3683
    %v3796 = vpack.c.bf16 %v3688, %v3684
    %v3797 = vpack.c.bf16 %v3689, %v3685
    %v3798 = vpack.c.bf16 %v3694, %v3690
    %v3799 = vpack.c.bf16 %v3695, %v3691
    %v3800 = vpack.c.bf16 %v3696, %v3692
    %v3801 = vpack.c.bf16 %v3697, %v3693
    %v3802 = vpack.c.bf16 %v3702, %v3698
    %v3803 = vpack.c.bf16 %v3703, %v3699
    %v3804 = vpack.c.bf16 %v3704, %v3700
    %v3805 = vpack.c.bf16 %v3705, %v3701
    %v3806 = vpack.c.bf16 %v3710, %v3706
    %v3807 = vpack.c.bf16 %v3711, %v3707
    %v3808 = vpack.c.bf16 %v3712, %v3708
    %v3809 = vpack.c.bf16 %v3713, %v3709
    %v3810 = vpack.c.bf16 %v3718, %v3714
    %v3811 = vpack.c.bf16 %v3719, %v3715
    %v3812 = vpack.c.bf16 %v3720, %v3716
    %v3813 = vpack.c.bf16 %v3721, %v3717
    %v3814 = vpack.c.bf16 %v3726, %v3722
    %v3815 = vpack.c.bf16 %v3727, %v3723
    %v3816 = vpack.c.bf16 %v3728, %v3724
    %v3817 = vpack.c.bf16 %v3729, %v3725
    %v3818 = vpack.c.bf16 %v3734, %v3730
    %v3819 = vpack.c.bf16 %v3735, %v3731
    %v3820 = vpack.c.bf16 %v3736, %v3732
    %v3821 = vpack.c.bf16 %v3737, %v3733
    %v3822 = vpack.c.bf16 %v3742, %v3738
    %v3823 = vpack.c.bf16 %v3743, %v3739
    %v3824 = vpack.c.bf16 %v3744, %v3740
    %v3825 = vpack.c.bf16 %v3745, %v3741
    %v3826 = vpack.c.bf16 %v3750, %v3746
    %v3827 = vpack.c.bf16 %v3751, %v3747
    %v3828 = vpack.c.bf16 %v3752, %v3748
    %v3829 = vpack.c.bf16 %v3753, %v3749
    %v3830 = vpack.c.bf16 %v3758, %v3754
    %v3831 = vpack.c.bf16 %v3759, %v3755
    %v3832 = vpack.c.bf16 %v3760, %v3756
    %v3833 = vpack.c.bf16 %v3761, %v3757
    %v3834 = vpack.c.bf16 %v3766, %v3762
    %v3835 = vpack.c.bf16 %v3767, %v3763
    %v3836 = vpack.c.bf16 %v3768, %v3764
    %v3837 = vpack.c.bf16 %v3769, %v3765
    %v3838 = vpack.c.bf16 %v3774, %v3770
    %v3839 = vpack.c.bf16 %v3775, %v3771
    %v3840 = vpack.c.bf16 %v3776, %v3772
    %v3841 = vpack.c.bf16 %v3777, %v3773
    %v3842 = vld [vmem:[#allocation3] sm:$0xff]
    %v3843 = vld [vmem:[#allocation3 + $0x8] sm:$0xff]
    %v3844 = vld [vmem:[#allocation3 + $0x10] sm:$0xff]
    %v3845 = vld [vmem:[#allocation3 + $0x18] sm:$0xff]
    %v3846 = vld [vmem:[#allocation3 + $0x20] sm:$0xff]
    %v3847 = vld [vmem:[#allocation3 + $0x28] sm:$0xff]
    %v3848 = vld [vmem:[#allocation3 + $0x30] sm:$0xff]
    %v3849 = vld [vmem:[#allocation3 + $0x38] sm:$0xff]
    %v3850 = vld [vmem:[#allocation3 + $0x40] sm:$0xff]
    %v3851 = vld [vmem:[#allocation3 + $0x48] sm:$0xff]
    %v3852 = vld [vmem:[#allocation3 + $0x50] sm:$0xff]
    %v3853 = vld [vmem:[#allocation3 + $0x58] sm:$0xff]
    %v3854 = vld [vmem:[#allocation3 + $0x60] sm:$0xff]
    %v3855 = vld [vmem:[#allocation3 + $0x68] sm:$0xff]
    %v3856 = vld [vmem:[#allocation3 + $0x70] sm:$0xff]
    %v3857 = vld [vmem:[#allocation3 + $0x78] sm:$0xff]
    %v3858 = vld [vmem:[#allocation3 + $0x80] sm:$0xff]
    %v3859 = vld [vmem:[#allocation3 + $0x88] sm:$0xff]
    %v3860 = vld [vmem:[#allocation3 + $0x90] sm:$0xff]
    %v3861 = vld [vmem:[#allocation3 + $0x98] sm:$0xff]
    %v3862 = vld [vmem:[#allocation3 + $0xa0] sm:$0xff]
    %v3863 = vld [vmem:[#allocation3 + $0xa8] sm:$0xff]
    %v3864 = vld [vmem:[#allocation3 + $0xb0] sm:$0xff]
    %v3865 = vld [vmem:[#allocation3 + $0xb8] sm:$0xff]
    %v3866 = vld [vmem:[#allocation3 + $0xc0] sm:$0xff]
    %v3867 = vld [vmem:[#allocation3 + $0xc8] sm:$0xff]
    %v3868 = vld [vmem:[#allocation3 + $0xd0] sm:$0xff]
    %v3869 = vld [vmem:[#allocation3 + $0xd8] sm:$0xff]
    %v3870 = vld [vmem:[#allocation3 + $0xe0] sm:$0xff]
    %v3871 = vld [vmem:[#allocation3 + $0xe8] sm:$0xff]
    %v3872 = vld [vmem:[#allocation3 + $0xf0] sm:$0xff]
    %v3873 = vld [vmem:[#allocation3 + $0xf8] sm:$0xff]
    %v3874 = vld [vmem:[#allocation3 + $0x100] sm:$0xff]
    %v3875 = vld [vmem:[#allocation3 + $0x108] sm:$0xff]
    %v3876 = vld [vmem:[#allocation3 + $0x110] sm:$0xff]
    %v3877 = vld [vmem:[#allocation3 + $0x118] sm:$0xff]
    %v3878 = vld [vmem:[#allocation3 + $0x120] sm:$0xff]
    %v3879 = vld [vmem:[#allocation3 + $0x128] sm:$0xff]
    %v3880 = vld [vmem:[#allocation3 + $0x130] sm:$0xff]
    %v3881 = vld [vmem:[#allocation3 + $0x138] sm:$0xff]
    %v3882 = vld [vmem:[#allocation3 + $0x140] sm:$0xff]
    %v3883 = vld [vmem:[#allocation3 + $0x148] sm:$0xff]
    %v3884 = vld [vmem:[#allocation3 + $0x150] sm:$0xff]
    %v3885 = vld [vmem:[#allocation3 + $0x158] sm:$0xff]
    %v3886 = vld [vmem:[#allocation3 + $0x160] sm:$0xff]
    %v3887 = vld [vmem:[#allocation3 + $0x168] sm:$0xff]
    %v3888 = vld [vmem:[#allocation3 + $0x170] sm:$0xff]
    %v3889 = vld [vmem:[#allocation3 + $0x178] sm:$0xff]
    %v3890 = vld [vmem:[#allocation3 + $0x180] sm:$0xff]
    %v3891 = vld [vmem:[#allocation3 + $0x188] sm:$0xff]
    %v3892 = vld [vmem:[#allocation3 + $0x190] sm:$0xff]
    %v3893 = vld [vmem:[#allocation3 + $0x198] sm:$0xff]
    %v3894 = vld [vmem:[#allocation3 + $0x1a0] sm:$0xff]
    %v3895 = vld [vmem:[#allocation3 + $0x1a8] sm:$0xff]
    %v3896 = vld [vmem:[#allocation3 + $0x1b0] sm:$0xff]
    %v3897 = vld [vmem:[#allocation3 + $0x1b8] sm:$0xff]
    %v3898 = vld [vmem:[#allocation3 + $0x1c0] sm:$0xff]
    %v3899 = vld [vmem:[#allocation3 + $0x1c8] sm:$0xff]
    %v3900 = vld [vmem:[#allocation3 + $0x1d0] sm:$0xff]
    %v3901 = vld [vmem:[#allocation3 + $0x1d8] sm:$0xff]
    %v3902 = vld [vmem:[#allocation3 + $0x1e0] sm:$0xff]
    %v3903 = vld [vmem:[#allocation3 + $0x1e8] sm:$0xff]
    %v3904 = vld [vmem:[#allocation3 + $0x1f0] sm:$0xff]
    %v3905 = vld [vmem:[#allocation3 + $0x1f8] sm:$0xff]
    %v3906 = vld [vmem:[%s4] sm:$0x3]
    %v3908 = vlaneseq
    %v3909 = vshrl.u32 %v3908, 7
    %v3910 = vsub.s32 0, %v3909
    %v3911 = vrot.slane %v3906, %v3910
    %v3912 = vlaneseq
    %v3913 = vshrl.u32 %v3912, 7
    %v3914 = vsub.s32 1, %v3913
    %v3915 = vrot.slane %v3906, %v3914
    %v3982 = vunpack.c.l.b16 %v3842
    %v3983 = vunpack.c.h.b16 %v3842
    %v3984 = vunpack.c.l.b16 %v3843
    %v3985 = vunpack.c.h.b16 %v3843
    %v3986 = vunpack.c.l.b16 %v3844
    %v3987 = vunpack.c.h.b16 %v3844
    %v3988 = vunpack.c.l.b16 %v3845
    %v3989 = vunpack.c.h.b16 %v3845
    %v3990 = vunpack.c.l.b16 %v3846
    %v3991 = vunpack.c.h.b16 %v3846
    %v3992 = vunpack.c.l.b16 %v3847
    %v3993 = vunpack.c.h.b16 %v3847
    %v3994 = vunpack.c.l.b16 %v3848
    %v3995 = vunpack.c.h.b16 %v3848
    %v3996 = vunpack.c.l.b16 %v3849
    %v3997 = vunpack.c.h.b16 %v3849
    %v3998 = vunpack.c.l.b16 %v3850
    %v3999 = vunpack.c.h.b16 %v3850
    %v4000 = vunpack.c.l.b16 %v3851
    %v4001 = vunpack.c.h.b16 %v3851
    %v4002 = vunpack.c.l.b16 %v3852
    %v4003 = vunpack.c.h.b16 %v3852
    %v4004 = vunpack.c.l.b16 %v3853
    %v4005 = vunpack.c.h.b16 %v3853
    %v4006 = vunpack.c.l.b16 %v3854
    %v4007 = vunpack.c.h.b16 %v3854
    %v4008 = vunpack.c.l.b16 %v3855
    %v4009 = vunpack.c.h.b16 %v3855
    %v4010 = vunpack.c.l.b16 %v3856
    %v4011 = vunpack.c.h.b16 %v3856
    %v4012 = vunpack.c.l.b16 %v3857
    %v4013 = vunpack.c.h.b16 %v3857
    %v4014 = vunpack.c.l.b16 %v3858
    %v4015 = vunpack.c.h.b16 %v3858
    %v4016 = vunpack.c.l.b16 %v3859
    %v4017 = vunpack.c.h.b16 %v3859
    %v4018 = vunpack.c.l.b16 %v3860
    %v4019 = vunpack.c.h.b16 %v3860
    %v4020 = vunpack.c.l.b16 %v3861
    %v4021 = vunpack.c.h.b16 %v3861
    %v4022 = vunpack.c.l.b16 %v3862
    %v4023 = vunpack.c.h.b16 %v3862
    %v4024 = vunpack.c.l.b16 %v3863
    %v4025 = vunpack.c.h.b16 %v3863
    %v4026 = vunpack.c.l.b16 %v3864
    %v4027 = vunpack.c.h.b16 %v3864
    %v4028 = vunpack.c.l.b16 %v3865
    %v4029 = vunpack.c.h.b16 %v3865
    %v4030 = vunpack.c.l.b16 %v3866
    %v4031 = vunpack.c.h.b16 %v3866
    %v4032 = vunpack.c.l.b16 %v3867
    %v4033 = vunpack.c.h.b16 %v3867
    %v4034 = vunpack.c.l.b16 %v3868
    %v4035 = vunpack.c.h.b16 %v3868
    %v4036 = vunpack.c.l.b16 %v3869
    %v4037 = vunpack.c.h.b16 %v3869
    %v4038 = vunpack.c.l.b16 %v3870
    %v4039 = vunpack.c.h.b16 %v3870
    %v4040 = vunpack.c.l.b16 %v3871
    %v4041 = vunpack.c.h.b16 %v3871
    %v4042 = vunpack.c.l.b16 %v3872
    %v4043 = vunpack.c.h.b16 %v3872
    %v4044 = vunpack.c.l.b16 %v3873
    %v4045 = vunpack.c.h.b16 %v3873
    %v4046 = vunpack.c.l.b16 %v3874
    %v4047 = vunpack.c.h.b16 %v3874
    %v4048 = vunpack.c.l.b16 %v3875
    %v4049 = vunpack.c.h.b16 %v3875
    %v4050 = vunpack.c.l.b16 %v3876
    %v4051 = vunpack.c.h.b16 %v3876
    %v4052 = vunpack.c.l.b16 %v3877
    %v4053 = vunpack.c.h.b16 %v3877
    %v4054 = vunpack.c.l.b16 %v3878
    %v4055 = vunpack.c.h.b16 %v3878
    %v4056 = vunpack.c.l.b16 %v3879
    %v4057 = vunpack.c.h.b16 %v3879
    %v4058 = vunpack.c.l.b16 %v3880
    %v4059 = vunpack.c.h.b16 %v3880
    %v4060 = vunpack.c.l.b16 %v3881
    %v4061 = vunpack.c.h.b16 %v3881
    %v4062 = vunpack.c.l.b16 %v3882
    %v4063 = vunpack.c.h.b16 %v3882
    %v4064 = vunpack.c.l.b16 %v3883
    %v4065 = vunpack.c.h.b16 %v3883
    %v4066 = vunpack.c.l.b16 %v3884
    %v4067 = vunpack.c.h.b16 %v3884
    %v4068 = vunpack.c.l.b16 %v3885
    %v4069 = vunpack.c.h.b16 %v3885
    %v4070 = vunpack.c.l.b16 %v3886
    %v4071 = vunpack.c.h.b16 %v3886
    %v4072 = vunpack.c.l.b16 %v3887
    %v4073 = vunpack.c.h.b16 %v3887
    %v4074 = vunpack.c.l.b16 %v3888
    %v4075 = vunpack.c.h.b16 %v3888
    %v4076 = vunpack.c.l.b16 %v3889
    %v4077 = vunpack.c.h.b16 %v3889
    %v4078 = vunpack.c.l.b16 %v3890
    %v4079 = vunpack.c.h.b16 %v3890
    %v4080 = vunpack.c.l.b16 %v3891
    %v4081 = vunpack.c.h.b16 %v3891
    %v4082 = vunpack.c.l.b16 %v3892
    %v4083 = vunpack.c.h.b16 %v3892
    %v4084 = vunpack.c.l.b16 %v3893
    %v4085 = vunpack.c.h.b16 %v3893
    %v4086 = vunpack.c.l.b16 %v3894
    %v4087 = vunpack.c.h.b16 %v3894
    %v4088 = vunpack.c.l.b16 %v3895
    %v4089 = vunpack.c.h.b16 %v3895
    %v4090 = vunpack.c.l.b16 %v3896
    %v4091 = vunpack.c.h.b16 %v3896
    %v4092 = vunpack.c.l.b16 %v3897
    %v4093 = vunpack.c.h.b16 %v3897
    %v4094 = vunpack.c.l.b16 %v3898
    %v4095 = vunpack.c.h.b16 %v3898
    %v4096 = vunpack.c.l.b16 %v3899
    %v4097 = vunpack.c.h.b16 %v3899
    %v4098 = vunpack.c.l.b16 %v3900
    %v4099 = vunpack.c.h.b16 %v3900
    %v4100 = vunpack.c.l.b16 %v3901
    %v4101 = vunpack.c.h.b16 %v3901
    %v4102 = vunpack.c.l.b16 %v3902
    %v4103 = vunpack.c.h.b16 %v3902
    %v4104 = vunpack.c.l.b16 %v3903
    %v4105 = vunpack.c.h.b16 %v3903
    %v4106 = vunpack.c.l.b16 %v3904
    %v4107 = vunpack.c.h.b16 %v3904
    %v4108 = vunpack.c.l.b16 %v3905
    %v4109 = vunpack.c.h.b16 %v3905
    %v4110 = vpack.c.b16 %v3984, %v3982
    %v4111 = vpack.c.b16 %v3985, %v3983
    %v4112 = vpack.c.b16 %v3988, %v3986
    %v4113 = vpack.c.b16 %v3989, %v3987
    %v4114 = vpack.c.b16 %v3992, %v3990
    %v4115 = vpack.c.b16 %v3993, %v3991
    %v4116 = vpack.c.b16 %v3996, %v3994
    %v4117 = vpack.c.b16 %v3997, %v3995
    %v4118 = vpack.c.b16 %v4000, %v3998
    %v4119 = vpack.c.b16 %v4001, %v3999
    %v4120 = vpack.c.b16 %v4004, %v4002
    %v4121 = vpack.c.b16 %v4005, %v4003
    %v4122 = vpack.c.b16 %v4008, %v4006
    %v4123 = vpack.c.b16 %v4009, %v4007
    %v4124 = vpack.c.b16 %v4012, %v4010
    %v4125 = vpack.c.b16 %v4013, %v4011
    %v4126 = vpack.c.b16 %v4016, %v4014
    %v4127 = vpack.c.b16 %v4017, %v4015
    %v4128 = vpack.c.b16 %v4020, %v4018
    %v4129 = vpack.c.b16 %v4021, %v4019
    %v4130 = vpack.c.b16 %v4024, %v4022
    %v4131 = vpack.c.b16 %v4025, %v4023
    %v4132 = vpack.c.b16 %v4028, %v4026
    %v4133 = vpack.c.b16 %v4029, %v4027
    %v4134 = vpack.c.b16 %v4032, %v4030
    %v4135 = vpack.c.b16 %v4033, %v4031
    %v4136 = vpack.c.b16 %v4036, %v4034
    %v4137 = vpack.c.b16 %v4037, %v4035
    %v4138 = vpack.c.b16 %v4040, %v4038
    %v4139 = vpack.c.b16 %v4041, %v4039
    %v4140 = vpack.c.b16 %v4044, %v4042
    %v4141 = vpack.c.b16 %v4045, %v4043
    %v4142 = vpack.c.b16 %v4048, %v4046
    %v4143 = vpack.c.b16 %v4049, %v4047
    %v4144 = vpack.c.b16 %v4052, %v4050
    %v4145 = vpack.c.b16 %v4053, %v4051
    %v4146 = vpack.c.b16 %v4056, %v4054
    %v4147 = vpack.c.b16 %v4057, %v4055
    %v4148 = vpack.c.b16 %v4060, %v4058
    %v4149 = vpack.c.b16 %v4061, %v4059
    %v4150 = vpack.c.b16 %v4064, %v4062
    %v4151 = vpack.c.b16 %v4065, %v4063
    %v4152 = vpack.c.b16 %v4068, %v4066
    %v4153 = vpack.c.b16 %v4069, %v4067
    %v4154 = vpack.c.b16 %v4072, %v4070
    %v4155 = vpack.c.b16 %v4073, %v4071
    %v4156 = vpack.c.b16 %v4076, %v4074
    %v4157 = vpack.c.b16 %v4077, %v4075
    %v4158 = vpack.c.b16 %v4080, %v4078
    %v4159 = vpack.c.b16 %v4081, %v4079
    %v4160 = vpack.c.b16 %v4084, %v4082
    %v4161 = vpack.c.b16 %v4085, %v4083
    %v4162 = vpack.c.b16 %v4088, %v4086
    %v4163 = vpack.c.b16 %v4089, %v4087
    %v4164 = vpack.c.b16 %v4092, %v4090
    %v4165 = vpack.c.b16 %v4093, %v4091
    %v4166 = vpack.c.b16 %v4096, %v4094
    %v4167 = vpack.c.b16 %v4097, %v4095
    %v4168 = vpack.c.b16 %v4100, %v4098
    %v4169 = vpack.c.b16 %v4101, %v4099
    %v4170 = vpack.c.b16 %v4104, %v4102
    %v4171 = vpack.c.b16 %v4105, %v4103
    %v4172 = vpack.c.b16 %v4108, %v4106
    %v4173 = vpack.c.b16 %v4109, %v4107
    %4238 = vmatprep.subr.bf16.mxu0 %v4111
    %4239 = vmatpush1.bf16.msra.mxu0 %v4110
    %4240 = vmatprep.subr.bf16.mxu0 %v4113
    %4241 = vmatpush1.bf16.msra.mxu0 %v4112
    %4242 = vmatprep.subr.bf16.mxu0 %v4115
    %4243 = vmatpush1.bf16.msra.mxu0 %v4114
    %4244 = vmatprep.subr.bf16.mxu0 %v4117
    %4245 = vmatpush1.bf16.msra.mxu0 %v4116
    %4246 = vmatprep.subr.bf16.mxu0 %v4119
    %4247 = vmatpush1.bf16.msra.mxu0 %v4118
    %4248 = vmatprep.subr.bf16.mxu0 %v4121
    %4249 = vmatpush1.bf16.msra.mxu0 %v4120
    %4250 = vmatprep.subr.bf16.mxu0 %v4123
    %4251 = vmatpush1.bf16.msra.mxu0 %v4122
    %4252 = vmatprep.subr.bf16.mxu0 %v4125
    %4253 = vmatpush1.bf16.msra.mxu0 %v4124
    %4254 = vmatprep.subr.bf16.mxu0 %v4127
    %4255 = vmatpush1.bf16.msra.mxu0 %v4126
    %4256 = vmatprep.subr.bf16.mxu0 %v4129
    %4257 = vmatpush1.bf16.msra.mxu0 %v4128
    %4258 = vmatprep.subr.bf16.mxu0 %v4131
    %4259 = vmatpush1.bf16.msra.mxu0 %v4130
    %4260 = vmatprep.subr.bf16.mxu0 %v4133
    %4261 = vmatpush1.bf16.msra.mxu0 %v4132
    %4262 = vmatprep.subr.bf16.mxu0 %v4135
    %4263 = vmatpush1.bf16.msra.mxu0 %v4134
    %4264 = vmatprep.subr.bf16.mxu0 %v4137
    %4265 = vmatpush1.bf16.msra.mxu0 %v4136
    %4266 = vmatprep.subr.bf16.mxu0 %v4139
    %4267 = vmatpush1.bf16.msra.mxu0 %v4138
    %4268 = vmatprep.subr.bf16.mxu0 %v4141
    %4269 = vmatpush1.bf16.msra.mxu0 %v4140
    %4270 = vmatprep.mubr.bf16.mxu0 %v3779
    %4271 = vmatmul.mubr.bf16.gmra.mrb[0].mxu0 %v3778
    %v4272 = vpop.f32.mrb[0].mxu0
    %v4273 = vadd.f32 %v3911, %v4272
    %v4274 = vpop.f32.mrb[0].mxu0
    %v4275 = vadd.f32 %v3915, %v4274
    %v4276 = vpop.f32.mrb[0].mxu0
    %v4277 = vadd.f32 %v3911, %v4276
    %v4278 = vpop.f32.mrb[0].mxu0
    %v4279 = vadd.f32 %v3915, %v4278
    %4280 = vmatprep.mubr.bf16.mxu0 %v3783
    %4281 = vmatmul.mubr.bf16.gmra.mrb[0].mxu0 %v3782
    %v4282 = vpop.f32.mrb[0].mxu0
    %v4283 = vadd.f32 %v3911, %v4282
    %v4284 = vpop.f32.mrb[0].mxu0
    %v4285 = vadd.f32 %v3915, %v4284
    %v4286 = vpop.f32.mrb[0].mxu0
    %v4287 = vadd.f32 %v3911, %v4286
    %v4288 = vpop.f32.mrb[0].mxu0
    %v4289 = vadd.f32 %v3915, %v4288
    %4290 = vmatprep.mubr.bf16.mxu0 %v3787
    %4291 = vmatmul.mubr.bf16.gmra.mrb[0].mxu0 %v3786
    %v4292 = vpop.f32.mrb[0].mxu0
    %v4293 = vadd.f32 %v3911, %v4292
    %v4294 = vpop.f32.mrb[0].mxu0
    %v4295 = vadd.f32 %v3915, %v4294
    %v4296 = vpop.f32.mrb[0].mxu0
    %v4297 = vadd.f32 %v3911, %v4296
    %v4298 = vpop.f32.mrb[0].mxu0
    %v4299 = vadd.f32 %v3915, %v4298
    %4300 = vmatprep.mubr.bf16.mxu0 %v3791
    %4301 = vmatmul.mubr.bf16.gmra.mrb[0].mxu0 %v3790
    %v4302 = vpop.f32.mrb[0].mxu0
    %v4303 = vadd.f32 %v3911, %v4302
    %v4304 = vpop.f32.mrb[0].mxu0
    %v4305 = vadd.f32 %v3915, %v4304
    %v4306 = vpop.f32.mrb[0].mxu0
    %v4307 = vadd.f32 %v3911, %v4306
    %v4308 = vpop.f32.mrb[0].mxu0
    %v4309 = vadd.f32 %v3915, %v4308
    %4310 = vmatprep.mubr.bf16.mxu0 %v3795
    %4311 = vmatmul.mubr.bf16.gmra.mrb[0].mxu0 %v3794
    %v4312 = vpop.f32.mrb[0].mxu0
    %v4313 = vadd.f32 %v3911, %v4312
    %v4314 = vpop.f32.mrb[0].mxu0
    %v4315 = vadd.f32 %v3915, %v4314
    %v4316 = vpop.f32.mrb[0].mxu0
    %v4317 = vadd.f32 %v3911, %v4316
    %v4318 = vpop.f32.mrb[0].mxu0
    %v4319 = vadd.f32 %v3915, %v4318
    %4320 = vmatprep.mubr.bf16.mxu0 %v3799
    %4321 = vmatmul.mubr.bf16.gmra.mrb[0].mxu0 %v3798
    %v4322 = vpop.f32.mrb[0].mxu0
    %v4323 = vadd.f32 %v3911, %v4322
    %v4324 = vpop.f32.mrb[0].mxu0
    %v4325 = vadd.f32 %v3915, %v4324
    %v4326 = vpop.f32.mrb[0].mxu0
    %v4327 = vadd.f32 %v3911, %v4326
    %v4328 = vpop.f32.mrb[0].mxu0
    %v4329 = vadd.f32 %v3915, %v4328
    %4330 = vmatprep.mubr.bf16.mxu0 %v3803
    %4331 = vmatmul.mubr.bf16.gmra.mrb[0].mxu0 %v3802
    %v4332 = vpop.f32.mrb[0].mxu0
    %v4333 = vadd.f32 %v3911, %v4332
    %v4334 = vpop.f32.mrb[0].mxu0
    %v4335 = vadd.f32 %v3915, %v4334
    %v4336 = vpop.f32.mrb[0].mxu0
    %v4337 = vadd.f32 %v3911, %v4336
    %v4338 = vpop.f32.mrb[0].mxu0
    %v4339 = vadd.f32 %v3915, %v4338
    %4340 = vmatprep.mubr.bf16.mxu0 %v3807
    %4341 = vmatmul.mubr.bf16.gmra.mrb[0].mxu0 %v3806
    %v4342 = vpop.f32.mrb[0].mxu0
    %v4343 = vadd.f32 %v3911, %v4342
    %v4344 = vpop.f32.mrb[0].mxu0
    %v4345 = vadd.f32 %v3915, %v4344
    %v4346 = vpop.f32.mrb[0].mxu0
    %v4347 = vadd.f32 %v3911, %v4346
    %v4348 = vpop.f32.mrb[0].mxu0
    %v4349 = vadd.f32 %v3915, %v4348
    %4350 = vmatprep.mubr.bf16.mxu0 %v3811
    %4351 = vmatmul.mubr.bf16.gmra.mrb[0].mxu0 %v3810
    %v4352 = vpop.f32.mrb[0].mxu0
    %v4353 = vadd.f32 %v3911, %v4352
    %v4354 = vpop.f32.mrb[0].mxu0
    %v4355 = vadd.f32 %v3915, %v4354
    %v4356 = vpop.f32.mrb[0].mxu0
    %v4357 = vadd.f32 %v3911, %v4356
    %v4358 = vpop.f32.mrb[0].mxu0
    %v4359 = vadd.f32 %v3915, %v4358
    %4360 = vmatprep.mubr.bf16.mxu0 %v3815
    %4361 = vmatmul.mubr.bf16.gmra.mrb[0].mxu0 %v3814
    %v4362 = vpop.f32.mrb[0].mxu0
    %v4363 = vadd.f32 %v3911, %v4362
    %v4364 = vpop.f32.mrb[0].mxu0
    %v4365 = vadd.f32 %v3915, %v4364
    %v4366 = vpop.f32.mrb[0].mxu0
    %v4367 = vadd.f32 %v3911, %v4366
    %v4368 = vpop.f32.mrb[0].mxu0
    %v4369 = vadd.f32 %v3915, %v4368
    %4370 = vmatprep.mubr.bf16.mxu0 %v3819
    %4371 = vmatmul.mubr.bf16.gmra.mrb[0].mxu0 %v3818
    %v4372 = vpop.f32.mrb[0].mxu0
    %v4373 = vadd.f32 %v3911, %v4372
    %v4374 = vpop.f32.mrb[0].mxu0
    %v4375 = vadd.f32 %v3915, %v4374
    %v4376 = vpop.f32.mrb[0].mxu0
    %v4377 = vadd.f32 %v3911, %v4376
    %v4378 = vpop.f32.mrb[0].mxu0
    %v4379 = vadd.f32 %v3915, %v4378
    %4380 = vmatprep.mubr.bf16.mxu0 %v3823
    %4381 = vmatmul.mubr.bf16.gmra.mrb[0].mxu0 %v3822
    %v4382 = vpop.f32.mrb[0].mxu0
    %v4383 = vadd.f32 %v3911, %v4382
    %v4384 = vpop.f32.mrb[0].mxu0
    %v4385 = vadd.f32 %v3915, %v4384
    %v4386 = vpop.f32.mrb[0].mxu0
    %v4387 = vadd.f32 %v3911, %v4386
    %v4388 = vpop.f32.mrb[0].mxu0
    %v4389 = vadd.f32 %v3915, %v4388
    %4390 = vmatprep.mubr.bf16.mxu0 %v3827
    %4391 = vmatmul.mubr.bf16.gmra.mrb[0].mxu0 %v3826
    %v4392 = vpop.f32.mrb[0].mxu0
    %v4393 = vadd.f32 %v3911, %v4392
    %v4394 = vpop.f32.mrb[0].mxu0
    %v4395 = vadd.f32 %v3915, %v4394
    %v4396 = vpop.f32.mrb[0].mxu0
    %v4397 = vadd.f32 %v3911, %v4396
    %v4398 = vpop.f32.mrb[0].mxu0
    %v4399 = vadd.f32 %v3915, %v4398
    %4400 = vmatprep.mubr.bf16.mxu0 %v3831
    %4401 = vmatmul.mubr.bf16.gmra.mrb[0].mxu0 %v3830
    %v4402 = vpop.f32.mrb[0].mxu0
    %v4403 = vadd.f32 %v3911, %v4402
    %v4404 = vpop.f32.mrb[0].mxu0
    %v4405 = vadd.f32 %v3915, %v4404
    %v4406 = vpop.f32.mrb[0].mxu0
    %v4407 = vadd.f32 %v3911, %v4406
    %v4408 = vpop.f32.mrb[0].mxu0
    %v4409 = vadd.f32 %v3915, %v4408
    %4410 = vmatprep.mubr.bf16.mxu0 %v3835
    %4411 = vmatmul.mubr.bf16.gmra.mrb[0].mxu0 %v3834
    %v4412 = vpop.f32.mrb[0].mxu0
    %v4413 = vadd.f32 %v3911, %v4412
    %v4414 = vpop.f32.mrb[0].mxu0
    %v4415 = vadd.f32 %v3915, %v4414
    %v4416 = vpop.f32.mrb[0].mxu0
    %v4417 = vadd.f32 %v3911, %v4416
    %v4418 = vpop.f32.mrb[0].mxu0
    %v4419 = vadd.f32 %v3915, %v4418
    %4420 = vmatprep.mubr.bf16.mxu0 %v3839
    %4421 = vmatmul.mubr.bf16.gmra.mrb[0].mxu0 %v3838
    %v4422 = vpop.f32.mrb[0].mxu0
    %v4423 = vadd.f32 %v3911, %v4422
    %v4424 = vpop.f32.mrb[0].mxu0
    %v4425 = vadd.f32 %v3915, %v4424
    %v4426 = vpop.f32.mrb[0].mxu0
    %v4427 = vadd.f32 %v3911, %v4426
    %v4428 = vpop.f32.mrb[0].mxu0
    %v4429 = vadd.f32 %v3915, %v4428
    %4430 = vdwg.mxu0
    %4431 = vmatprep.subr.bf16.mxu0 %v4143
    %4432 = vmatpush1.bf16.msra.mxu0 %v4142
    %4433 = vmatprep.subr.bf16.mxu0 %v4145
    %4434 = vmatpush1.bf16.msra.mxu0 %v4144
    %4435 = vmatprep.subr.bf16.mxu0 %v4147
    %4436 = vmatpush1.bf16.msra.mxu0 %v4146
    %4437 = vmatprep.subr.bf16.mxu0 %v4149
    %4438 = vmatpush1.bf16.msra.mxu0 %v4148
    %4439 = vmatprep.subr.bf16.mxu0 %v4151
    %4440 = vmatpush1.bf16.msra.mxu0 %v4150
    %4441 = vmatprep.subr.bf16.mxu0 %v4153
    %4442 = vmatpush1.bf16.msra.mxu0 %v4152
    %4443 = vmatprep.subr.bf16.mxu0 %v4155
    %4444 = vmatpush1.bf16.msra.mxu0 %v4154
    %4445 = vmatprep.subr.bf16.mxu0 %v4157
    %4446 = vmatpush1.bf16.msra.mxu0 %v4156
    %4447 = vmatprep.subr.bf16.mxu0 %v4159
    %4448 = vmatpush1.bf16.msra.mxu0 %v4158
    %4449 = vmatprep.subr.bf16.mxu0 %v4161
    %4450 = vmatpush1.bf16.msra.mxu0 %v4160
    %4451 = vmatprep.subr.bf16.mxu0 %v4163
    %4452 = vmatpush1.bf16.msra.mxu0 %v4162
    %4453 = vmatprep.subr.bf16.mxu0 %v4165
    %4454 = vmatpush1.bf16.msra.mxu0 %v4164
    %4455 = vmatprep.subr.bf16.mxu0 %v4167
    %4456 = vmatpush1.bf16.msra.mxu0 %v4166
    %4457 = vmatprep.subr.bf16.mxu0 %v4169
    %4458 = vmatpush1.bf16.msra.mxu0 %v4168
    %4459 = vmatprep.subr.bf16.mxu0 %v4171
    %4460 = vmatpush1.bf16.msra.mxu0 %v4170
    %4461 = vmatprep.subr.bf16.mxu0 %v4173
    %4462 = vmatpush1.bf16.msra.mxu0 %v4172
    %4463 = vmatprep.mubr.bf16.mxu0 %v3781
    %4464 = vmatmul.mubr.bf16.gmra.mrb[0].mxu0 %v3780
    %v4465 = vpop.f32.mrb[0].mxu0
    %v4466 = vadd.f32 %v4273, %v4465
    %v4467 = vpop.f32.mrb[0].mxu0
    %v4468 = vadd.f32 %v4275, %v4467
    %v4469 = vpop.f32.mrb[0].mxu0
    %v4470 = vadd.f32 %v4277, %v4469
    %v4471 = vpop.f32.mrb[0].mxu0
    %v4472 = vadd.f32 %v4279, %v4471
    %4473 = vmatprep.mubr.bf16.mxu0 %v3785
    %4474 = vmatmul.mubr.bf16.gmra.mrb[0].mxu0 %v3784
    %v4475 = vpop.f32.mrb[0].mxu0
    %v4476 = vadd.f32 %v4283, %v4475
    %v4477 = vpop.f32.mrb[0].mxu0
    %v4478 = vadd.f32 %v4285, %v4477
    %v4479 = vpop.f32.mrb[0].mxu0
    %v4480 = vadd.f32 %v4287, %v4479
    %v4481 = vpop.f32.mrb[0].mxu0
    %v4482 = vadd.f32 %v4289, %v4481
    %4483 = vmatprep.mubr.bf16.mxu0 %v3789
    %4484 = vmatmul.mubr.bf16.gmra.mrb[0].mxu0 %v3788
    %v4485 = vpop.f32.mrb[0].mxu0
    %v4486 = vadd.f32 %v4293, %v4485
    %v4487 = vpop.f32.mrb[0].mxu0
    %v4488 = vadd.f32 %v4295, %v4487
    %v4489 = vpop.f32.mrb[0].mxu0
    %v4490 = vadd.f32 %v4297, %v4489
    %v4491 = vpop.f32.mrb[0].mxu0
    %v4492 = vadd.f32 %v4299, %v4491
    %4493 = vmatprep.mubr.bf16.mxu0 %v3793
    %4494 = vmatmul.mubr.bf16.gmra.mrb[0].mxu0 %v3792
    %v4495 = vpop.f32.mrb[0].mxu0
    %v4496 = vadd.f32 %v4303, %v4495
    %v4497 = vpop.f32.mrb[0].mxu0
    %v4498 = vadd.f32 %v4305, %v4497
    %v4499 = vpop.f32.mrb[0].mxu0
    %v4500 = vadd.f32 %v4307, %v4499
    %v4501 = vpop.f32.mrb[0].mxu0
    %v4502 = vadd.f32 %v4309, %v4501
    %4503 = vmatprep.mubr.bf16.mxu0 %v3797
    %4504 = vmatmul.mubr.bf16.gmra.mrb[0].mxu0 %v3796
    %v4505 = vpop.f32.mrb[0].mxu0
    %v4506 = vadd.f32 %v4313, %v4505
    %v4507 = vpop.f32.mrb[0].mxu0
    %v4508 = vadd.f32 %v4315, %v4507
    %v4509 = vpop.f32.mrb[0].mxu0
    %v4510 = vadd.f32 %v4317, %v4509
    %v4511 = vpop.f32.mrb[0].mxu0
    %v4512 = vadd.f32 %v4319, %v4511
    %4513 = vmatprep.mubr.bf16.mxu0 %v3801
    %4514 = vmatmul.mubr.bf16.gmra.mrb[0].mxu0 %v3800
    %v4515 = vpop.f32.mrb[0].mxu0
    %v4516 = vadd.f32 %v4323, %v4515
    %v4517 = vpop.f32.mrb[0].mxu0
    %v4518 = vadd.f32 %v4325, %v4517
    %v4519 = vpop.f32.mrb[0].mxu0
    %v4520 = vadd.f32 %v4327, %v4519
    %v4521 = vpop.f32.mrb[0].mxu0
    %v4522 = vadd.f32 %v4329, %v4521
    %4523 = vmatprep.mubr.bf16.mxu0 %v3805
    %4524 = vmatmul.mubr.bf16.gmra.mrb[0].mxu0 %v3804
    %v4525 = vpop.f32.mrb[0].mxu0
    %v4526 = vadd.f32 %v4333, %v4525
    %v4527 = vpop.f32.mrb[0].mxu0
    %v4528 = vadd.f32 %v4335, %v4527
    %v4529 = vpop.f32.mrb[0].mxu0
    %v4530 = vadd.f32 %v4337, %v4529
    %v4531 = vpop.f32.mrb[0].mxu0
    %v4532 = vadd.f32 %v4339, %v4531
    %4533 = vmatprep.mubr.bf16.mxu0 %v3809
    %4534 = vmatmul.mubr.bf16.gmra.mrb[0].mxu0 %v3808
    %v4535 = vpop.f32.mrb[0].mxu0
    %v4536 = vadd.f32 %v4343, %v4535
    %v4537 = vpop.f32.mrb[0].mxu0
    %v4538 = vadd.f32 %v4345, %v4537
    %v4539 = vpop.f32.mrb[0].mxu0
    %v4540 = vadd.f32 %v4347, %v4539
    %v4541 = vpop.f32.mrb[0].mxu0
    %v4542 = vadd.f32 %v4349, %v4541
    %4543 = vmatprep.mubr.bf16.mxu0 %v3813
    %4544 = vmatmul.mubr.bf16.gmra.mrb[0].mxu0 %v3812
    %v4545 = vpop.f32.mrb[0].mxu0
    %v4546 = vadd.f32 %v4353, %v4545
    %v4547 = vpop.f32.mrb[0].mxu0
    %v4548 = vadd.f32 %v4355, %v4547
    %v4549 = vpop.f32.mrb[0].mxu0
    %v4550 = vadd.f32 %v4357, %v4549
    %v4551 = vpop.f32.mrb[0].mxu0
    %v4552 = vadd.f32 %v4359, %v4551
    %4553 = vmatprep.mubr.bf16.mxu0 %v3817
    %4554 = vmatmul.mubr.bf16.gmra.mrb[0].mxu0 %v3816
    %v4555 = vpop.f32.mrb[0].mxu0
    %v4556 = vadd.f32 %v4363, %v4555
    %v4557 = vpop.f32.mrb[0].mxu0
    %v4558 = vadd.f32 %v4365, %v4557
    %v4559 = vpop.f32.mrb[0].mxu0
    %v4560 = vadd.f32 %v4367, %v4559
    %v4561 = vpop.f32.mrb[0].mxu0
    %v4562 = vadd.f32 %v4369, %v4561
    %4563 = vmatprep.mubr.bf16.mxu0 %v3821
    %4564 = vmatmul.mubr.bf16.gmra.mrb[0].mxu0 %v3820
    %v4565 = vpop.f32.mrb[0].mxu0
    %v4566 = vadd.f32 %v4373, %v4565
    %v4567 = vpop.f32.mrb[0].mxu0
    %v4568 = vadd.f32 %v4375, %v4567
    %v4569 = vpop.f32.mrb[0].mxu0
    %v4570 = vadd.f32 %v4377, %v4569
    %v4571 = vpop.f32.mrb[0].mxu0
    %v4572 = vadd.f32 %v4379, %v4571
    %4573 = vmatprep.mubr.bf16.mxu0 %v3825
    %4574 = vmatmul.mubr.bf16.gmra.mrb[0].mxu0 %v3824
    %v4575 = vpop.f32.mrb[0].mxu0
    %v4576 = vadd.f32 %v4383, %v4575
    %v4577 = vpop.f32.mrb[0].mxu0
    %v4578 = vadd.f32 %v4385, %v4577
    %v4579 = vpop.f32.mrb[0].mxu0
    %v4580 = vadd.f32 %v4387, %v4579
    %v4581 = vpop.f32.mrb[0].mxu0
    %v4582 = vadd.f32 %v4389, %v4581
    %4583 = vmatprep.mubr.bf16.mxu0 %v3829
    %4584 = vmatmul.mubr.bf16.gmra.mrb[0].mxu0 %v3828
    %v4585 = vpop.f32.mrb[0].mxu0
    %v4586 = vadd.f32 %v4393, %v4585
    %v4587 = vpop.f32.mrb[0].mxu0
    %v4588 = vadd.f32 %v4395, %v4587
    %v4589 = vpop.f32.mrb[0].mxu0
    %v4590 = vadd.f32 %v4397, %v4589
    %v4591 = vpop.f32.mrb[0].mxu0
    %v4592 = vadd.f32 %v4399, %v4591
    %4593 = vmatprep.mubr.bf16.mxu0 %v3833
    %4594 = vmatmul.mubr.bf16.gmra.mrb[0].mxu0 %v3832
    %v4595 = vpop.f32.mrb[0].mxu0
    %v4596 = vadd.f32 %v4403, %v4595
    %v4597 = vpop.f32.mrb[0].mxu0
    %v4598 = vadd.f32 %v4405, %v4597
    %v4599 = vpop.f32.mrb[0].mxu0
    %v4600 = vadd.f32 %v4407, %v4599
    %v4601 = vpop.f32.mrb[0].mxu0
    %v4602 = vadd.f32 %v4409, %v4601
    %4603 = vmatprep.mubr.bf16.mxu0 %v3837
    %4604 = vmatmul.mubr.bf16.gmra.mrb[0].mxu0 %v3836
    %v4605 = vpop.f32.mrb[0].mxu0
    %v4606 = vadd.f32 %v4413, %v4605
    %v4607 = vpop.f32.mrb[0].mxu0
    %v4608 = vadd.f32 %v4415, %v4607
    %v4609 = vpop.f32.mrb[0].mxu0
    %v4610 = vadd.f32 %v4417, %v4609
    %v4611 = vpop.f32.mrb[0].mxu0
    %v4612 = vadd.f32 %v4419, %v4611
    %4613 = vmatprep.mubr.bf16.mxu0 %v3841
    %4614 = vmatmul.mubr.bf16.gmra.mrb[0].mxu0 %v3840
    %v4615 = vpop.f32.mrb[0].mxu0
    %v4616 = vadd.f32 %v4423, %v4615
    %v4617 = vpop.f32.mrb[0].mxu0
    %v4618 = vadd.f32 %v4425, %v4617
    %v4619 = vpop.f32.mrb[0].mxu0
    %v4620 = vadd.f32 %v4427, %v4619
    %v4621 = vpop.f32.mrb[0].mxu0
    %v4622 = vadd.f32 %v4429, %v4621
    %4623 = vdwg.mxu0
    %v4624 = vmul.f32 %v4466, 0.2
    %v4625 = vmul.f32 %v4468, 0.2
    %v4626 = vmul.f32 %v4470, 0.2
    %v4627 = vmul.f32 %v4472, 0.2
    %v4628 = vmul.f32 %v4476, 0.2
    %v4629 = vmul.f32 %v4478, 0.2
    %v4630 = vmul.f32 %v4480, 0.2
    %v4631 = vmul.f32 %v4482, 0.2
    %v4632 = vmul.f32 %v4486, 0.2
    %v4633 = vmul.f32 %v4488, 0.2
    %v4634 = vmul.f32 %v4490, 0.2
    %v4635 = vmul.f32 %v4492, 0.2
    %v4636 = vmul.f32 %v4496, 0.2
    %v4637 = vmul.f32 %v4498, 0.2
    %v4638 = vmul.f32 %v4500, 0.2
    %v4639 = vmul.f32 %v4502, 0.2
    %v4640 = vmul.f32 %v4506, 0.2
    %v4641 = vmul.f32 %v4508, 0.2
    %v4642 = vmul.f32 %v4510, 0.2
    %v4643 = vmul.f32 %v4512, 0.2
    %v4644 = vmul.f32 %v4516, 0.2
    %v4645 = vmul.f32 %v4518, 0.2
    %v4646 = vmul.f32 %v4520, 0.2
    %v4647 = vmul.f32 %v4522, 0.2
    %v4648 = vmul.f32 %v4526, 0.2
    %v4649 = vmul.f32 %v4528, 0.2
    %v4650 = vmul.f32 %v4530, 0.2
    %v4651 = vmul.f32 %v4532, 0.2
    %v4652 = vmul.f32 %v4536, 0.2
    %v4653 = vmul.f32 %v4538, 0.2
    %v4654 = vmul.f32 %v4540, 0.2
    %v4655 = vmul.f32 %v4542, 0.2
    %v4656 = vmul.f32 %v4546, 0.2
    %v4657 = vmul.f32 %v4548, 0.2
    %v4658 = vmul.f32 %v4550, 0.2
    %v4659 = vmul.f32 %v4552, 0.2
    %v4660 = vmul.f32 %v4556, 0.2
    %v4661 = vmul.f32 %v4558, 0.2
    %v4662 = vmul.f32 %v4560, 0.2
    %v4663 = vmul.f32 %v4562, 0.2
    %v4664 = vmul.f32 %v4566, 0.2
    %v4665 = vmul.f32 %v4568, 0.2
    %v4666 = vmul.f32 %v4570, 0.2
    %v4667 = vmul.f32 %v4572, 0.2
    %v4668 = vmul.f32 %v4576, 0.2
    %v4669 = vmul.f32 %v4578, 0.2
    %v4670 = vmul.f32 %v4580, 0.2
    %v4671 = vmul.f32 %v4582, 0.2
    %v4672 = vmul.f32 %v4586, 0.2
    %v4673 = vmul.f32 %v4588, 0.2
    %v4674 = vmul.f32 %v4590, 0.2
    %v4675 = vmul.f32 %v4592, 0.2
    %v4676 = vmul.f32 %v4596, 0.2
    %v4677 = vmul.f32 %v4598, 0.2
    %v4678 = vmul.f32 %v4600, 0.2
    %v4679 = vmul.f32 %v4602, 0.2
    %v4680 = vmul.f32 %v4606, 0.2
    %v4681 = vmul.f32 %v4608, 0.2
    %v4682 = vmul.f32 %v4610, 0.2
    %v4683 = vmul.f32 %v4612, 0.2
    %v4684 = vmul.f32 %v4616, 0.2
    %v4685 = vmul.f32 %v4618, 0.2
    %v4686 = vmul.f32 %v4620, 0.2
    %v4687 = vmul.f32 %v4622, 0.2
    %v4688 = vmax.f32 %v4466, %v4624
    %v4689 = vmax.f32 %v4468, %v4625
    %v4690 = vmax.f32 %v4470, %v4626
    %v4691 = vmax.f32 %v4472, %v4627
    %v4692 = vmax.f32 %v4476, %v4628
    %v4693 = vmax.f32 %v4478, %v4629
    %v4694 = vmax.f32 %v4480, %v4630
    %v4695 = vmax.f32 %v4482, %v4631
    %v4696 = vmax.f32 %v4486, %v4632
    %v4697 = vmax.f32 %v4488, %v4633
    %v4698 = vmax.f32 %v4490, %v4634
    %v4699 = vmax.f32 %v4492, %v4635
    %v4700 = vmax.f32 %v4496, %v4636
    %v4701 = vmax.f32 %v4498, %v4637
    %v4702 = vmax.f32 %v4500, %v4638
    %v4703 = vmax.f32 %v4502, %v4639
    %v4704 = vmax.f32 %v4506, %v4640
    %v4705 = vmax.f32 %v4508, %v4641
    %v4706 = vmax.f32 %v4510, %v4642
    %v4707 = vmax.f32 %v4512, %v4643
    %v4708 = vmax.f32 %v4516, %v4644
    %v4709 = vmax.f32 %v4518, %v4645
    %v4710 = vmax.f32 %v4520, %v4646
    %v4711 = vmax.f32 %v4522, %v4647
    %v4712 = vmax.f32 %v4526, %v4648
    %v4713 = vmax.f32 %v4528, %v4649
    %v4714 = vmax.f32 %v4530, %v4650
    %v4715 = vmax.f32 %v4532, %v4651
    %v4716 = vmax.f32 %v4536, %v4652
    %v4717 = vmax.f32 %v4538, %v4653
    %v4718 = vmax.f32 %v4540, %v4654
    %v4719 = vmax.f32 %v4542, %v4655
    %v4720 = vmax.f32 %v4546, %v4656
    %v4721 = vmax.f32 %v4548, %v4657
    %v4722 = vmax.f32 %v4550, %v4658
    %v4723 = vmax.f32 %v4552, %v4659
    %v4724 = vmax.f32 %v4556, %v4660
    %v4725 = vmax.f32 %v4558, %v4661
    %v4726 = vmax.f32 %v4560, %v4662
    %v4727 = vmax.f32 %v4562, %v4663
    %v4728 = vmax.f32 %v4566, %v4664
    %v4729 = vmax.f32 %v4568, %v4665
    %v4730 = vmax.f32 %v4570, %v4666
    %v4731 = vmax.f32 %v4572, %v4667
    %v4732 = vmax.f32 %v4576, %v4668
    %v4733 = vmax.f32 %v4578, %v4669
    %v4734 = vmax.f32 %v4580, %v4670
    %v4735 = vmax.f32 %v4582, %v4671
    %v4736 = vmax.f32 %v4586, %v4672
    %v4737 = vmax.f32 %v4588, %v4673
    %v4738 = vmax.f32 %v4590, %v4674
    %v4739 = vmax.f32 %v4592, %v4675
    %v4740 = vmax.f32 %v4596, %v4676
    %v4741 = vmax.f32 %v4598, %v4677
    %v4742 = vmax.f32 %v4600, %v4678
    %v4743 = vmax.f32 %v4602, %v4679
    %v4744 = vmax.f32 %v4606, %v4680
    %v4745 = vmax.f32 %v4608, %v4681
    %v4746 = vmax.f32 %v4610, %v4682
    %v4747 = vmax.f32 %v4612, %v4683
    %v4748 = vmax.f32 %v4616, %v4684
    %v4749 = vmax.f32 %v4618, %v4685
    %v4750 = vmax.f32 %v4620, %v4686
    %v4751 = vmax.f32 %v4622, %v4687
    %v4752 = vld [vmem:[%s5] sm:$0x3]
    %v4753 = vpack.c.bf16 %v4690, %v4688
    %v4754 = vpack.c.bf16 %v4691, %v4689
    %v4755 = vpack.c.bf16 %v4694, %v4692
    %v4756 = vpack.c.bf16 %v4695, %v4693
    %v4757 = vpack.c.bf16 %v4698, %v4696
    %v4758 = vpack.c.bf16 %v4699, %v4697
    %v4759 = vpack.c.bf16 %v4702, %v4700
    %v4760 = vpack.c.bf16 %v4703, %v4701
    %v4761 = vpack.c.bf16 %v4706, %v4704
    %v4762 = vpack.c.bf16 %v4707, %v4705
    %v4763 = vpack.c.bf16 %v4710, %v4708
    %v4764 = vpack.c.bf16 %v4711, %v4709
    %v4765 = vpack.c.bf16 %v4714, %v4712
    %v4766 = vpack.c.bf16 %v4715, %v4713
    %v4767 = vpack.c.bf16 %v4718, %v4716
    %v4768 = vpack.c.bf16 %v4719, %v4717
    %v4769 = vpack.c.bf16 %v4722, %v4720
    %v4770 = vpack.c.bf16 %v4723, %v4721
    %v4771 = vpack.c.bf16 %v4726, %v4724
    %v4772 = vpack.c.bf16 %v4727, %v4725
    %v4773 = vpack.c.bf16 %v4730, %v4728
    %v4774 = vpack.c.bf16 %v4731, %v4729
    %v4775 = vpack.c.bf16 %v4734, %v4732
    %v4776 = vpack.c.bf16 %v4735, %v4733
    %v4777 = vpack.c.bf16 %v4738, %v4736
    %v4778 = vpack.c.bf16 %v4739, %v4737
    %v4779 = vpack.c.bf16 %v4742, %v4740
    %v4780 = vpack.c.bf16 %v4743, %v4741
    %v4781 = vpack.c.bf16 %v4746, %v4744
    %v4782 = vpack.c.bf16 %v4747, %v4745
    %v4783 = vpack.c.bf16 %v4750, %v4748
    %v4784 = vpack.c.bf16 %v4751, %v4749
    %s4785 = sld [smem:[#allocation2]]
    %v4786 = vstv %s4785
    %v4789 = vunpack.c.l.s4 1966171168
    %v4790 = vunpack.c.0.s8 %v4789
    %v4791 = vlaneseq
    %v4792 = vshrl.u32 %v4791, 7
    %v4793 = vsub.s32 %v4790, %v4792
    %v4794 = vrot.slane %v4752, %v4793
    %v4795 = vcombine.high %v4794, %v4794
    %v4797 = vunpack.c.l.s4 1966171168
    %v4798 = vunpack.c.0.s8 %v4797
    %v4799 = vlaneseq
    %v4800 = vshrl.u32 %v4799, 7
    %v4801 = vsub.s32 %v4798, %v4800
    %v4802 = vrot.slane %v4794, %v4801
    %v4804 = vunpack.c.l.s4 1966171168
    %v4805 = vunpack.c.0.s8 %v4804
    %v4806 = vlaneseq
    %v4807 = vshrl.u32 %v4806, 7
    %v4808 = vsub.s32 %v4805, %v4807
    %v4809 = vrot.slane %v4795, %v4808
    %4812 = vmatprep.subr.bf16.mxu0 %v4754
    %4813 = vmatpush1.bf16.xpose.msra.mxu0 %v4753
    %4814 = vmatprep.subr.bf16.mxu0 %v4756
    %4815 = vmatpush1.bf16.xpose.msra.mxu0 %v4755
    %4816 = vmatprep.subr.bf16.mxu0 %v4758
    %4817 = vmatpush1.bf16.xpose.msra.mxu0 %v4757
    %4818 = vmatprep.subr.bf16.mxu0 %v4760
    %4819 = vmatpush1.bf16.xpose.msra.mxu0 %v4759
    %4820 = vmatprep.subr.bf16.mxu0 %v4762
    %4821 = vmatpush1.bf16.xpose.msra.mxu0 %v4761
    %4822 = vmatprep.subr.bf16.mxu0 %v4764
    %4823 = vmatpush1.bf16.xpose.msra.mxu0 %v4763
    %4824 = vmatprep.subr.bf16.mxu0 %v4766
    %4825 = vmatpush1.bf16.xpose.msra.mxu0 %v4765
    %4826 = vmatprep.subr.bf16.mxu0 %v4768
    %4827 = vmatpush1.bf16.xpose.msra.mxu0 %v4767
    %4828 = vmatprep.subr.bf16.mxu0 %v4770
    %4829 = vmatpush1.bf16.xpose.msra.mxu0 %v4769
    %4830 = vmatprep.subr.bf16.mxu0 %v4772
    %4831 = vmatpush1.bf16.xpose.msra.mxu0 %v4771
    %4832 = vmatprep.subr.bf16.mxu0 %v4774
    %4833 = vmatpush1.bf16.xpose.msra.mxu0 %v4773
    %4834 = vmatprep.subr.bf16.mxu0 %v4776
    %4835 = vmatpush1.bf16.xpose.msra.mxu0 %v4775
    %4836 = vmatprep.subr.bf16.mxu0 %v4778
    %4837 = vmatpush1.bf16.xpose.msra.mxu0 %v4777
    %4838 = vmatprep.subr.bf16.mxu0 %v4780
    %4839 = vmatpush1.bf16.xpose.msra.mxu0 %v4779
    %4840 = vmatprep.subr.bf16.mxu0 %v4782
    %4841 = vmatpush1.bf16.xpose.msra.mxu0 %v4781
    %4842 = vmatprep.subr.bf16.mxu0 %v4784
    %4843 = vmatpush1.bf16.xpose.msra.mxu0 %v4783
    %4844 = vmatprep.mubr.bf16.mxu0 %v4809
    %4845 = vmatmul.mubr.bf16.gmra.mrb[0].mxu0 %v4802
    %v4846 = vpop.f32.mrb[0].mxu0
    %v4847 = vadd.f32 %v4786, %v4846
    %v4848 = vpop.f32.mrb[0].mxu0
    %v4849 = vadd.f32 %v4786, %v4848
    %v4850 = vpop.f32.mrb[0].mxu0
    %v4851 = vpop.f32.mrb[0].mxu0
    %4852 = vdwg.mxu0
    %v4853 = vand.u32 2147483647, %v4847
    %v4854 = vand.u32 2147483647, %v4849
    %v4855 = vsub.f32 0.0, %v4853
    %v4856 = vsub.f32 0.0, %v4854
    %v4857 = vmul.f32 %v4855, 1.442695
    %v4858 = vpow.pop %v4857
    %v4859 = vmul.f32 %v4856, 1.442695
    %v4860 = vpow.pop %v4859
    %v4861 = vadd.f32 %v4858, 1.0
    %v4862 = vadd.f32 %v4860, 1.0
    %v4863 = vrcp.pop %v4861
    %v4864 = vrcp.pop %v4862
    %vm4865 = vcmp.ge.f32.partialorder %v4847, 0.0
    %vm4866 = vcmp.ge.f32.partialorder %v4849, 0.0
    %v4867 = vsub.f32 1.0, %v4863
    %v4868 = vsub.f32 1.0, %v4864
    %v4869 = vsel %vm4865, %v4863, %v4867
    %v4870 = vsel %vm4866, %v4864, %v4868
    %v4873 = vcombine.low %v4869, %v4870
    %v4875 = vunpack.c.l.s4 1966171168
    %v4876 = vunpack.c.0.s8 %v4875
    %v4877 = vlaneseq
    %v4878 = vshrl.u32 %v4877, 7
    %v4879 = vsub.s32 %v4876, %v4878
    %v4880 = vrot.slane %v4873, %v4879
    %v4882 = vunpack.c.l.s4 1966171168
    %v4883 = vunpack.c.0.s8 %v4882
    %v4884 = vlaneseq
    %v4885 = vshrl.u32 %v4884, 7
    %v4886 = vsub.s32 %v4883, %v4885
    %v4887 = vrot.slane %v4880, %v4886
    %v4889 = vlaneseq
    %vm4890 = vcmp.ge.s32.totalorder %v4889, 0
    %vm4891 = vcmp.lt.s32.totalorder %v4889, 256
    %vm4892 = vmand %vm4890, %vm4891
    %4893 = vst.msk [vmem:[#allocation6] sm:$0x3] %vm4892, %v4887
    // Predicated region
    $region34: #{tpu_custom_call.1} parent=1 // pred_check
      _
    $region35: #{tpu_custom_call.1} parent=1 // pred_check_branch
      %4895 = sbr.rel (0) target = $region37
    $region36: #{tpu_custom_call.1} parent=1 // pred_region
      %s4897 = ssub.s32 32, 32
      %4898 = vsyncadd [#allocation5], %s4897
      %s4900 = sshll.u32 [#allocation6], 4
      %s4901 = int_to_ptr.vmem [resolvable:$true] %s4900
      %4903 = dma.vmem_to_hbm [thread:$0]  %s4901, 32, %s7, [#allocation5]
    $region37: #{tpu_custom_call.1} parent=1 // pred_fallthru
      _
    // Predicated region
    $region38: #{tpu_custom_call.1} parent=1 // pred_check
      _
    $region39: #{tpu_custom_call.1} parent=1 // pred_check_branch
      %4905 = sbr.rel (0) target = $region41
    $region40: #{tpu_custom_call.1} parent=1 // pred_region
      %4906 = dma.done [#allocation5], 32
    $region41: #{tpu_custom_call.1} parent=1 // pred_fallthru
      _
    %4907 = vsyncpa [#allocation4], 1
    %4908 = vsyncpa [#allocation5], 1

</llo_original>
